<compile_context>
chip_gen: v6e
topology: v6e:2x2x1
jax: 0.10.0
libtpu: 0.0.40
codegen_flags: <defaults>
</compile_context>

<pallas_src>
from functools import partial

import numpy as np
import jax
import jax.numpy as jnp
from jax import lax
from jax.experimental import pallas as pl
from jax.experimental.pallas import tpu as pltpu

RATIO = 0.3              # PruingLoss(ratio=0.3)
BLUR = 0.01              # SamplesLoss(loss='sinkhorn', p=2, blur=0.01)
SINK_EPS = BLUR ** 2     # final entropic eps = blur ** p
ANNEAL_ITERS = 10        # eps-scaling phase (eps0 -> eps_final)
REFINE_ITERS = 22        # fixed-eps phase with pre-scaled cost
EPS_DECAY = 0.25         # eps multiplier per annealing step
NEG_BIG = -1e30          # value held in padded potential entries (exp -> 0)
K_MAX = 32               # static cap on number of semantic clusters


# ----------------------------------------------------------------------------
# Fused debiased-Sinkhorn kernel (3 OT solves in one pallas_call)
# ----------------------------------------------------------------------------
def _sinkhorn3_kernel(lhs_ref, rhs_ref, out_ref, *, n, m):
    """One entropic OT solve per grid step.

    Pair order (chosen for the v7x 2+1 megacore split of the parallel axis):
      0: OT(x, x)  damped symmetric update, 1 LSE / iteration
      1: OT(y, y)  damped symmetric update, 1 LSE / iteration
      2: OT(x, y)  alternating update,      2 LSE / iteration

    lhs_ref: (1, P, 8) f32  zero-padded source cloud (xyz in cols 0..2)
    rhs_ref: (1, P, 8) f32  zero-padded target cloud
    out_ref: (1, 1, 1) f32  truncated dual objective <a, f> + <b, g>
    """
    pair = pl.program_id(0)
    xs = lhs_ref[0]                                  # (P, 8)
    ys = rhs_ref[0]                                  # (P, 8)
    p_pts = xs.shape[0]

    # Per-pair scalars are static python constants selected on program_id:
    # they never touch the vector pipeline as DMA'd data.
    is_xx = pair == 0
    is_yy = pair == 1
    log_a = jnp.where(is_yy, -float(np.log(m)), -float(np.log(n)))
    log_b = jnp.where(is_xx, -float(np.log(n)), -float(np.log(m)))
    inv_n = jnp.where(is_yy, 1.0 / m, 1.0 / n)       # row (source) weight 1/n
    inv_m = jnp.where(is_xx, 1.0 / n, 1.0 / m)       # col (target) weight 1/m
    n_valid = jnp.where(is_yy, float(m), float(n))
    m_valid = jnp.where(is_xx, float(n), float(m))
    inv_fin = 1.0 / SINK_EPS

    # Ground cost up to row/column constants: C_ij = -<x_i, y_j>.  The dropped
    # 0.5||x_i||^2 + 0.5||y_j||^2 terms only shift the dual objective by
    # <a, .5||x||^2> + <b, .5||y||^2>, which cancels exactly in the debiased
    # combination l_xy - 0.5*(l_xx + l_yy); one MXU pass (padded coord dim = 8).
    C = -jnp.einsum("nd,md->nm", xs, ys, preferred_element_type=jnp.float32)
    C_s = C * inv_fin                                # pre-scaled cost (refine)

    # Annealing start from the cost scale itself (padded rows give C = 0).
    cmax = jnp.max(jnp.abs(C), axis=1, keepdims=True)
    cmax = jnp.max(cmax, axis=0, keepdims=True)      # (1, 1)
    eps0 = jnp.maximum(2.0 * cmax, SINK_EPS)

    # Padding: hold padded potential entries at NEG_BIG so they vanish in the
    # exp of every LSE; no per-iteration P^2 penalty adds.
    col_ids = lax.broadcasted_iota(jnp.int32, (1, p_pts), 1).astype(jnp.float32)
    row_ids = lax.broadcasted_iota(jnp.int32, (p_pts, 1), 0).astype(jnp.float32)
    col_valid = col_ids < m_valid                    # (1, P)
    row_valid = row_ids < n_valid                    # (P, 1)
    col_w = col_valid.astype(jnp.float32)
    row_w = row_valid.astype(jnp.float32)
    f0 = jnp.where(row_valid, 0.0, NEG_BIG)          # (P, 1)
    g0 = jnp.where(col_valid, 0.0, NEG_BIG)          # (1, P)

    def lse_cols(z):    # logsumexp over lanes     -> (P, 1)
        zm = jnp.max(z, axis=1, keepdims=True)
        # TODO(synk): on v6e/v7x a bf16 exp of (z - zm) would ~2x EUP
        # throughput if the bundle shows the EUP slot saturating; keep f32
        # until validated against a geomloss reference (and never on v5e).
        return zm + jnp.log(jnp.sum(jnp.exp(z - zm), axis=1, keepdims=True))

    def lse_rows(z):    # logsumexp over sublanes  -> (1, P)
        zm = jnp.max(z, axis=0, keepdims=True)
        return zm + jnp.log(jnp.sum(jnp.exp(z - zm), axis=0, keepdims=True))

    @pl.when(pair == 2)
    def _():
        # Cross term OT(x, y): alternating log-domain updates.  Anneal phase
        # keeps the (g - C)/eps form; refine phase uses the pre-scaled C_s so
        # the P^2 work per LSE is a single broadcast subtract.
        def body_anneal(_, carry):
            f, g, eps = carry
            inv_eps = 1.0 / eps
            f = jnp.where(row_valid,
                          -eps * (log_b + lse_cols((g - C) * inv_eps)), NEG_BIG)
            g = jnp.where(col_valid,
                          -eps * (log_a + lse_rows((f - C) * inv_eps)), NEG_BIG)
            return f, g, jnp.maximum(eps * EPS_DECAY, SINK_EPS)

        def body_refine(_, carry):
            f, g = carry
            f = jnp.where(row_valid,
                          -SINK_EPS * (log_b + lse_cols(g * inv_fin - C_s)),
                          NEG_BIG)
            g = jnp.where(col_valid,
                          -SINK_EPS * (log_a + lse_rows(f * inv_fin - C_s)),
                          NEG_BIG)
            return f, g

        f, g, _ = lax.fori_loop(0, ANNEAL_ITERS, body_anneal, (f0, g0, eps0))
        f, g = lax.fori_loop(0, REFINE_ITERS, body_refine, (f, g))
        out_ref[0] = (inv_n * jnp.sum(f * row_w, axis=0, keepdims=True)
                      + inv_m * jnp.sum(g * col_w, axis=1, keepdims=True))

    @pl.when(pair != 2)
    def _():
        # Self terms OT(x, x) / OT(y, y): C symmetric and a == b, so the damped
        # symmetric update needs one LSE per iteration.  The (1,P)->(P,1)
        # layout flip of the potential is a trans_b matmul against a resident
        # identity on the (otherwise idle) MXU - no per-iteration P^2 VPU work.
        ri = lax.broadcasted_iota(jnp.int32, (p_pts, p_pts), 0)
        ci = lax.broadcasted_iota(jnp.int32, (p_pts, p_pts), 1)
        eye = (ri == ci).astype(jnp.float32)

        def flip(t_row):                             # (1, P) -> (P, 1), MXU
            return lax.dot_general(eye, t_row, (((1,), (1,)), ((), ())),
                                   preferred_element_type=jnp.float32)

        def body_anneal(_, carry):
            f, eps = carry
            inv_eps = 1.0 / eps
            t_row = -eps * (log_a + lse_rows((f - C) * inv_eps))   # T(f), row
            f = jnp.where(row_valid, 0.5 * (f + flip(t_row)), NEG_BIG)
            return f, jnp.maximum(eps * EPS_DECAY, SINK_EPS)

        def body_refine(_, f):
            t_row = -SINK_EPS * (log_a + lse_rows(f * inv_fin - C_s))
            return jnp.where(row_valid, 0.5 * (f + flip(t_row)), NEG_BIG)

        f, _ = lax.fori_loop(0, ANNEAL_ITERS, body_anneal, (f0, eps0))
        f = lax.fori_loop(0, REFINE_ITERS, body_refine, f)
        out_ref[0] = 2.0 * inv_n * jnp.sum(f * row_w, axis=0, keepdims=True)


def _vmem_budget_bytes():
    """~85% of the local chip's physical VMEM (64 MiB on v7x, 128 MiB else)."""
    try:
        return int(0.85 * pltpu.get_tpu_info().vmem_capacity_bytes)
    except Exception:
        return int(0.85 * (64 << 20))    # conservative fallback (v7x size)


def sinkhorn_divergence(x, y):
    """Debiased Sinkhorn divergence S_eps(x, y) via one fused 3-pair kernel."""
    x = jnp.asarray(x, jnp.float32)
    y = jnp.asarray(y, jnp.float32)
    n, m = x.shape[0], y.shape[0]
    p_pts = ((max(n, m) + 7) // 8) * 8               # sublane-aligned pad

    # Coordinate dim padded 3 -> 8 (zeros) so the MXU contraction and the
    # input blocks stay tile-friendly; padded columns do not change <x, y>.
    xp = jnp.zeros((p_pts, 8), jnp.float32).at[:n, :3].set(x)
    yp = jnp.zeros((p_pts, 8), jnp.float32).at[:m, :3].set(y)
    lhs = jnp.stack([xp, yp, xp], axis=0)            # (3, P, 8)  (xx, yy, xy)
    rhs = jnp.stack([xp, yp, yp], axis=0)            # (3, P, 8)

    # Resident-C design: raise the scoped-VMEM limit whenever the estimate
    # exceeds the smallest default scoped limit across generations (16 MiB on
    # v5e); cap at ~85% of physical VMEM (v7x: 64 MiB).
    # TODO(synk): switch to a blocked, f/g-resident (flash-style) Sinkhorn for
    # clouds beyond what the per-chip budget allows.
    need = 6 * p_pts * p_pts * 4 + 4 * p_pts * 8 * 4 + (1 << 20)
    extra = {}
    if need > (16 << 20):
        extra["vmem_limit_bytes"] = int(min(need, _vmem_budget_bytes()))

    out = pl.pallas_call(
        partial(_sinkhorn3_kernel, n=n, m=m),
        out_shape=jax.ShapeDtypeStruct((3, 1, 1), jnp.float32),
        grid=(3,),
        in_specs=[pl.BlockSpec((1, p_pts, 8), lambda p: (p, 0, 0)),
                  pl.BlockSpec((1, p_pts, 8), lambda p: (p, 0, 0))],
        out_specs=pl.BlockSpec((1, 1, 1), lambda p: (p, 0, 0)),
        compiler_params=pltpu.CompilerParams(
            dimension_semantics=("parallel",), **extra),
    )(lhs, rhs)
    return out[2, 0, 0] - 0.5 * (out[0, 0, 0] + out[1, 0, 0])


# ----------------------------------------------------------------------------
# Per-cluster centroid + covariance (the _calc_cluster stage), on device
# ----------------------------------------------------------------------------
def _cluster_stats_kernel(pts_ref, seg_ref, cent_ref, cov_ref):
    """calc_centroid + calc_covariance for up to K_MAX clusters at once.

    pts_ref:  (M, 3) f32 xyz
    seg_ref:  (1, M) i32 segment id per point (contiguous label runs)
    cent_ref: (K, 3) f32 centroids (zeros for empty cluster slots)
    cov_ref:  (K, 9) f32 row-major flattened 3x3 covariance matrices
    """
    pts = pts_ref[...].astype(jnp.float32)           # (M, 3)
    seg = seg_ref[...]                                # (1, M) int32
    k_max = cent_ref.shape[0]
    m_pts = pts.shape[0]

    k_ids = lax.broadcasted_iota(jnp.int32, (k_max, m_pts), 0)
    onehot = (k_ids == seg).astype(jnp.float32)       # (K, M), M lane-dense

    # One fused MXU pass: counts, first moments and second moments together.
    ones = jnp.ones((m_pts, 1), jnp.float32)
    feat = jnp.concatenate(
        [pts * pts[:, 0:1], pts * pts[:, 1:2], pts * pts[:, 2:3]], axis=1)
    rhs = jnp.concatenate([ones, pts, feat], axis=1)  # (M, 13)
    agg = jnp.dot(onehot, rhs, preferred_element_type=jnp.float32)  # (K, 13)

    cnt = agg[:, 0:1]                                 # (K, 1)
    inv_cnt = 1.0 / jnp.maximum(cnt, 1.0)             # guard empty padded slots
    cent = agg[:, 1:4] * inv_cnt                      # (K, 3)
    cent_ref[...] = cent

    cc = jnp.concatenate(
        [cent * cent[:, 0:1], cent * cent[:, 1:2], cent * cent[:, 2:3]], axis=1)
    cov_ref[...] = agg[:, 4:13] * inv_cnt - cc        # E[x x^T] - c c^T


def cluster_stats(P_gt, k_max=K_MAX):
    """_calc_cluster: per-cluster centroid + covariance, fully on device.

    Clusters are contiguous runs of equal labels (same rule as np.split at
    label changes in the reference).  Shapes are static (k_max slots); empty
    slots return zeros.
    """
    gt = jnp.asarray(P_gt, jnp.float32)
    m_pts = gt.shape[0]
    pts = gt[:, :3]
    labels = gt[:, 3]
    changes = (labels[1:] != labels[:-1]).astype(jnp.int32)
    seg = jnp.concatenate([jnp.zeros((1,), jnp.int32), jnp.cumsum(changes)])
    seg_row = seg.reshape(1, m_pts)
    # TODO(synk): clusters with index >= k_max are dropped by the one-hot.

    cent, cov9 = pl.pallas_call(
        _cluster_stats_kernel,
        out_shape=(jax.ShapeDtypeStruct((k_max, 3), jnp.float32),
                   jax.ShapeDtypeStruct((k_max, 9), jnp.float32)),
        grid=(1,),
        in_specs=[pl.BlockSpec((m_pts, 3), lambda i: (0, 0)),
                  pl.BlockSpec((1, m_pts), lambda i: (0, 0))],
        out_specs=(pl.BlockSpec((k_max, 3), lambda i: (0, 0)),
                   pl.BlockSpec((k_max, 9), lambda i: (0, 0))),
        compiler_params=pltpu.CompilerParams(
            dimension_semantics=("arbitrary",)),
    )(pts, seg_row)
    return cent, cov9.reshape(k_max, 3, 3)


# ----------------------------------------------------------------------------
# PruingLoss.forward
# ----------------------------------------------------------------------------
def pruning_loss_forward(P_r, P_gt, pose_gt, ratio=RATIO, k_max=K_MAX):
    """PruingLoss.forward:  loss = L_rec * ratio + L_tri * (1 - ratio).

    P_r:     (N, 3) reconstructed point cloud
    P_gt:    (M, 4) semantic GT point cloud (x, y, z, label)
    pose_gt: (4, 4) GT pose (only used by the KD-tree radius query, see TODO)
    """
    x = jnp.asarray(P_r, jnp.float32)
    y = jnp.asarray(P_gt, jnp.float32)[:, :3]

    # L_rec: debiased Sinkhorn divergence (geomloss SamplesLoss p=2, blur=0.01).
    L_upsample = sinkhorn_divergence(x, y)
    # TODO(synk): ReconstructLoss.self.uni is undefined in the reference module; omitted.

    # _triangle_loss pipeline: per-cluster centroid / covariance of the GT
    # semantic cloud (the _calc_cluster stage) computed in a Pallas kernel.
    centroids, covariances = cluster_stats(P_gt, k_max=k_max)
    # TODO(synk): open3d KD-tree radius search, scipy-sqrtm Gaussian-Wasserstein
    # triangle matching, networkx max-clique pruning and self.model(query) have
    # no Pallas equivalent and the reference _calc_triangle_loss body is `pass`;
    # L_tri = 0.
    L_tri = jnp.float32(0.0)

    loss = L_upsample * ratio + L_tri * (1.0 - ratio)
    return loss, centroids, covariances


if __name__ == "__main__":
    key = jax.random.PRNGKey(0)
    k1, k2 = jax.random.split(key)
    N, M, K = 128, 128, 4
    P_r = jax.random.normal(k1, (N, 3), dtype=jnp.float32)
    xyz = jax.random.normal(k2, (M, 3), dtype=jnp.float32)
    labels = jnp.repeat(jnp.arange(K, dtype=jnp.float32), M // K)[:, None]
    P_gt = jnp.concatenate([xyz, labels], axis=1)     # (M, 4) = xyz + label
    pose_gt = jnp.eye(4, dtype=jnp.float32)

    fwd = jax.jit(pruning_loss_forward)
    loss, cents, covs = fwd(P_r, P_gt, pose_gt)
    jax.block_until_ready((loss, cents, covs))
    print("KERNEL_OK")
</pallas_src>

<mosaic_0001>
module attributes {stable_mosaic.version = 11 : i64} {
  func.func @_cluster_stats_kernel(%arg0: i32, %arg1: memref<128x3xf32, #tpu.memory_space<vmem>>, %arg2: memref<1x128xi32, #tpu.memory_space<vmem>>, %arg3: memref<32x3xf32, #tpu.memory_space<vmem>>, %arg4: memref<32x9xf32, #tpu.memory_space<vmem>>) attributes {dimension_semantics = [#tpu.dimension_semantics<arbitrary>], iteration_bounds = array<i64: 1>, scalar_prefetch = 0 : i64, scratch_operands = 0 : i64, tpu.core_type = #tpu.core_type<tc>, window_params = [{pipeline_mode = #tpu.pipeline_mode<synchronous>, transform_indices = @transform_0, window_bounds = array<i64: 128, 3>}, {pipeline_mode = #tpu.pipeline_mode<synchronous>, transform_indices = @transform_1, window_bounds = array<i64: 1, 128>}, {pipeline_mode = #tpu.pipeline_mode<synchronous>, transform_indices = @transform_2, window_bounds = array<i64: 32, 3>}, {pipeline_mode = #tpu.pipeline_mode<synchronous>, transform_indices = @transform_3, window_bounds = array<i64: 32, 9>}]} {
    %c0 = arith.constant 0 : index
    %c0_0 = arith.constant 0 : index
    %0 = vector.load %arg1[%c0, %c0_0] : memref<128x3xf32, #tpu.memory_space<vmem>>, vector<128x3xf32>
    %c0_1 = arith.constant 0 : index
    %c0_2 = arith.constant 0 : index
    %1 = vector.load %arg2[%c0_1, %c0_2] : memref<1x128xi32, #tpu.memory_space<vmem>>, vector<1x128xi32>
    %2 = tpu.iota {dimensions = array<i32: 0>} : vector<32x128xi32>
    %3 = vector.broadcast %1 : vector<1x128xi32> to vector<32x128xi32>
    %4 = arith.cmpi eq, %2, %3 : vector<32x128xi32>
    %5 = arith.extui %4 : vector<32x128xi1> to vector<32x128xi32>
    %6 = arith.sitofp %5 : vector<32x128xi32> to vector<32x128xf32>
    %cst = arith.constant 1.000000e+00 : f32
    %7 = vector.broadcast %cst : f32 to vector<128x1xf32>
    %8 = vector.extract_strided_slice %0 {offsets = [0, 0], sizes = [128, 1], strides = [1, 1]} : vector<128x3xf32> to vector<128x1xf32>
    %9 = vector.broadcast %8 : vector<128x1xf32> to vector<128x3xf32>
    %10 = arith.mulf %0, %9 : vector<128x3xf32>
    %11 = vector.extract_strided_slice %0 {offsets = [0, 1], sizes = [128, 1], strides = [1, 1]} : vector<128x3xf32> to vector<128x1xf32>
    %12 = vector.broadcast %11 : vector<128x1xf32> to vector<128x3xf32>
    %13 = arith.mulf %0, %12 : vector<128x3xf32>
    %14 = vector.extract_strided_slice %0 {offsets = [0, 2], sizes = [128, 1], strides = [1, 1]} : vector<128x3xf32> to vector<128x1xf32>
    %15 = vector.broadcast %14 : vector<128x1xf32> to vector<128x3xf32>
    %16 = arith.mulf %0, %15 : vector<128x3xf32>
    %17 = tpu.concatenate %10, %13, %16 in 1 : vector<128x3xf32>, vector<128x3xf32>, vector<128x3xf32> -> vector<128x9xf32>
    %18 = tpu.concatenate %7, %0, %17 in 1 : vector<128x1xf32>, vector<128x3xf32>, vector<128x9xf32> -> vector<128x13xf32>
    %cst_3 = arith.constant dense<0.000000e+00> : vector<32x13xf32>
    %19 = tpu.matmul %6, %18, %cst_3 {dimension_numbers = #tpu.dot_dimension_numbers<[1], [0], [0], [1], [0, 0, 1, 1], [], []>} : vector<32x128xf32>, vector<128x13xf32>, vector<32x13xf32> -> vector<32x13xf32>
    %20 = vector.extract_strided_slice %19 {offsets = [0, 0], sizes = [32, 1], strides = [1, 1]} : vector<32x13xf32> to vector<32x1xf32>
    %cst_4 = arith.constant 1.000000e+00 : f32
    %21 = vector.broadcast %cst_4 : f32 to vector<32x1xf32>
    %22 = arith.maximumf %20, %21 : vector<32x1xf32>
    %cst_5 = arith.constant 1.000000e+00 : f32
    %23 = vector.broadcast %cst_5 : f32 to vector<32x1xf32>
    %24 = arith.divf %23, %22 : vector<32x1xf32>
    %25 = vector.extract_strided_slice %19 {offsets = [0, 1], sizes = [32, 3], strides = [1, 1]} : vector<32x13xf32> to vector<32x3xf32>
    %26 = vector.broadcast %24 : vector<32x1xf32> to vector<32x3xf32>
    %27 = arith.mulf %25, %26 : vector<32x3xf32>
    %c0_6 = arith.constant 0 : index
    %c0_7 = arith.constant 0 : index
    %28 = vector.load %arg3[%c0_6, %c0_7] : memref<32x3xf32, #tpu.memory_space<vmem>>, vector<32x3xf32>
    tpu.vector_store %arg3[%c0_6, %c0_7], %27 {strides = array<i32>} : memref<32x3xf32, #tpu.memory_space<vmem>>, vector<32x3xf32>,
    %29 = vector.extract_strided_slice %27 {offsets = [0, 0], sizes = [32, 1], strides = [1, 1]} : vector<32x3xf32> to vector<32x1xf32>
    %30 = vector.broadcast %29 : vector<32x1xf32> to vector<32x3xf32>
    %31 = arith.mulf %27, %30 : vector<32x3xf32>
    %32 = vector.extract_strided_slice %27 {offsets = [0, 1], sizes = [32, 1], strides = [1, 1]} : vector<32x3xf32> to vector<32x1xf32>
    %33 = vector.broadcast %32 : vector<32x1xf32> to vector<32x3xf32>
    %34 = arith.mulf %27, %33 : vector<32x3xf32>
    %35 = vector.extract_strided_slice %27 {offsets = [0, 2], sizes = [32, 1], strides = [1, 1]} : vector<32x3xf32> to vector<32x1xf32>
    %36 = vector.broadcast %35 : vector<32x1xf32> to vector<32x3xf32>
    %37 = arith.mulf %27, %36 : vector<32x3xf32>
    %38 = tpu.concatenate %31, %34, %37 in 1 : vector<32x3xf32>, vector<32x3xf32>, vector<32x3xf32> -> vector<32x9xf32>
    %39 = vector.extract_strided_slice %19 {offsets = [0, 4], sizes = [32, 9], strides = [1, 1]} : vector<32x13xf32> to vector<32x9xf32>
    %40 = vector.broadcast %24 : vector<32x1xf32> to vector<32x9xf32>
    %41 = arith.mulf %39, %40 : vector<32x9xf32>
    %42 = arith.subf %41, %38 : vector<32x9xf32>
    %c0_8 = arith.constant 0 : index
    %c0_9 = arith.constant 0 : index
    %43 = vector.load %arg4[%c0_8, %c0_9] : memref<32x9xf32, #tpu.memory_space<vmem>>, vector<32x9xf32>
    tpu.vector_store %arg4[%c0_8, %c0_9], %42 {strides = array<i32>} : memref<32x9xf32, #tpu.memory_space<vmem>>, vector<32x9xf32>,
    return
  }
  func.func @transform_0(%arg0: i32) -> (i32, i32) {
    %c0_i32 = arith.constant 0 : i32
    %c0_i32_0 = arith.constant 0 : i32
    %c0_i32_1 = arith.constant 0 : i32
    return %c0_i32, %c0_i32_0 : i32, i32
  }
  func.func @transform_1(%arg0: i32) -> (i32, i32) {
    %c0_i32 = arith.constant 0 : i32
    %c0_i32_0 = arith.constant 0 : i32
    %c0_i32_1 = arith.constant 0 : i32
    return %c0_i32, %c0_i32_0 : i32, i32
  }
  func.func @transform_2(%arg0: i32) -> (i32, i32) {
    %c0_i32 = arith.constant 0 : i32
    %c0_i32_0 = arith.constant 0 : i32
    %c0_i32_1 = arith.constant 0 : i32
    return %c0_i32, %c0_i32_0 : i32, i32
  }
  func.func @transform_3(%arg0: i32) -> (i32, i32) {
    %c0_i32 = arith.constant 0 : i32
    %c0_i32_0 = arith.constant 0 : i32
    %c0_i32_1 = arith.constant 0 : i32
    return %c0_i32, %c0_i32_0 : i32, i32
  }
}

module attributes {stable_mosaic.version = 11 : i64} {
  func.func @_sinkhorn3_kernel(%arg0: i32, %arg1: memref<1x128x8xf32, #tpu.memory_space<vmem>>, %arg2: memref<1x128x8xf32, #tpu.memory_space<vmem>>, %arg3: memref<1x1x1xf32, #tpu.memory_space<vmem>>) attributes {dimension_semantics = [#tpu.dimension_semantics<parallel>], iteration_bounds = array<i64: 3>, scalar_prefetch = 0 : i64, scratch_operands = 0 : i64, tpu.core_type = #tpu.core_type<tc>, window_params = [{transform_indices = @transform_0, window_bounds = array<i64: 1, 128, 8>}, {transform_indices = @transform_1, window_bounds = array<i64: 1, 128, 8>}, {transform_indices = @transform_2, window_bounds = array<i64: 1, 1, 1>}]} {
    %c0 = arith.constant 0 : index
    %c0_0 = arith.constant 0 : index
    %c0_1 = arith.constant 0 : index
    %0 = vector.load %arg1[%c0, %c0_0, %c0_1] : memref<1x128x8xf32, #tpu.memory_space<vmem>>, vector<1x128x8xf32>
    %1 = vector.shape_cast %0 : vector<1x128x8xf32> to vector<128x8xf32>
    %c0_2 = arith.constant 0 : index
    %c0_3 = arith.constant 0 : index
    %c0_4 = arith.constant 0 : index
    %2 = vector.load %arg2[%c0_2, %c0_3, %c0_4] : memref<1x128x8xf32, #tpu.memory_space<vmem>>, vector<1x128x8xf32>
    %3 = vector.shape_cast %2 : vector<1x128x8xf32> to vector<128x8xf32>
    %c0_i32 = arith.constant 0 : i32
    %4 = arith.cmpi eq, %arg0, %c0_i32 : i32
    %c1_i32 = arith.constant 1 : i32
    %5 = arith.cmpi eq, %arg0, %c1_i32 : i32
    %cst = arith.constant -4.85203028 : f32
    %cst_5 = arith.constant -4.85203028 : f32
    %6 = arith.select %5, %cst, %cst_5 : f32
    %cst_6 = arith.constant -4.85203028 : f32
    %cst_7 = arith.constant -4.85203028 : f32
    %7 = arith.select %4, %cst_6, %cst_7 : f32
    %cst_8 = arith.constant 7.812500e-03 : f32
    %cst_9 = arith.constant 7.812500e-03 : f32
    %8 = arith.select %5, %cst_8, %cst_9 : f32
    %cst_10 = arith.constant 7.812500e-03 : f32
    %cst_11 = arith.constant 7.812500e-03 : f32
    %9 = arith.select %4, %cst_10, %cst_11 : f32
    %cst_12 = arith.constant 1.280000e+02 : f32
    %cst_13 = arith.constant 1.280000e+02 : f32
    %10 = arith.select %5, %cst_12, %cst_13 : f32
    %cst_14 = arith.constant 1.280000e+02 : f32
    %cst_15 = arith.constant 1.280000e+02 : f32
    %11 = arith.select %4, %cst_14, %cst_15 : f32
    "tpu.trace_start"() <{level = 10 : i32, message = "nd,md->nm"}> : () -> ()
    %cst_16 = arith.constant dense<0.000000e+00> : vector<128x128xf32>
    %12 = tpu.matmul %1, %3, %cst_16 {dimension_numbers = #tpu.dot_dimension_numbers<[1], [1], [0], [0], [0, 0, 1, 0], [], []>} : vector<128x8xf32>, vector<128x8xf32>, vector<128x128xf32> -> vector<128x128xf32>
    "tpu.trace_stop"() : () -> ()
    %cst_17 = arith.constant 0.000000e+00 : f32
    %13 = vector.broadcast %cst_17 : f32 to vector<128x128xf32>
    %14 = arith.subf %13, %12 : vector<128x128xf32>
    %cst_18 = arith.constant 1.000000e+04 : f32
    %15 = vector.broadcast %cst_18 : f32 to vector<128x128xf32>
    %16 = arith.mulf %14, %15 : vector<128x128xf32>
    %17 = math.absf %14 : vector<128x128xf32>
    %cst_19 = arith.constant dense<0xFF800000> : vector<128xf32>
    %18 = vector.multi_reduction <maximumf>, %17, %cst_19 [1] : vector<128x128xf32> to vector<128xf32>
    %19 = vector.shape_cast %18 : vector<128xf32> to vector<128x1xf32>
    %cst_20 = arith.constant dense<0xFF800000> : vector<1xf32>
    %20 = vector.multi_reduction <maximumf>, %19, %cst_20 [0] : vector<128x1xf32> to vector<1xf32>
    %21 = vector.shape_cast %20 : vector<1xf32> to vector<1x1xf32>
    %cst_21 = arith.constant 2.000000e+00 : f32
    %22 = vector.broadcast %cst_21 : f32 to vector<1x1xf32>
    %23 = arith.mulf %22, %21 : vector<1x1xf32>
    %cst_22 = arith.constant 9.99999974E-5 : f32
    %24 = vector.broadcast %cst_22 : f32 to vector<1x1xf32>
    %25 = arith.maximumf %23, %24 : vector<1x1xf32>
    %26 = tpu.iota {dimensions = array<i32: 1>} : vector<1x128xi32>
    %27 = arith.sitofp %26 : vector<1x128xi32> to vector<1x128xf32>
    %28 = tpu.iota {dimensions = array<i32: 0>} : vector<128x1xi32>
    %29 = arith.sitofp %28 : vector<128x1xi32> to vector<128x1xf32>
    %30 = vector.broadcast %11 : f32 to vector<1x128xf32>
    %31 = arith.cmpf olt, %27, %30 : vector<1x128xf32>
    %32 = vector.broadcast %10 : f32 to vector<128x1xf32>
    %33 = arith.cmpf olt, %29, %32 : vector<128x1xf32>
    %34 = arith.extui %31 : vector<1x128xi1> to vector<1x128xi32>
    %35 = arith.sitofp %34 : vector<1x128xi32> to vector<1x128xf32>
    %36 = arith.extui %33 : vector<128x1xi1> to vector<128x1xi32>
    %37 = arith.sitofp %36 : vector<128x1xi32> to vector<128x1xf32>
    %cst_23 = arith.constant 0.000000e+00 : f32
    %cst_24 = arith.constant -1.000000e+30 : f32
    %38 = vector.broadcast %cst_23 : f32 to vector<128x1xf32>
    %39 = vector.broadcast %cst_24 : f32 to vector<128x1xf32>
    %40 = arith.select %33, %38, %39 : vector<128x1xi1>, vector<128x1xf32>
    %cst_25 = arith.constant 0.000000e+00 : f32
    %cst_26 = arith.constant -1.000000e+30 : f32
    %41 = vector.broadcast %cst_25 : f32 to vector<1x128xf32>
    %42 = vector.broadcast %cst_26 : f32 to vector<1x128xf32>
    %43 = arith.select %31, %41, %42 : vector<1x128xi1>, vector<1x128xf32>
    %c2_i32 = arith.constant 2 : i32
    %44 = arith.cmpi eq, %arg0, %c2_i32 : i32
    %45 = arith.extui %44 : i1 to i32
    %c0_i32_27 = arith.constant 0 : i32
    %46 = arith.cmpi ne, %45, %c0_i32_27 : i32
    scf.if %46 {
      %c0_i32_30 = arith.constant 0 : i32
      %c10_i32 = arith.constant 10 : i32
      %50 = arith.addi %c0_i32_30, %c10_i32 : i32
      %c1_i32_31 = arith.constant 1 : i32
      %51:3 = scf.for %arg4 = %c0_i32_30 to %50 step %c1_i32_31 iter_args(%arg5 = %40, %arg6 = %43, %arg7 = %25) -> (vector<128x1xf32>, vector<1x128xf32>, vector<1x1xf32>)  : i32 {
        %cst_39 = arith.constant 1.000000e+00 : f32
        %68 = vector.broadcast %cst_39 : f32 to vector<1x1xf32>
        %69 = arith.divf %68, %arg7 : vector<1x1xf32>
        %cst_40 = arith.constant 0.000000e+00 : f32
        %70 = vector.broadcast %cst_40 : f32 to vector<1x1xf32>
        %71 = arith.subf %70, %arg7 : vector<1x1xf32>
        %72 = vector.broadcast %arg6 : vector<1x128xf32> to vector<128x128xf32>
        %73 = arith.subf %72, %14 : vector<128x128xf32>
        %74 = vector.broadcast %69 : vector<1x1xf32> to vector<128x128xf32>
        %75 = arith.mulf %73, %74 : vector<128x128xf32>
        %cst_41 = arith.constant dense<0xFF800000> : vector<128xf32>
        %76 = vector.multi_reduction <maximumf>, %75, %cst_41 [1] : vector<128x128xf32> to vector<128xf32>
        %77 = vector.shape_cast %76 : vector<128xf32> to vector<128x1xf32>
        %78 = vector.broadcast %77 : vector<128x1xf32> to vector<128x128xf32>
        %79 = arith.subf %75, %78 : vector<128x128xf32>
        %80 = math.exp %79 : vector<128x128xf32>
        %cst_42 = arith.constant dense<0.000000e+00> : vector<128xf32>
        %81 = vector.multi_reduction <add>, %80, %cst_42 [1] : vector<128x128xf32> to vector<128xf32>
        %82 = vector.shape_cast %81 : vector<128xf32> to vector<128x1xf32>
        %83 = math.log %82 : vector<128x1xf32>
        %84 = arith.addf %77, %83 : vector<128x1xf32>
        %85 = vector.broadcast %7 : f32 to vector<128x1xf32>
        %86 = arith.addf %85, %84 : vector<128x1xf32>
        %87 = vector.broadcast %71 : vector<1x1xf32> to vector<128x1xf32>
        %88 = arith.mulf %87, %86 : vector<128x1xf32>
        %cst_43 = arith.constant -1.000000e+30 : f32
        %89 = vector.broadcast %cst_43 : f32 to vector<128x1xf32>
        %90 = arith.select %33, %88, %89 : vector<128x1xi1>, vector<128x1xf32>
        %cst_44 = arith.constant 0.000000e+00 : f32
        %91 = vector.broadcast %cst_44 : f32 to vector<1x1xf32>
        %92 = arith.subf %91, %arg7 : vector<1x1xf32>
        %93 = vector.broadcast %90 : vector<128x1xf32> to vector<128x128xf32>
        %94 = arith.subf %93, %14 : vector<128x128xf32>
        %95 = vector.broadcast %69 : vector<1x1xf32> to vector<128x128xf32>
        %96 = arith.mulf %94, %95 : vector<128x128xf32>
        %cst_45 = arith.constant dense<0xFF800000> : vector<128xf32>
        %97 = vector.multi_reduction <maximumf>, %96, %cst_45 [0] : vector<128x128xf32> to vector<128xf32>
        %98 = vector.shape_cast %97 : vector<128xf32> to vector<1x128xf32>
        %99 = vector.broadcast %98 : vector<1x128xf32> to vector<128x128xf32>
        %100 = arith.subf %96, %99 : vector<128x128xf32>
        %101 = math.exp %100 : vector<128x128xf32>
        %cst_46 = arith.constant dense<0.000000e+00> : vector<128xf32>
        %102 = vector.multi_reduction <add>, %101, %cst_46 [0] : vector<128x128xf32> to vector<128xf32>
        %103 = vector.shape_cast %102 : vector<128xf32> to vector<1x128xf32>
        %104 = math.log %103 : vector<1x128xf32>
        %105 = arith.addf %98, %104 : vector<1x128xf32>
        %106 = vector.broadcast %6 : f32 to vector<1x128xf32>
        %107 = arith.addf %106, %105 : vector<1x128xf32>
        %108 = vector.broadcast %92 : vector<1x1xf32> to vector<1x128xf32>
        %109 = arith.mulf %108, %107 : vector<1x128xf32>
        %cst_47 = arith.constant -1.000000e+30 : f32
        %110 = vector.broadcast %cst_47 : f32 to vector<1x128xf32>
        %111 = arith.select %31, %109, %110 : vector<1x128xi1>, vector<1x128xf32>
        %cst_48 = arith.constant 2.500000e-01 : f32
        %112 = vector.broadcast %cst_48 : f32 to vector<1x1xf32>
        %113 = arith.mulf %arg7, %112 : vector<1x1xf32>
        %cst_49 = arith.constant 9.99999974E-5 : f32
        %114 = vector.broadcast %cst_49 : f32 to vector<1x1xf32>
        %115 = arith.maximumf %113, %114 : vector<1x1xf32>
        scf.yield %90, %111, %115 : vector<128x1xf32>, vector<1x128xf32>, vector<1x1xf32>
      }
      %c0_i32_32 = arith.constant 0 : i32
      %c22_i32 = arith.constant 22 : i32
      %52 = arith.addi %c0_i32_32, %c22_i32 : i32
      %c1_i32_33 = arith.constant 1 : i32
      %53:2 = scf.for %arg4 = %c0_i32_32 to %52 step %c1_i32_33 iter_args(%arg5 = %51#0, %arg6 = %51#1) -> (vector<128x1xf32>, vector<1x128xf32>)  : i32 {
        %cst_39 = arith.constant 1.000000e+04 : f32
        %68 = vector.broadcast %cst_39 : f32 to vector<1x128xf32>
        %69 = arith.mulf %arg6, %68 : vector<1x128xf32>
        %70 = vector.broadcast %69 : vector<1x128xf32> to vector<128x128xf32>
        %71 = arith.subf %70, %16 : vector<128x128xf32>
        %cst_40 = arith.constant dense<0xFF800000> : vector<128xf32>
        %72 = vector.multi_reduction <maximumf>, %71, %cst_40 [1] : vector<128x128xf32> to vector<128xf32>
        %73 = vector.shape_cast %72 : vector<128xf32> to vector<128x1xf32>
        %74 = vector.broadcast %73 : vector<128x1xf32> to vector<128x128xf32>
        %75 = arith.subf %71, %74 : vector<128x128xf32>
        %76 = math.exp %75 : vector<128x128xf32>
        %cst_41 = arith.constant dense<0.000000e+00> : vector<128xf32>
        %77 = vector.multi_reduction <add>, %76, %cst_41 [1] : vector<128x128xf32> to vector<128xf32>
        %78 = vector.shape_cast %77 : vector<128xf32> to vector<128x1xf32>
        %79 = math.log %78 : vector<128x1xf32>
        %80 = arith.addf %73, %79 : vector<128x1xf32>
        %81 = vector.broadcast %7 : f32 to vector<128x1xf32>
        %82 = arith.addf %81, %80 : vector<128x1xf32>
        %cst_42 = arith.constant -9.99999974E-5 : f32
        %83 = vector.broadcast %cst_42 : f32 to vector<128x1xf32>
        %84 = arith.mulf %83, %82 : vector<128x1xf32>
        %cst_43 = arith.constant -1.000000e+30 : f32
        %85 = vector.broadcast %cst_43 : f32 to vector<128x1xf32>
        %86 = arith.select %33, %84, %85 : vector<128x1xi1>, vector<128x1xf32>
        %cst_44 = arith.constant 1.000000e+04 : f32
        %87 = vector.broadcast %cst_44 : f32 to vector<128x1xf32>
        %88 = arith.mulf %86, %87 : vector<128x1xf32>
        %89 = vector.broadcast %88 : vector<128x1xf32> to vector<128x128xf32>
        %90 = arith.subf %89, %16 : vector<128x128xf32>
        %cst_45 = arith.constant dense<0xFF800000> : vector<128xf32>
        %91 = vector.multi_reduction <maximumf>, %90, %cst_45 [0] : vector<128x128xf32> to vector<128xf32>
        %92 = vector.shape_cast %91 : vector<128xf32> to vector<1x128xf32>
        %93 = vector.broadcast %92 : vector<1x128xf32> to vector<128x128xf32>
        %94 = arith.subf %90, %93 : vector<128x128xf32>
        %95 = math.exp %94 : vector<128x128xf32>
        %cst_46 = arith.constant dense<0.000000e+00> : vector<128xf32>
        %96 = vector.multi_reduction <add>, %95, %cst_46 [0] : vector<128x128xf32> to vector<128xf32>
        %97 = vector.shape_cast %96 : vector<128xf32> to vector<1x128xf32>
        %98 = math.log %97 : vector<1x128xf32>
        %99 = arith.addf %92, %98 : vector<1x128xf32>
        %100 = vector.broadcast %6 : f32 to vector<1x128xf32>
        %101 = arith.addf %100, %99 : vector<1x128xf32>
        %cst_47 = arith.constant -9.99999974E-5 : f32
        %102 = vector.broadcast %cst_47 : f32 to vector<1x128xf32>
        %103 = arith.mulf %102, %101 : vector<1x128xf32>
        %cst_48 = arith.constant -1.000000e+30 : f32
        %104 = vector.broadcast %cst_48 : f32 to vector<1x128xf32>
        %105 = arith.select %31, %103, %104 : vector<1x128xi1>, vector<1x128xf32>
        scf.yield %86, %105 : vector<128x1xf32>, vector<1x128xf32>
      }
      %54 = arith.mulf %53#0, %37 : vector<128x1xf32>
      %cst_34 = arith.constant dense<0.000000e+00> : vector<1xf32>
      %55 = vector.multi_reduction <add>, %54, %cst_34 [0] : vector<128x1xf32> to vector<1xf32>
      %56 = vector.shape_cast %55 : vector<1xf32> to vector<1x1xf32>
      %57 = vector.broadcast %8 : f32 to vector<1x1xf32>
      %58 = arith.mulf %57, %56 : vector<1x1xf32>
      %59 = arith.mulf %53#1, %35 : vector<1x128xf32>
      %cst_35 = arith.constant dense<0.000000e+00> : vector<1xf32>
      %60 = vector.multi_reduction <add>, %59, %cst_35 [1] : vector<1x128xf32> to vector<1xf32>
      %61 = vector.shape_cast %60 : vector<1xf32> to vector<1x1xf32>
      %62 = vector.broadcast %9 : f32 to vector<1x1xf32>
      %63 = arith.mulf %62, %61 : vector<1x1xf32>
      %64 = arith.addf %58, %63 : vector<1x1xf32>
      %c0_36 = arith.constant 0 : index
      %c0_37 = arith.constant 0 : index
      %c0_38 = arith.constant 0 : index
      %65 = vector.load %arg3[%c0_36, %c0_37, %c0_38] : memref<1x1x1xf32, #tpu.memory_space<vmem>>, vector<1x1x1xf32>
      %66 = vector.shape_cast %65 : vector<1x1x1xf32> to vector<1x1xf32>
      %67 = vector.shape_cast %64 : vector<1x1xf32> to vector<1x1x1xf32>
      tpu.vector_store %arg3[%c0_36, %c0_37, %c0_38], %67 {strides = array<i32>} : memref<1x1x1xf32, #tpu.memory_space<vmem>>, vector<1x1x1xf32>,
    } else {
    }
    %c2_i32_28 = arith.constant 2 : i32
    %47 = arith.cmpi ne, %arg0, %c2_i32_28 : i32
    %48 = arith.extui %47 : i1 to i32
    %c0_i32_29 = arith.constant 0 : i32
    %49 = arith.cmpi ne, %48, %c0_i32_29 : i32
    scf.if %49 {
      %50 = tpu.iota {dimensions = array<i32: 0>} : vector<128x128xi32>
      %51 = tpu.iota {dimensions = array<i32: 1>} : vector<128x128xi32>
      %52 = arith.cmpi eq, %50, %51 : vector<128x128xi32>
      %53 = arith.extui %52 : vector<128x128xi1> to vector<128x128xi32>
      %54 = arith.sitofp %53 : vector<128x128xi32> to vector<128x128xf32>
      %c0_i32_30 = arith.constant 0 : i32
      %c10_i32 = arith.constant 10 : i32
      %55 = arith.addi %c0_i32_30, %c10_i32 : i32
      %c1_i32_31 = arith.constant 1 : i32
      %56:2 = scf.for %arg4 = %c0_i32_30 to %55 step %c1_i32_31 iter_args(%arg5 = %40, %arg6 = %25) -> (vector<128x1xf32>, vector<1x1xf32>)  : i32 {
        %cst_39 = arith.constant 1.000000e+00 : f32
        %68 = vector.broadcast %cst_39 : f32 to vector<1x1xf32>
        %69 = arith.divf %68, %arg6 : vector<1x1xf32>
        %cst_40 = arith.constant 0.000000e+00 : f32
        %70 = vector.broadcast %cst_40 : f32 to vector<1x1xf32>
        %71 = arith.subf %70, %arg6 : vector<1x1xf32>
        %72 = vector.broadcast %arg5 : vector<128x1xf32> to vector<128x128xf32>
        %73 = arith.subf %72, %14 : vector<128x128xf32>
        %74 = vector.broadcast %69 : vector<1x1xf32> to vector<128x128xf32>
        %75 = arith.mulf %73, %74 : vector<128x128xf32>
        %cst_41 = arith.constant dense<0xFF800000> : vector<128xf32>
        %76 = vector.multi_reduction <maximumf>, %75, %cst_41 [0] : vector<128x128xf32> to vector<128xf32>
        %77 = vector.shape_cast %76 : vector<128xf32> to vector<1x128xf32>
        %78 = vector.broadcast %77 : vector<1x128xf32> to vector<128x128xf32>
        %79 = arith.subf %75, %78 : vector<128x128xf32>
        %80 = math.exp %79 : vector<128x128xf32>
        %cst_42 = arith.constant dense<0.000000e+00> : vector<128xf32>
        %81 = vector.multi_reduction <add>, %80, %cst_42 [0] : vector<128x128xf32> to vector<128xf32>
        %82 = vector.shape_cast %81 : vector<128xf32> to vector<1x128xf32>
        %83 = math.log %82 : vector<1x128xf32>
        %84 = arith.addf %77, %83 : vector<1x128xf32>
        %85 = vector.broadcast %6 : f32 to vector<1x128xf32>
        %86 = arith.addf %85, %84 : vector<1x128xf32>
        %87 = vector.broadcast %71 : vector<1x1xf32> to vector<1x128xf32>
        %88 = arith.mulf %87, %86 : vector<1x128xf32>
        %cst_43 = arith.constant dense<0.000000e+00> : vector<128x1xf32>
        %89 = tpu.matmul %54, %88, %cst_43 {dimension_numbers = #tpu.dot_dimension_numbers<[1], [1], [0], [0], [0, 0, 1, 0], [], []>} : vector<128x128xf32>, vector<1x128xf32>, vector<128x1xf32> -> vector<128x1xf32>
        %90 = arith.addf %arg5, %89 : vector<128x1xf32>
        %cst_44 = arith.constant 5.000000e-01 : f32
        %91 = vector.broadcast %cst_44 : f32 to vector<128x1xf32>
        %92 = arith.mulf %91, %90 : vector<128x1xf32>
        %cst_45 = arith.constant -1.000000e+30 : f32
        %93 = vector.broadcast %cst_45 : f32 to vector<128x1xf32>
        %94 = arith.select %33, %92, %93 : vector<128x1xi1>, vector<128x1xf32>
        %cst_46 = arith.constant 2.500000e-01 : f32
        %95 = vector.broadcast %cst_46 : f32 to vector<1x1xf32>
        %96 = arith.mulf %arg6, %95 : vector<1x1xf32>
        %cst_47 = arith.constant 9.99999974E-5 : f32
        %97 = vector.broadcast %cst_47 : f32 to vector<1x1xf32>
        %98 = arith.maximumf %96, %97 : vector<1x1xf32>
        scf.yield %94, %98 : vector<128x1xf32>, vector<1x1xf32>
      }
      %c0_i32_32 = arith.constant 0 : i32
      %c22_i32 = arith.constant 22 : i32
      %57 = arith.addi %c0_i32_32, %c22_i32 : i32
      %c1_i32_33 = arith.constant 1 : i32
      %58 = scf.for %arg4 = %c0_i32_32 to %57 step %c1_i32_33 iter_args(%arg5 = %56#0) -> (vector<128x1xf32>)  : i32 {
        %cst_39 = arith.constant 1.000000e+04 : f32
        %68 = vector.broadcast %cst_39 : f32 to vector<128x1xf32>
        %69 = arith.mulf %arg5, %68 : vector<128x1xf32>
        %70 = vector.broadcast %69 : vector<128x1xf32> to vector<128x128xf32>
        %71 = arith.subf %70, %16 : vector<128x128xf32>
        %cst_40 = arith.constant dense<0xFF800000> : vector<128xf32>
        %72 = vector.multi_reduction <maximumf>, %71, %cst_40 [0] : vector<128x128xf32> to vector<128xf32>
        %73 = vector.shape_cast %72 : vector<128xf32> to vector<1x128xf32>
        %74 = vector.broadcast %73 : vector<1x128xf32> to vector<128x128xf32>
        %75 = arith.subf %71, %74 : vector<128x128xf32>
        %76 = math.exp %75 : vector<128x128xf32>
        %cst_41 = arith.constant dense<0.000000e+00> : vector<128xf32>
        %77 = vector.multi_reduction <add>, %76, %cst_41 [0] : vector<128x128xf32> to vector<128xf32>
        %78 = vector.shape_cast %77 : vector<128xf32> to vector<1x128xf32>
        %79 = math.log %78 : vector<1x128xf32>
        %80 = arith.addf %73, %79 : vector<1x128xf32>
        %81 = vector.broadcast %6 : f32 to vector<1x128xf32>
        %82 = arith.addf %81, %80 : vector<1x128xf32>
        %cst_42 = arith.constant -9.99999974E-5 : f32
        %83 = vector.broadcast %cst_42 : f32 to vector<1x128xf32>
        %84 = arith.mulf %83, %82 : vector<1x128xf32>
        %cst_43 = arith.constant dense<0.000000e+00> : vector<128x1xf32>
        %85 = tpu.matmul %54, %84, %cst_43 {dimension_numbers = #tpu.dot_dimension_numbers<[1], [1], [0], [0], [0, 0, 1, 0], [], []>} : vector<128x128xf32>, vector<1x128xf32>, vector<128x1xf32> -> vector<128x1xf32>
        %86 = arith.addf %arg5, %85 : vector<128x1xf32>
        %cst_44 = arith.constant 5.000000e-01 : f32
        %87 = vector.broadcast %cst_44 : f32 to vector<128x1xf32>
        %88 = arith.mulf %87, %86 : vector<128x1xf32>
        %cst_45 = arith.constant -1.000000e+30 : f32
        %89 = vector.broadcast %cst_45 : f32 to vector<128x1xf32>
        %90 = arith.select %33, %88, %89 : vector<128x1xi1>, vector<128x1xf32>
        scf.yield %90 : vector<128x1xf32>
      }
      %cst_34 = arith.constant 2.000000e+00 : f32
      %59 = arith.mulf %cst_34, %8 : f32
      %60 = arith.mulf %58, %37 : vector<128x1xf32>
      %cst_35 = arith.constant dense<0.000000e+00> : vector<1xf32>
      %61 = vector.multi_reduction <add>, %60, %cst_35 [0] : vector<128x1xf32> to vector<1xf32>
      %62 = vector.shape_cast %61 : vector<1xf32> to vector<1x1xf32>
      %63 = vector.broadcast %59 : f32 to vector<1x1xf32>
      %64 = arith.mulf %63, %62 : vector<1x1xf32>
      %c0_36 = arith.constant 0 : index
      %c0_37 = arith.constant 0 : index
      %c0_38 = arith.constant 0 : index
      %65 = vector.load %arg3[%c0_36, %c0_37, %c0_38] : memref<1x1x1xf32, #tpu.memory_space<vmem>>, vector<1x1x1xf32>
      %66 = vector.shape_cast %65 : vector<1x1x1xf32> to vector<1x1xf32>
      %67 = vector.shape_cast %64 : vector<1x1xf32> to vector<1x1x1xf32>
      tpu.vector_store %arg3[%c0_36, %c0_37, %c0_38], %67 {strides = array<i32>} : memref<1x1x1xf32, #tpu.memory_space<vmem>>, vector<1x1x1xf32>,
    } else {
    }
    return
  }
  func.func @transform_0(%arg0: i32) -> (i32, i32, i32) {
    %c0_i32 = arith.constant 0 : i32
    %c0_i32_0 = arith.constant 0 : i32
    %c0_i32_1 = arith.constant 0 : i32
    return %arg0, %c0_i32, %c0_i32_0 : i32, i32, i32
  }
  func.func @transform_1(%arg0: i32) -> (i32, i32, i32) {
    %c0_i32 = arith.constant 0 : i32
    %c0_i32_0 = arith.constant 0 : i32
    %c0_i32_1 = arith.constant 0 : i32
    return %arg0, %c0_i32, %c0_i32_0 : i32, i32, i32
  }
  func.func @transform_2(%arg0: i32) -> (i32, i32, i32) {
    %c0_i32 = arith.constant 0 : i32
    %c0_i32_0 = arith.constant 0 : i32
    %c0_i32_1 = arith.constant 0 : i32
    return %arg0, %c0_i32, %c0_i32_0 : i32, i32, i32
  }
}

</mosaic_0001>

<llo_original>
// kernel: pruning_loss_forward.3
$region0: #{pruning_loss_forward.3}
  #allocation0 [shape = 'u32[]', space=smem, size = 0x4, offset = 0x4, fixed_abs, tag = 'smem constant byte address 0x4 - core index']
  #allocation1 [shape = 'u32[144,128]{1,0:T(1,128)}', space=vmem, size = 0x12000, scoped, tag = 'internal scratch']
  %s0 = inlined_call_operand.vmem [shape: f32[128,3], index: 0, kind: input, shape index: {}]
  %s1 = inlined_call_operand.vmem [shape: s32[1,128], index: 1, kind: input, shape index: {}]
  %s2 = inlined_call_operand.vmem [shape: f32[32,3], index: 2, kind: output, shape index: {0}]
  %s3 = inlined_call_operand.vmem [shape: f32[32,9], index: 3, kind: output, shape index: {1}]
  %4 = xla_tuple %s2, %s3
  %s5 = sld [smem:[#allocation0]]
  $region26: #{pruning_loss_forward.3} parent=0
    _
  %s7 = ssub.s32 1, %s5
  %s8 = scalar_select 0, %s7, %s5
  // Predicated region
  $region2: #{pruning_loss_forward.3} parent=0 // pred_check
    _
  $region3: #{pruning_loss_forward.3} parent=0 // pred_check_branch
    %10 = sbr.rel (0) target = $region5
  $region4: #{pruning_loss_forward.3} parent=0 // pred_region
    _
  $region5: #{pruning_loss_forward.3} parent=0 // pred_fallthru
    _
  // Predicated region
  $region6: #{pruning_loss_forward.3} parent=0 // pred_check
    _
  $region7: #{pruning_loss_forward.3} parent=0 // pred_check_branch
    %12 = sbr.rel (0) target = $region9
  $region8: #{pruning_loss_forward.3} parent=0 // pred_region
    _
  $region9: #{pruning_loss_forward.3} parent=0 // pred_fallthru
    _
  %v13 = vld [vmem:[%s0] sm:$0xff]
  %v14 = vld [vmem:[%s0 + $0x8] sm:$0xff]
  %v15 = vld [vmem:[%s0 + $0x10] sm:$0xff]
  %v16 = vld [vmem:[%s0 + $0x18] sm:$0xff]
  %v17 = vld [vmem:[%s0 + $0x20] sm:$0xff]
  %v18 = vld [vmem:[%s0 + $0x28] sm:$0xff]
  %v19 = vld [vmem:[%s0 + $0x30] sm:$0xff]
  %v20 = vld [vmem:[%s0 + $0x38] sm:$0xff]
  %v21 = vld [vmem:[%s0 + $0x40] sm:$0xff]
  %v22 = vld [vmem:[%s0 + $0x48] sm:$0xff]
  %v23 = vld [vmem:[%s0 + $0x50] sm:$0xff]
  %v24 = vld [vmem:[%s0 + $0x58] sm:$0xff]
  %v25 = vld [vmem:[%s0 + $0x60] sm:$0xff]
  %v26 = vld [vmem:[%s0 + $0x68] sm:$0xff]
  %v27 = vld [vmem:[%s0 + $0x70] sm:$0xff]
  %v28 = vld [vmem:[%s0 + $0x78] sm:$0xff]
  %v29 = vld [vmem:[%s1] sm:$0x1]
  %v30 = vlaneseq
  %v31 = vshrl.u32 %v30, 7
  %v32 = vadd.s32 %v31, 8
  %v33 = vadd.s32 %v31, 16
  %v34 = vadd.s32 %v31, 24
  %v35 = vlaneseq
  %v36 = vshrl.u32 %v35, 7
  %v37 = vsub.s32 0, %v36
  %v38 = vrot.slane %v29, %v37
  %vm39 = vcmp.eq.s32.totalorder %v31, %v38
  %vm40 = vcmp.eq.s32.totalorder %v32, %v38
  %vm41 = vcmp.eq.s32.totalorder %v33, %v38
  %vm42 = vcmp.eq.s32.totalorder %v34, %v38
  %v43 = vsel %vm39, 1, 0
  %v44 = vsel %vm40, 1, 0
  %v45 = vsel %vm41, 1, 0
  %v46 = vsel %vm42, 1, 0
  %v47 = vcvt.s32.f32 %v43
  %v48 = vcvt.s32.f32 %v44
  %v49 = vcvt.s32.f32 %v45
  %v50 = vcvt.s32.f32 %v46
  %52 = vset.pattern.permute.xlu0 0
  %53 = vperm.xlu0 %52, %v13
  %v54 = vpop.permute.xlu0 %53
  %57 = vset.pattern.permute.xlu0 0
  %58 = vperm.xlu0 %57, %v14
  %v59 = vpop.permute.xlu0 %58
  %62 = vset.pattern.permute.xlu0 0
  %63 = vperm.xlu0 %62, %v15
  %v64 = vpop.permute.xlu0 %63
  %67 = vset.pattern.permute.xlu0 0
  %68 = vperm.xlu0 %67, %v16
  %v69 = vpop.permute.xlu0 %68
  %72 = vset.pattern.permute.xlu0 0
  %73 = vperm.xlu0 %72, %v17
  %v74 = vpop.permute.xlu0 %73
  %77 = vset.pattern.permute.xlu0 0
  %78 = vperm.xlu0 %77, %v18
  %v79 = vpop.permute.xlu0 %78
  %82 = vset.pattern.permute.xlu0 0
  %83 = vperm.xlu0 %82, %v19
  %v84 = vpop.permute.xlu0 %83
  %87 = vset.pattern.permute.xlu0 0
  %88 = vperm.xlu0 %87, %v20
  %v89 = vpop.permute.xlu0 %88
  %92 = vset.pattern.permute.xlu0 0
  %93 = vperm.xlu0 %92, %v21
  %v94 = vpop.permute.xlu0 %93
  %97 = vset.pattern.permute.xlu0 0
  %98 = vperm.xlu0 %97, %v22
  %v99 = vpop.permute.xlu0 %98
  %102 = vset.pattern.permute.xlu0 0
  %103 = vperm.xlu0 %102, %v23
  %v104 = vpop.permute.xlu0 %103
  %107 = vset.pattern.permute.xlu0 0
  %108 = vperm.xlu0 %107, %v24
  %v109 = vpop.permute.xlu0 %108
  %112 = vset.pattern.permute.xlu0 0
  %113 = vperm.xlu0 %112, %v25
  %v114 = vpop.permute.xlu0 %113
  %117 = vset.pattern.permute.xlu0 0
  %118 = vperm.xlu0 %117, %v26
  %v119 = vpop.permute.xlu0 %118
  %122 = vset.pattern.permute.xlu0 0
  %123 = vperm.xlu0 %122, %v27
  %v124 = vpop.permute.xlu0 %123
  %127 = vset.pattern.permute.xlu0 0
  %128 = vperm.xlu0 %127, %v28
  %v129 = vpop.permute.xlu0 %128
  %v131 = vmul.f32 %v13, %v54
  %v132 = vmul.f32 %v14, %v59
  %v133 = vmul.f32 %v15, %v64
  %v134 = vmul.f32 %v16, %v69
  %v135 = vmul.f32 %v17, %v74
  %v136 = vmul.f32 %v18, %v79
  %v137 = vmul.f32 %v19, %v84
  %v138 = vmul.f32 %v20, %v89
  %v139 = vmul.f32 %v21, %v94
  %v140 = vmul.f32 %v22, %v99
  %v141 = vmul.f32 %v23, %v104
  %v142 = vmul.f32 %v24, %v109
  %v143 = vmul.f32 %v25, %v114
  %v144 = vmul.f32 %v26, %v119
  %v145 = vmul.f32 %v27, %v124
  %v146 = vmul.f32 %v28, %v129
  %147 = vset.pattern.permute.xlu0 1
  %148 = vperm.xlu0 %147, %v13
  %v149 = vpop.permute.xlu0 %148
  %151 = vset.pattern.permute.xlu0 1
  %152 = vperm.xlu0 %151, %v14
  %v153 = vpop.permute.xlu0 %152
  %155 = vset.pattern.permute.xlu0 1
  %156 = vperm.xlu0 %155, %v15
  %v157 = vpop.permute.xlu0 %156
  %159 = vset.pattern.permute.xlu0 1
  %160 = vperm.xlu0 %159, %v16
  %v161 = vpop.permute.xlu0 %160
  %163 = vset.pattern.permute.xlu0 1
  %164 = vperm.xlu0 %163, %v17
  %v165 = vpop.permute.xlu0 %164
  %167 = vset.pattern.permute.xlu0 1
  %168 = vperm.xlu0 %167, %v18
  %v169 = vpop.permute.xlu0 %168
  %171 = vset.pattern.permute.xlu0 1
  %172 = vperm.xlu0 %171, %v19
  %v173 = vpop.permute.xlu0 %172
  %175 = vset.pattern.permute.xlu0 1
  %176 = vperm.xlu0 %175, %v20
  %v177 = vpop.permute.xlu0 %176
  %179 = vset.pattern.permute.xlu0 1
  %180 = vperm.xlu0 %179, %v21
  %v181 = vpop.permute.xlu0 %180
  %183 = vset.pattern.permute.xlu0 1
  %184 = vperm.xlu0 %183, %v22
  %v185 = vpop.permute.xlu0 %184
  %187 = vset.pattern.permute.xlu0 1
  %188 = vperm.xlu0 %187, %v23
  %v189 = vpop.permute.xlu0 %188
  %191 = vset.pattern.permute.xlu0 1
  %192 = vperm.xlu0 %191, %v24
  %v193 = vpop.permute.xlu0 %192
  %195 = vset.pattern.permute.xlu0 1
  %196 = vperm.xlu0 %195, %v25
  %v197 = vpop.permute.xlu0 %196
  %199 = vset.pattern.permute.xlu0 1
  %200 = vperm.xlu0 %199, %v26
  %v201 = vpop.permute.xlu0 %200
  %203 = vset.pattern.permute.xlu0 1
  %204 = vperm.xlu0 %203, %v27
  %v205 = vpop.permute.xlu0 %204
  %207 = vset.pattern.permute.xlu0 1
  %208 = vperm.xlu0 %207, %v28
  %v209 = vpop.permute.xlu0 %208
  %v211 = vmul.f32 %v13, %v149
  %v212 = vmul.f32 %v14, %v153
  %v213 = vmul.f32 %v15, %v157
  %v214 = vmul.f32 %v16, %v161
  %v215 = vmul.f32 %v17, %v165
  %v216 = vmul.f32 %v18, %v169
  %v217 = vmul.f32 %v19, %v173
  %v218 = vmul.f32 %v20, %v177
  %v219 = vmul.f32 %v21, %v181
  %v220 = vmul.f32 %v22, %v185
  %v221 = vmul.f32 %v23, %v189
  %v222 = vmul.f32 %v24, %v193
  %v223 = vmul.f32 %v25, %v197
  %v224 = vmul.f32 %v26, %v201
  %v225 = vmul.f32 %v27, %v205
  %v226 = vmul.f32 %v28, %v209
  %227 = vset.pattern.permute.xlu0 2
  %228 = vperm.xlu0 %227, %v13
  %v229 = vpop.permute.xlu0 %228
  %231 = vset.pattern.permute.xlu0 2
  %232 = vperm.xlu0 %231, %v14
  %v233 = vpop.permute.xlu0 %232
  %235 = vset.pattern.permute.xlu0 2
  %236 = vperm.xlu0 %235, %v15
  %v237 = vpop.permute.xlu0 %236
  %239 = vset.pattern.permute.xlu0 2
  %240 = vperm.xlu0 %239, %v16
  %v241 = vpop.permute.xlu0 %240
  %243 = vset.pattern.permute.xlu0 2
  %244 = vperm.xlu0 %243, %v17
  %v245 = vpop.permute.xlu0 %244
  %247 = vset.pattern.permute.xlu0 2
  %248 = vperm.xlu0 %247, %v18
  %v249 = vpop.permute.xlu0 %248
  %251 = vset.pattern.permute.xlu0 2
  %252 = vperm.xlu0 %251, %v19
  %v253 = vpop.permute.xlu0 %252
  %255 = vset.pattern.permute.xlu0 2
  %256 = vperm.xlu0 %255, %v20
  %v257 = vpop.permute.xlu0 %256
  %259 = vset.pattern.permute.xlu0 2
  %260 = vperm.xlu0 %259, %v21
  %v261 = vpop.permute.xlu0 %260
  %263 = vset.pattern.permute.xlu0 2
  %264 = vperm.xlu0 %263, %v22
  %v265 = vpop.permute.xlu0 %264
  %267 = vset.pattern.permute.xlu0 2
  %268 = vperm.xlu0 %267, %v23
  %v269 = vpop.permute.xlu0 %268
  %271 = vset.pattern.permute.xlu0 2
  %272 = vperm.xlu0 %271, %v24
  %v273 = vpop.permute.xlu0 %272
  %275 = vset.pattern.permute.xlu0 2
  %276 = vperm.xlu0 %275, %v25
  %v277 = vpop.permute.xlu0 %276
  %279 = vset.pattern.permute.xlu0 2
  %280 = vperm.xlu0 %279, %v26
  %v281 = vpop.permute.xlu0 %280
  %283 = vset.pattern.permute.xlu0 2
  %284 = vperm.xlu0 %283, %v27
  %v285 = vpop.permute.xlu0 %284
  %287 = vset.pattern.permute.xlu0 2
  %288 = vperm.xlu0 %287, %v28
  %v289 = vpop.permute.xlu0 %288
  %v291 = vmul.f32 %v13, %v229
  %v292 = vmul.f32 %v14, %v233
  %v293 = vmul.f32 %v15, %v237
  %v294 = vmul.f32 %v16, %v241
  %v295 = vmul.f32 %v17, %v245
  %v296 = vmul.f32 %v18, %v249
  %v297 = vmul.f32 %v19, %v253
  %v298 = vmul.f32 %v20, %v257
  %v299 = vmul.f32 %v21, %v261
  %v300 = vmul.f32 %v22, %v265
  %v301 = vmul.f32 %v23, %v269
  %v302 = vmul.f32 %v24, %v273
  %v303 = vmul.f32 %v25, %v277
  %v304 = vmul.f32 %v26, %v281
  %v305 = vmul.f32 %v27, %v285
  %v306 = vmul.f32 %v28, %v289
  %323 = vrot.lane.b32.xlu0 %v211, 3
  %v324 = vpop.permute.xlu0 %323
  %325 = vrot.lane.b32.xlu0 %v212, 3
  %v326 = vpop.permute.xlu0 %325
  %327 = vrot.lane.b32.xlu0 %v213, 3
  %v328 = vpop.permute.xlu0 %327
  %329 = vrot.lane.b32.xlu0 %v214, 3
  %v330 = vpop.permute.xlu0 %329
  %331 = vrot.lane.b32.xlu0 %v215, 3
  %v332 = vpop.permute.xlu0 %331
  %333 = vrot.lane.b32.xlu0 %v216, 3
  %v334 = vpop.permute.xlu0 %333
  %335 = vrot.lane.b32.xlu0 %v217, 3
  %v336 = vpop.permute.xlu0 %335
  %337 = vrot.lane.b32.xlu0 %v218, 3
  %v338 = vpop.permute.xlu0 %337
  %339 = vrot.lane.b32.xlu0 %v219, 3
  %v340 = vpop.permute.xlu0 %339
  %341 = vrot.lane.b32.xlu0 %v220, 3
  %v342 = vpop.permute.xlu0 %341
  %343 = vrot.lane.b32.xlu0 %v221, 3
  %v344 = vpop.permute.xlu0 %343
  %345 = vrot.lane.b32.xlu0 %v222, 3
  %v346 = vpop.permute.xlu0 %345
  %347 = vrot.lane.b32.xlu0 %v223, 3
  %v348 = vpop.permute.xlu0 %347
  %349 = vrot.lane.b32.xlu0 %v224, 3
  %v350 = vpop.permute.xlu0 %349
  %351 = vrot.lane.b32.xlu0 %v225, 3
  %v352 = vpop.permute.xlu0 %351
  %353 = vrot.lane.b32.xlu0 %v226, 3
  %v354 = vpop.permute.xlu0 %353
  %387 = vrot.lane.b32.xlu0 %v291, 6
  %v388 = vpop.permute.xlu0 %387
  %389 = vrot.lane.b32.xlu0 %v292, 6
  %v390 = vpop.permute.xlu0 %389
  %391 = vrot.lane.b32.xlu0 %v293, 6
  %v392 = vpop.permute.xlu0 %391
  %393 = vrot.lane.b32.xlu0 %v294, 6
  %v394 = vpop.permute.xlu0 %393
  %395 = vrot.lane.b32.xlu0 %v295, 6
  %v396 = vpop.permute.xlu0 %395
  %397 = vrot.lane.b32.xlu0 %v296, 6
  %v398 = vpop.permute.xlu0 %397
  %399 = vrot.lane.b32.xlu0 %v297, 6
  %v400 = vpop.permute.xlu0 %399
  %401 = vrot.lane.b32.xlu0 %v298, 6
  %v402 = vpop.permute.xlu0 %401
  %403 = vrot.lane.b32.xlu0 %v299, 6
  %v404 = vpop.permute.xlu0 %403
  %405 = vrot.lane.b32.xlu0 %v300, 6
  %v406 = vpop.permute.xlu0 %405
  %407 = vrot.lane.b32.xlu0 %v301, 6
  %v408 = vpop.permute.xlu0 %407
  %409 = vrot.lane.b32.xlu0 %v302, 6
  %v410 = vpop.permute.xlu0 %409
  %411 = vrot.lane.b32.xlu0 %v303, 6
  %v412 = vpop.permute.xlu0 %411
  %413 = vrot.lane.b32.xlu0 %v304, 6
  %v414 = vpop.permute.xlu0 %413
  %415 = vrot.lane.b32.xlu0 %v305, 6
  %v416 = vpop.permute.xlu0 %415
  %417 = vrot.lane.b32.xlu0 %v306, 6
  %v418 = vpop.permute.xlu0 %417
  %vm435 = vcmask 23552
  %v436 = vsel %vm435, %v131, %v324
  %v437 = vsel %vm435, %v132, %v326
  %v438 = vsel %vm435, %v133, %v328
  %v439 = vsel %vm435, %v134, %v330
  %v440 = vsel %vm435, %v135, %v332
  %v441 = vsel %vm435, %v136, %v334
  %v442 = vsel %vm435, %v137, %v336
  %v443 = vsel %vm435, %v138, %v338
  %v444 = vsel %vm435, %v139, %v340
  %v445 = vsel %vm435, %v140, %v342
  %v446 = vsel %vm435, %v141, %v344
  %v447 = vsel %vm435, %v142, %v346
  %v448 = vsel %vm435, %v143, %v348
  %v449 = vsel %vm435, %v144, %v350
  %v450 = vsel %vm435, %v145, %v352
  %v451 = vsel %vm435, %v146, %v354
  %vm452 = vcmask 48128
  %v453 = vsel %vm452, %v436, %v388
  %v454 = vsel %vm452, %v437, %v390
  %v455 = vsel %vm452, %v438, %v392
  %v456 = vsel %vm452, %v439, %v394
  %v457 = vsel %vm452, %v440, %v396
  %v458 = vsel %vm452, %v441, %v398
  %v459 = vsel %vm452, %v442, %v400
  %v460 = vsel %vm452, %v443, %v402
  %v461 = vsel %vm452, %v444, %v404
  %v462 = vsel %vm452, %v445, %v406
  %v463 = vsel %vm452, %v446, %v408
  %v464 = vsel %vm452, %v447, %v410
  %v465 = vsel %vm452, %v448, %v412
  %v466 = vsel %vm452, %v449, %v414
  %v467 = vsel %vm452, %v450, %v416
  %v468 = vsel %vm452, %v451, %v418
  %469 = vrot.lane.b32.xlu0 %v13, 1
  %v470 = vpop.permute.xlu0 %469
  %471 = vrot.lane.b32.xlu0 %v14, 1
  %v472 = vpop.permute.xlu0 %471
  %473 = vrot.lane.b32.xlu0 %v15, 1
  %v474 = vpop.permute.xlu0 %473
  %475 = vrot.lane.b32.xlu0 %v16, 1
  %v476 = vpop.permute.xlu0 %475
  %477 = vrot.lane.b32.xlu0 %v17, 1
  %v478 = vpop.permute.xlu0 %477
  %479 = vrot.lane.b32.xlu0 %v18, 1
  %v480 = vpop.permute.xlu0 %479
  %481 = vrot.lane.b32.xlu0 %v19, 1
  %v482 = vpop.permute.xlu0 %481
  %483 = vrot.lane.b32.xlu0 %v20, 1
  %v484 = vpop.permute.xlu0 %483
  %485 = vrot.lane.b32.xlu0 %v21, 1
  %v486 = vpop.permute.xlu0 %485
  %487 = vrot.lane.b32.xlu0 %v22, 1
  %v488 = vpop.permute.xlu0 %487
  %489 = vrot.lane.b32.xlu0 %v23, 1
  %v490 = vpop.permute.xlu0 %489
  %491 = vrot.lane.b32.xlu0 %v24, 1
  %v492 = vpop.permute.xlu0 %491
  %493 = vrot.lane.b32.xlu0 %v25, 1
  %v494 = vpop.permute.xlu0 %493
  %495 = vrot.lane.b32.xlu0 %v26, 1
  %v496 = vpop.permute.xlu0 %495
  %497 = vrot.lane.b32.xlu0 %v27, 1
  %v498 = vpop.permute.xlu0 %497
  %499 = vrot.lane.b32.xlu0 %v28, 1
  %v500 = vpop.permute.xlu0 %499
  %533 = vrot.lane.b32.xlu0 %v453, 4
  %v534 = vpop.permute.xlu0 %533
  %535 = vrot.lane.b32.xlu0 %v454, 4
  %v536 = vpop.permute.xlu0 %535
  %537 = vrot.lane.b32.xlu0 %v455, 4
  %v538 = vpop.permute.xlu0 %537
  %539 = vrot.lane.b32.xlu0 %v456, 4
  %v540 = vpop.permute.xlu0 %539
  %541 = vrot.lane.b32.xlu0 %v457, 4
  %v542 = vpop.permute.xlu0 %541
  %543 = vrot.lane.b32.xlu0 %v458, 4
  %v544 = vpop.permute.xlu0 %543
  %545 = vrot.lane.b32.xlu0 %v459, 4
  %v546 = vpop.permute.xlu0 %545
  %547 = vrot.lane.b32.xlu0 %v460, 4
  %v548 = vpop.permute.xlu0 %547
  %549 = vrot.lane.b32.xlu0 %v461, 4
  %v550 = vpop.permute.xlu0 %549
  %551 = vrot.lane.b32.xlu0 %v462, 4
  %v552 = vpop.permute.xlu0 %551
  %553 = vrot.lane.b32.xlu0 %v463, 4
  %v554 = vpop.permute.xlu0 %553
  %555 = vrot.lane.b32.xlu0 %v464, 4
  %v556 = vpop.permute.xlu0 %555
  %557 = vrot.lane.b32.xlu0 %v465, 4
  %v558 = vpop.permute.xlu0 %557
  %559 = vrot.lane.b32.xlu0 %v466, 4
  %v560 = vpop.permute.xlu0 %559
  %561 = vrot.lane.b32.xlu0 %v467, 4
  %v562 = vpop.permute.xlu0 %561
  %563 = vrot.lane.b32.xlu0 %v468, 4
  %v564 = vpop.permute.xlu0 %563
  %vm581 = vcmask 7168
  %v582 = vsel %vm581, 1.0, %v470
  %v583 = vsel %vm581, 1.0, %v472
  %v584 = vsel %vm581, 1.0, %v474
  %v585 = vsel %vm581, 1.0, %v476
  %v586 = vsel %vm581, 1.0, %v478
  %v587 = vsel %vm581, 1.0, %v480
  %v588 = vsel %vm581, 1.0, %v482
  %v589 = vsel %vm581, 1.0, %v484
  %v590 = vsel %vm581, 1.0, %v486
  %v591 = vsel %vm581, 1.0, %v488
  %v592 = vsel %vm581, 1.0, %v490
  %v593 = vsel %vm581, 1.0, %v492
  %v594 = vsel %vm581, 1.0, %v494
  %v595 = vsel %vm581, 1.0, %v496
  %v596 = vsel %vm581, 1.0, %v498
  %v597 = vsel %vm581, 1.0, %v500
  %vm598 = vcmask 31744
  %v599 = vsel %vm598, %v582, %v534
  %v600 = vsel %vm598, %v583, %v536
  %v601 = vsel %vm598, %v584, %v538
  %v602 = vsel %vm598, %v585, %v540
  %v603 = vsel %vm598, %v586, %v542
  %v604 = vsel %vm598, %v587, %v544
  %v605 = vsel %vm598, %v588, %v546
  %v606 = vsel %vm598, %v589, %v548
  %v607 = vsel %vm598, %v590, %v550
  %v608 = vsel %vm598, %v591, %v552
  %v609 = vsel %vm598, %v592, %v554
  %v610 = vsel %vm598, %v593, %v556
  %v611 = vsel %vm598, %v594, %v558
  %v612 = vsel %vm598, %v595, %v560
  %v613 = vsel %vm598, %v596, %v562
  %v614 = vsel %vm598, %v597, %v564
  %615 = vmatprep.subr.mxu0 0.0
  %616 = vmatpush1.msra.mxu0 %v614
  %617 = vmatprep.subr.mxu0 0.0
  %618 = vmatpush1.msra.mxu0 %v613
  %619 = vmatprep.subr.mxu0 0.0
  %620 = vmatpush1.msra.mxu0 %v612
  %621 = vmatprep.subr.mxu0 0.0
  %622 = vmatpush1.msra.mxu0 %v611
  %623 = vmatprep.subr.mxu0 0.0
  %624 = vmatpush1.msra.mxu0 %v610
  %625 = vmatprep.subr.mxu0 0.0
  %626 = vmatpush1.msra.mxu0 %v609
  %627 = vmatprep.subr.mxu0 0.0
  %628 = vmatpush1.msra.mxu0 %v608
  %629 = vmatprep.subr.mxu0 0.0
  %630 = vmatpush1.msra.mxu0 %v607
  %631 = vmatprep.subr.mxu0 0.0
  %632 = vmatpush1.msra.mxu0 %v606
  %633 = vmatprep.subr.mxu0 0.0
  %634 = vmatpush1.msra.mxu0 %v605
  %635 = vmatprep.subr.mxu0 0.0
  %636 = vmatpush1.msra.mxu0 %v604
  %637 = vmatprep.subr.mxu0 0.0
  %638 = vmatpush1.msra.mxu0 %v603
  %639 = vmatprep.subr.mxu0 0.0
  %640 = vmatpush1.msra.mxu0 %v602
  %641 = vmatprep.subr.mxu0 0.0
  %642 = vmatpush1.msra.mxu0 %v601
  %643 = vmatprep.subr.mxu0 0.0
  %644 = vmatpush1.msra.mxu0 %v600
  %645 = vmatprep.subr.mxu0 0.0
  %646 = vmatpush1.msra.mxu0 %v599
  %647 = vmatprep.subr.mxu0 0.0
  %648 = vmatpush2.msra.mxu0 0.0
  %649 = vmatprep.subr.mxu0 0.0
  %650 = vmatpush2.msra.mxu0 0.0
  %651 = vmatprep.subr.mxu0 0.0
  %652 = vmatpush2.msra.mxu0 0.0
  %653 = vmatprep.subr.mxu0 0.0
  %654 = vmatpush2.msra.mxu0 0.0
  %655 = vmatprep.subr.mxu0 0.0
  %656 = vmatpush2.msra.mxu0 0.0
  %657 = vmatprep.subr.mxu0 0.0
  %658 = vmatpush2.msra.mxu0 0.0
  %659 = vmatprep.subr.mxu0 0.0
  %660 = vmatpush2.msra.mxu0 0.0
  %661 = vmatprep.subr.mxu0 0.0
  %662 = vmatpush2.msra.mxu0 0.0
  %663 = vmatprep.subr.mxu0 0.0
  %664 = vmatpush2.msra.mxu0 0.0
  %665 = vmatprep.subr.mxu0 0.0
  %666 = vmatpush2.msra.mxu0 0.0
  %667 = vmatprep.subr.mxu0 0.0
  %668 = vmatpush2.msra.mxu0 0.0
  %669 = vmatprep.subr.mxu0 0.0
  %670 = vmatpush2.msra.mxu0 0.0
  %671 = vmatprep.subr.mxu0 0.0
  %672 = vmatpush2.msra.mxu0 0.0
  %673 = vmatprep.subr.mxu0 0.0
  %674 = vmatpush2.msra.mxu0 0.0
  %675 = vmatprep.subr.mxu0 0.0
  %676 = vmatpush2.msra.mxu0 0.0
  %677 = vmatprep.subr.mxu0 0.0
  %678 = vmatpush2.msra.mxu0 0.0
  %679 = vmatprep.mubr.f32.mxu0 0.0
  %680 = vmatmul.mubr.f32.gmra.mxu0 %v47
  %v681 = vpop.f32.mrf.mxu0
  %v682 = vadd.f32 0.0, %v681
  %v683 = vpop.f32.mrf.mxu0
  %684 = vmatprep.mubr.f32.mxu0 0.0
  %685 = vmatmul.mubr.f32.gmra.mxu0 %v48
  %v686 = vpop.f32.mrf.mxu0
  %v687 = vadd.f32 0.0, %v686
  %v688 = vpop.f32.mrf.mxu0
  %689 = vmatprep.mubr.f32.mxu0 0.0
  %690 = vmatmul.mubr.f32.gmra.mxu0 %v49
  %v691 = vpop.f32.mrf.mxu0
  %v692 = vadd.f32 0.0, %v691
  %v693 = vpop.f32.mrf.mxu0
  %694 = vmatprep.mubr.f32.mxu0 0.0
  %695 = vmatmul.mubr.f32.gmra.mxu0 %v50
  %v696 = vpop.f32.mrf.mxu0
  %v697 = vadd.f32 0.0, %v696
  %v698 = vpop.f32.mrf.mxu0
  %699 = vdwg.mxu0
  %v700 = vmax.f32 %v682, 1.0
  %v701 = vmax.f32 %v687, 1.0
  %v702 = vmax.f32 %v692, 1.0
  %v703 = vmax.f32 %v697, 1.0
  %v704 = vrcp.pop %v700
  %v705 = vmul.f32 1.0, %v704
  %v706 = vrcp.pop %v701
  %v707 = vmul.f32 1.0, %v706
  %v708 = vrcp.pop %v702
  %v709 = vmul.f32 1.0, %v708
  %v710 = vrcp.pop %v703
  %v711 = vmul.f32 1.0, %v710
  %713 = vset.pattern.permute.xlu0 0
  %714 = vperm.xlu0 %713, %v705
  %v715 = vpop.permute.xlu0 %714
  %718 = vset.pattern.permute.xlu0 0
  %719 = vperm.xlu0 %718, %v707
  %v720 = vpop.permute.xlu0 %719
  %723 = vset.pattern.permute.xlu0 0
  %724 = vperm.xlu0 %723, %v709
  %v725 = vpop.permute.xlu0 %724
  %728 = vset.pattern.permute.xlu0 0
  %729 = vperm.xlu0 %728, %v711
  %v730 = vpop.permute.xlu0 %729
  %v732 = vmul.f32 %v682, %v715
  %v733 = vmul.f32 %v687, %v720
  %v734 = vmul.f32 %v692, %v725
  %v735 = vmul.f32 %v697, %v730
  %740 = vrot.lane.b32.xlu0 %v732, 127
  %v741 = vpop.permute.xlu0 %740
  %742 = vrot.lane.b32.xlu0 %v733, 127
  %v743 = vpop.permute.xlu0 %742
  %744 = vrot.lane.b32.xlu0 %v734, 127
  %v745 = vpop.permute.xlu0 %744
  %746 = vrot.lane.b32.xlu0 %v735, 127
  %v747 = vpop.permute.xlu0 %746
  %752 = vst.msk [vmem:[%s2] sm:$0xff] %vm435, %v741
  %753 = vst.msk [vmem:[%s2 + $0x8] sm:$0xff] %vm435, %v743
  %754 = vst.msk [vmem:[%s2 + $0x10] sm:$0xff] %vm435, %v745
  %755 = vst.msk [vmem:[%s2 + $0x18] sm:$0xff] %vm435, %v747
  %756 = vset.pattern.permute.xlu0 1
  %757 = vperm.xlu0 %756, %v732
  %v758 = vpop.permute.xlu0 %757
  %760 = vset.pattern.permute.xlu0 1
  %761 = vperm.xlu0 %760, %v733
  %v762 = vpop.permute.xlu0 %761
  %764 = vset.pattern.permute.xlu0 1
  %765 = vperm.xlu0 %764, %v734
  %v766 = vpop.permute.xlu0 %765
  %768 = vset.pattern.permute.xlu0 1
  %769 = vperm.xlu0 %768, %v735
  %v770 = vpop.permute.xlu0 %769
  %v772 = vmul.f32 %v732, %v758
  %v773 = vmul.f32 %v733, %v762
  %v774 = vmul.f32 %v734, %v766
  %v775 = vmul.f32 %v735, %v770
  %776 = vset.pattern.permute.xlu0 2
  %777 = vperm.xlu0 %776, %v732
  %v778 = vpop.permute.xlu0 %777
  %780 = vset.pattern.permute.xlu0 2
  %781 = vperm.xlu0 %780, %v733
  %v782 = vpop.permute.xlu0 %781
  %784 = vset.pattern.permute.xlu0 2
  %785 = vperm.xlu0 %784, %v734
  %v786 = vpop.permute.xlu0 %785
  %788 = vset.pattern.permute.xlu0 2
  %789 = vperm.xlu0 %788, %v735
  %v790 = vpop.permute.xlu0 %789
  %v792 = vmul.f32 %v732, %v778
  %v793 = vmul.f32 %v733, %v782
  %v794 = vmul.f32 %v734, %v786
  %v795 = vmul.f32 %v735, %v790
  %796 = vset.pattern.permute.xlu0 3
  %797 = vperm.xlu0 %796, %v732
  %v798 = vpop.permute.xlu0 %797
  %800 = vset.pattern.permute.xlu0 3
  %801 = vperm.xlu0 %800, %v733
  %v802 = vpop.permute.xlu0 %801
  %804 = vset.pattern.permute.xlu0 3
  %805 = vperm.xlu0 %804, %v734
  %v806 = vpop.permute.xlu0 %805
  %808 = vset.pattern.permute.xlu0 3
  %809 = vperm.xlu0 %808, %v735
  %v810 = vpop.permute.xlu0 %809
  %v812 = vmul.f32 %v732, %v798
  %v813 = vmul.f32 %v733, %v802
  %v814 = vmul.f32 %v734, %v806
  %v815 = vmul.f32 %v735, %v810
  %820 = vrot.lane.b32.xlu0 %v772, 127
  %v821 = vpop.permute.xlu0 %820
  %822 = vrot.lane.b32.xlu0 %v773, 127
  %v823 = vpop.permute.xlu0 %822
  %824 = vrot.lane.b32.xlu0 %v774, 127
  %v825 = vpop.permute.xlu0 %824
  %826 = vrot.lane.b32.xlu0 %v775, 127
  %v827 = vpop.permute.xlu0 %826
  %836 = vrot.lane.b32.xlu0 %v792, 2
  %v837 = vpop.permute.xlu0 %836
  %838 = vrot.lane.b32.xlu0 %v793, 2
  %v839 = vpop.permute.xlu0 %838
  %840 = vrot.lane.b32.xlu0 %v794, 2
  %v841 = vpop.permute.xlu0 %840
  %842 = vrot.lane.b32.xlu0 %v795, 2
  %v843 = vpop.permute.xlu0 %842
  %852 = vrot.lane.b32.xlu0 %v812, 5
  %v853 = vpop.permute.xlu0 %852
  %854 = vrot.lane.b32.xlu0 %v813, 5
  %v855 = vpop.permute.xlu0 %854
  %856 = vrot.lane.b32.xlu0 %v814, 5
  %v857 = vpop.permute.xlu0 %856
  %858 = vrot.lane.b32.xlu0 %v815, 5
  %v859 = vpop.permute.xlu0 %858
  %v864 = vsel %vm435, %v821, %v837
  %v865 = vsel %vm435, %v823, %v839
  %v866 = vsel %vm435, %v825, %v841
  %v867 = vsel %vm435, %v827, %v843
  %v868 = vsel %vm452, %v864, %v853
  %v869 = vsel %vm452, %v865, %v855
  %v870 = vsel %vm452, %v866, %v857
  %v871 = vsel %vm452, %v867, %v859
  %876 = vrot.lane.b32.xlu0 %v868, 4
  %v877 = vpop.permute.xlu0 %876
  %878 = vrot.lane.b32.xlu0 %v869, 4
  %v879 = vpop.permute.xlu0 %878
  %880 = vrot.lane.b32.xlu0 %v870, 4
  %v881 = vpop.permute.xlu0 %880
  %882 = vrot.lane.b32.xlu0 %v871, 4
  %v883 = vpop.permute.xlu0 %882
  %v888 = vsub.f32 %v732, %v877
  %v889 = vsub.f32 %v733, %v879
  %v890 = vsub.f32 %v734, %v881
  %v891 = vsub.f32 %v735, %v883
  %896 = vrot.lane.b32.xlu0 %v888, 124
  %v897 = vpop.permute.xlu0 %896
  %898 = vrot.lane.b32.xlu0 %v889, 124
  %v899 = vpop.permute.xlu0 %898
  %900 = vrot.lane.b32.xlu0 %v890, 124
  %v901 = vpop.permute.xlu0 %900
  %902 = vrot.lane.b32.xlu0 %v891, 124
  %v903 = vpop.permute.xlu0 %902
  %vm908 = vcmask 72704
  %909 = vst.msk [vmem:[%s3] sm:$0xff] %vm908, %v897
  %910 = vst.msk [vmem:[%s3 + $0x8] sm:$0xff] %vm908, %v899
  %911 = vst.msk [vmem:[%s3 + $0x10] sm:$0xff] %vm908, %v901
  %912 = vst.msk [vmem:[%s3 + $0x18] sm:$0xff] %vm908, %v903
  // Predicated region
  $region10: #{pruning_loss_forward.3} parent=0 // pred_check
    _
  $region11: #{pruning_loss_forward.3} parent=0 // pred_check_branch
    %914 = sbr.rel (0) target = $region13
  $region12: #{pruning_loss_forward.3} parent=0 // pred_region
    _
  $region13: #{pruning_loss_forward.3} parent=0 // pred_fallthru
    _
  // Predicated region
  $region14: #{pruning_loss_forward.3} parent=0 // pred_check
    _
  $region15: #{pruning_loss_forward.3} parent=0 // pred_check_branch
    %916 = sbr.rel (0) target = $region17
  $region16: #{pruning_loss_forward.3} parent=0 // pred_region
    _
  $region17: #{pruning_loss_forward.3} parent=0 // pred_fallthru
    _
  // Predicated region
  $region18: #{pruning_loss_forward.3} parent=0 // pred_check
    _
  $region19: #{pruning_loss_forward.3} parent=0 // pred_check_branch
    %918 = sbr.rel (0) target = $region21
  $region20: #{pruning_loss_forward.3} parent=0 // pred_region
    _
  $region21: #{pruning_loss_forward.3} parent=0 // pred_fallthru
    _
  // Predicated region
  $region22: #{pruning_loss_forward.3} parent=0 // pred_check
    _
  $region23: #{pruning_loss_forward.3} parent=0 // pred_check_branch
    %920 = sbr.rel (0) target = $region25
  $region24: #{pruning_loss_forward.3} parent=0 // pred_region
    _
  $region25: #{pruning_loss_forward.3} parent=0 // pred_fallthru
    _

// kernel: pruning_loss_forward.2
$region0: #{pruning_loss_forward.2}
  #allocation0 [shape = 'u32[]', space=smem, size = 0x4, offset = 0x4, fixed_abs, tag = 'smem constant byte address 0x4 - core index']
  #allocation1 [shape = 'u32[144,128]{1,0:T(1,128)}', space=vmem, size = 0x12000, scoped, tag = 'internal scratch']
  %s0 = inlined_call_operand.vmem [shape: f32[3,128,8], index: 0, kind: input, shape index: {}]
  %s1 = inlined_call_operand.vmem [shape: f32[3,128,8], index: 1, kind: input, shape index: {}]
  %s2 = inlined_call_operand.vmem [shape: f32[3,1,1], index: 2, kind: output, shape index: {}]
  %s3 = sld [smem:[#allocation0]]
  $region77: #{pruning_loss_forward.2} parent=0
    _
  %s5 = ssub.s32 1, %s3
  %s6 = scalar_select 0, %s5, %s3
  loop: start=0, step=1, limit=5
  $region2: #{pruning_loss_forward.2} parent=0 // loop_pre_header
    _
  $region3: #{pruning_loss_forward.2} parent=0 // loop_header
    %s8 = sphi 0, %s12
    %p9 = scmp.ge.s32.totalorder %s8, 5
    %s18 = sphi 0, %s20
    %s21 = sphi 0, %s18
    %s22 = sphi 0, %s21
    %s38 = sphi 0, %s22
    %s44 = sphi 0, %s46
    %s47 = sphi 0, %s44
    %s48 = sphi 0, %s47
    %s64 = sphi 0, %s48
    %s70 = sphi 0, %s72
    %s73 = sphi 0, %s70
    %s74 = sphi 0, %s73
    %s90 = sphi 0, %s74
  $region4: #{pruning_loss_forward.2} parent=0 // loop_header_branch
    %11 = sbr.rel (%p9) target = $region8
  $region5: #{pruning_loss_forward.2} parent=0 // loop_body
    %s13 = ssub.s32 %s8, 1
    %s14 = ssub.s32 %s8, 2
    %s15 = sadd.s32 %s8, 1
    %s16 = ssub.s32 %s8, %s15
    %p17 = scmp.eq.s32.totalorder %s16, 0
    %s19 = sadd.s32 %s18, 1
    %s20 = scalar_select %p17, %s18, %s19
    %p23 = pneg %p17
    %p24 = scmp.eq.s32.totalorder %s8, 2
    %p25 = por %p23, %p24
    %p26 = scmp.ne.s32.totalorder %s18, %s21
    %p27 = scmp.eq.s32.totalorder %s8, 0
    %p28 = por %p26, %p27
    %p29 = scmp.ne.s32.totalorder %s18, %s21
    %p30 = scmp.eq.s32.totalorder %s13, 2
    %p31 = por %p29, %p30
    %p32 = scmp.ne.s32.totalorder %s21, %s22
    %p33 = scmp.eq.s32.totalorder %s13, 0
    %p34 = por %p32, %p33
    %p35 = scmp.ne.s32.totalorder %s21, %s22
    %p36 = scmp.eq.s32.totalorder %s14, 2
    %p37 = por %p35, %p36
    %p39 = scmp.ne.s32.totalorder %s22, %s38
    %p40 = scmp.eq.s32.totalorder %s14, 0
    %p41 = por %p39, %p40
    %s42 = ssub.s32 %s8, %s15
    %p43 = scmp.eq.s32.totalorder %s42, 0
    %s45 = sadd.s32 %s44, 1
    %s46 = scalar_select %p43, %s44, %s45
    %p49 = pneg %p43
    %p50 = scmp.eq.s32.totalorder %s8, 2
    %p51 = por %p49, %p50
    %p52 = scmp.ne.s32.totalorder %s44, %s47
    %p53 = scmp.eq.s32.totalorder %s8, 0
    %p54 = por %p52, %p53
    %p55 = scmp.ne.s32.totalorder %s44, %s47
    %p56 = scmp.eq.s32.totalorder %s13, 2
    %p57 = por %p55, %p56
    %p58 = scmp.ne.s32.totalorder %s47, %s48
    %p59 = scmp.eq.s32.totalorder %s13, 0
    %p60 = por %p58, %p59
    %p61 = scmp.ne.s32.totalorder %s47, %s48
    %p62 = scmp.eq.s32.totalorder %s14, 2
    %p63 = por %p61, %p62
    %p65 = scmp.ne.s32.totalorder %s48, %s64
    %p66 = scmp.eq.s32.totalorder %s14, 0
    %p67 = por %p65, %p66
    %s68 = ssub.s32 %s8, %s15
    %p69 = scmp.eq.s32.totalorder %s68, 0
    %s71 = sadd.s32 %s70, 1
    %s72 = scalar_select %p69, %s70, %s71
    %p75 = pneg %p69
    %p76 = scmp.eq.s32.totalorder %s8, 2
    %p77 = por %p75, %p76
    %p78 = scmp.ne.s32.totalorder %s70, %s73
    %p79 = scmp.eq.s32.totalorder %s8, 0
    %p80 = por %p78, %p79
    %p81 = scmp.ne.s32.totalorder %s70, %s73
    %p82 = scmp.eq.s32.totalorder %s13, 2
    %p83 = por %p81, %p82
    %p84 = scmp.ne.s32.totalorder %s73, %s74
    %p85 = scmp.eq.s32.totalorder %s13, 0
    %p86 = por %p84, %p85
    %p87 = scmp.ne.s32.totalorder %s73, %s74
    %p88 = scmp.eq.s32.totalorder %s14, 2
    %p89 = por %p87, %p88
    %p91 = scmp.ne.s32.totalorder %s74, %s90
    %p92 = scmp.eq.s32.totalorder %s14, 0
    %p93 = por %p91, %p92
    %p94 = scmp.le.s32.totalorder 1, %s8
    %p95 = scmp.lt.s32.totalorder %s8, 4
    %p96 = pnand %p94, %p95
    %p97 = pneg %p96
    // Predicated region
    $region9: #{pruning_loss_forward.2} parent=5 // pred_check
      _
    $region10: #{pruning_loss_forward.2} parent=5 // pred_check_branch
      %99 = sbr.rel (%p96) target = $region12
    $region11: #{pruning_loss_forward.2} parent=5 // pred_region
      %s100 = ssub.s32 %s8, 1
    $region12: #{pruning_loss_forward.2} parent=5 // pred_fallthru
      _
    %p101 = scmp.lt.s32.totalorder %s8, 3
    // Predicated region
    $region13: #{pruning_loss_forward.2} parent=5 // pred_check
      %p102 = pneg %p101
    $region14: #{pruning_loss_forward.2} parent=5 // pred_check_branch
      %104 = sbr.rel (%p102) target = $region16
    $region15: #{pruning_loss_forward.2} parent=5 // pred_region
      // Predicated region
      $region17: #{pruning_loss_forward.2} parent=15 // pred_check
        %p105 = pneg %p28
      $region18: #{pruning_loss_forward.2} parent=15 // pred_check_branch
        %107 = sbr.rel (%p105) target = $region20
      $region19: #{pruning_loss_forward.2} parent=15 // pred_region
        %p108 = scmp.lt.s32.totalorder %s8, 2
        %s109 = scalar_select %p108, %s8, 2
        %s110 = smul.addr %s109, 16
        %s111 = smul.addr %s110, 8
        %s112 = scalar_lea.vmem %s0, %s111
      $region20: #{pruning_loss_forward.2} parent=15 // pred_fallthru
        _
      // Predicated region
      $region21: #{pruning_loss_forward.2} parent=15 // pred_check
        %p113 = pneg %p54
      $region22: #{pruning_loss_forward.2} parent=15 // pred_check_branch
        %115 = sbr.rel (%p113) target = $region24
      $region23: #{pruning_loss_forward.2} parent=15 // pred_region
        %p116 = scmp.lt.s32.totalorder %s8, 2
        %s117 = scalar_select %p116, %s8, 2
        %s118 = smul.addr %s117, 16
        %s119 = smul.addr %s118, 8
        %s120 = scalar_lea.vmem %s1, %s119
      $region24: #{pruning_loss_forward.2} parent=15 // pred_fallthru
        _
    $region16: #{pruning_loss_forward.2} parent=5 // pred_fallthru
      _
    %p121 = scmp.le.s32.totalorder 1, %s8
    %p122 = scmp.lt.s32.totalorder %s8, 4
    %p123 = pnand %p121, %p122
    %p124 = pneg %p123
    // Predicated region
    $region25: #{pruning_loss_forward.2} parent=5 // pred_check
      _
    $region26: #{pruning_loss_forward.2} parent=5 // pred_check_branch
      %126 = sbr.rel (%p123) target = $region28
    $region27: #{pruning_loss_forward.2} parent=5 // pred_region
      %s127 = ssub.s32 %s8, 1
      %p128 = scmp.lt.s32.totalorder %s13, 2
      %s129 = scalar_select %p128, %s13, 2
      %s130 = smul.addr %s129, 16
      %s131 = smul.addr %s130, 8
      %s132 = scalar_lea.vmem %s0, %s131
      %p133 = pneg %p34
      %p134 = pneg %p31
      %p135 = scmp.lt.s32.totalorder %s13, 2
      %s136 = scalar_select %p135, %s13, 2
      %s137 = smul.addr %s136, 16
      %s138 = smul.addr %s137, 8
      %s139 = scalar_lea.vmem %s1, %s138
      %p140 = pneg %p60
      %p141 = pneg %p57
      %p142 = pneg %p86
      %p143 = pneg %p83
      %p144 = scmp.lt.s32.totalorder %s13, 2
      %s145 = scalar_select %p144, %s13, 2
      %s146 = scalar_lea.vmem %s2, %s145
      %p147 = scmp.lt.s32.totalorder %s13, 2
      %s148 = scalar_select %p147, %s13, 2
      %s149 = smul.addr %s148, 16
      %s150 = smul.addr %s149, 8
      %s151 = scalar_lea.vmem %s0, %s150
      %p152 = scmp.lt.s32.totalorder %s13, 2
      %s153 = scalar_select %p152, %s13, 2
      %s154 = smul.addr %s153, 16
      %s155 = smul.addr %s154, 8
      %s156 = scalar_lea.vmem %s1, %s155
      %p157 = scmp.lt.s32.totalorder %s13, 2
      %s158 = scalar_select %p157, %s13, 2
      %s159 = scalar_lea.vmem %s2, %s158
      %v160 = vld [vmem:[%s151] sm:$0xff]
      %v161 = vld [vmem:[%s151 + $0x8] sm:$0xff]
      %v162 = vld [vmem:[%s151 + $0x10] sm:$0xff]
      %v163 = vld [vmem:[%s151 + $0x18] sm:$0xff]
      %v164 = vld [vmem:[%s151 + $0x20] sm:$0xff]
      %v165 = vld [vmem:[%s151 + $0x28] sm:$0xff]
      %v166 = vld [vmem:[%s151 + $0x30] sm:$0xff]
      %v167 = vld [vmem:[%s151 + $0x38] sm:$0xff]
      %v168 = vld [vmem:[%s151 + $0x40] sm:$0xff]
      %v169 = vld [vmem:[%s151 + $0x48] sm:$0xff]
      %v170 = vld [vmem:[%s151 + $0x50] sm:$0xff]
      %v171 = vld [vmem:[%s151 + $0x58] sm:$0xff]
      %v172 = vld [vmem:[%s151 + $0x60] sm:$0xff]
      %v173 = vld [vmem:[%s151 + $0x68] sm:$0xff]
      %v174 = vld [vmem:[%s151 + $0x70] sm:$0xff]
      %v175 = vld [vmem:[%s151 + $0x78] sm:$0xff]
      %v176 = vld [vmem:[%s156] sm:$0xff]
      %v177 = vld [vmem:[%s156 + $0x8] sm:$0xff]
      %v178 = vld [vmem:[%s156 + $0x10] sm:$0xff]
      %v179 = vld [vmem:[%s156 + $0x18] sm:$0xff]
      %v180 = vld [vmem:[%s156 + $0x20] sm:$0xff]
      %v181 = vld [vmem:[%s156 + $0x28] sm:$0xff]
      %v182 = vld [vmem:[%s156 + $0x30] sm:$0xff]
      %v183 = vld [vmem:[%s156 + $0x38] sm:$0xff]
      %v184 = vld [vmem:[%s156 + $0x40] sm:$0xff]
      %v185 = vld [vmem:[%s156 + $0x48] sm:$0xff]
      %v186 = vld [vmem:[%s156 + $0x50] sm:$0xff]
      %v187 = vld [vmem:[%s156 + $0x58] sm:$0xff]
      %v188 = vld [vmem:[%s156 + $0x60] sm:$0xff]
      %v189 = vld [vmem:[%s156 + $0x68] sm:$0xff]
      %v190 = vld [vmem:[%s156 + $0x70] sm:$0xff]
      %v191 = vld [vmem:[%s156 + $0x78] sm:$0xff]
      %vm192 = vcmask 64512
      %v194 = vsel %vm192, %v160, 0
      %v197 = vsel %vm192, %v161, 0
      %v200 = vsel %vm192, %v162, 0
      %v203 = vsel %vm192, %v163, 0
      %v206 = vsel %vm192, %v164, 0
      %v209 = vsel %vm192, %v165, 0
      %v212 = vsel %vm192, %v166, 0
      %v215 = vsel %vm192, %v167, 0
      %v218 = vsel %vm192, %v168, 0
      %v221 = vsel %vm192, %v169, 0
      %v224 = vsel %vm192, %v170, 0
      %v227 = vsel %vm192, %v171, 0
      %v230 = vsel %vm192, %v172, 0
      %v233 = vsel %vm192, %v173, 0
      %v236 = vsel %vm192, %v174, 0
      %v239 = vsel %vm192, %v175, 0
      %v242 = vsel %vm192, %v176, 0
      %v245 = vsel %vm192, %v177, 0
      %v248 = vsel %vm192, %v178, 0
      %v251 = vsel %vm192, %v179, 0
      %v254 = vsel %vm192, %v180, 0
      %v257 = vsel %vm192, %v181, 0
      %v260 = vsel %vm192, %v182, 0
      %v263 = vsel %vm192, %v183, 0
      %v266 = vsel %vm192, %v184, 0
      %v269 = vsel %vm192, %v185, 0
      %v272 = vsel %vm192, %v186, 0
      %v275 = vsel %vm192, %v187, 0
      %v278 = vsel %vm192, %v188, 0
      %v281 = vsel %vm192, %v189, 0
      %v284 = vsel %vm192, %v190, 0
      %v287 = vsel %vm192, %v191, 0
      %289 = vmatprep.subr.mxu0 0.0
      %290 = vmatpush1.xpose.msra.mxu0 %v287
      %291 = vmatprep.subr.mxu0 0.0
      %292 = vmatpush1.xpose.msra.mxu0 %v284
      %293 = vmatprep.subr.mxu0 0.0
      %294 = vmatpush1.xpose.msra.mxu0 %v281
      %295 = vmatprep.subr.mxu0 0.0
      %296 = vmatpush1.xpose.msra.mxu0 %v278
      %297 = vmatprep.subr.mxu0 0.0
      %298 = vmatpush1.xpose.msra.mxu0 %v275
      %299 = vmatprep.subr.mxu0 0.0
      %300 = vmatpush1.xpose.msra.mxu0 %v272
      %301 = vmatprep.subr.mxu0 0.0
      %302 = vmatpush1.xpose.msra.mxu0 %v269
      %303 = vmatprep.subr.mxu0 0.0
      %304 = vmatpush1.xpose.msra.mxu0 %v266
      %305 = vmatprep.subr.mxu0 0.0
      %306 = vmatpush1.xpose.msra.mxu0 %v263
      %307 = vmatprep.subr.mxu0 0.0
      %308 = vmatpush1.xpose.msra.mxu0 %v260
      %309 = vmatprep.subr.mxu0 0.0
      %310 = vmatpush1.xpose.msra.mxu0 %v257
      %311 = vmatprep.subr.mxu0 0.0
      %312 = vmatpush1.xpose.msra.mxu0 %v254
      %313 = vmatprep.subr.mxu0 0.0
      %314 = vmatpush1.xpose.msra.mxu0 %v251
      %315 = vmatprep.subr.mxu0 0.0
      %316 = vmatpush1.xpose.msra.mxu0 %v248
      %317 = vmatprep.subr.mxu0 0.0
      %318 = vmatpush1.xpose.msra.mxu0 %v245
      %319 = vmatprep.subr.mxu0 0.0
      %320 = vmatpush1.xpose.msra.mxu0 %v242
      %321 = vmatprep.subr.mxu0 0.0
      %322 = vmatpush2.xpose.msra.mxu0 0.0
      %323 = vmatprep.subr.mxu0 0.0
      %324 = vmatpush2.xpose.msra.mxu0 0.0
      %325 = vmatprep.subr.mxu0 0.0
      %326 = vmatpush2.xpose.msra.mxu0 0.0
      %327 = vmatprep.subr.mxu0 0.0
      %328 = vmatpush2.xpose.msra.mxu0 0.0
      %329 = vmatprep.subr.mxu0 0.0
      %330 = vmatpush2.xpose.msra.mxu0 0.0
      %331 = vmatprep.subr.mxu0 0.0
      %332 = vmatpush2.xpose.msra.mxu0 0.0
      %333 = vmatprep.subr.mxu0 0.0
      %334 = vmatpush2.xpose.msra.mxu0 0.0
      %335 = vmatprep.subr.mxu0 0.0
      %336 = vmatpush2.xpose.msra.mxu0 0.0
      %337 = vmatprep.subr.mxu0 0.0
      %338 = vmatpush2.xpose.msra.mxu0 0.0
      %339 = vmatprep.subr.mxu0 0.0
      %340 = vmatpush2.xpose.msra.mxu0 0.0
      %341 = vmatprep.subr.mxu0 0.0
      %342 = vmatpush2.xpose.msra.mxu0 0.0
      %343 = vmatprep.subr.mxu0 0.0
      %344 = vmatpush2.xpose.msra.mxu0 0.0
      %345 = vmatprep.subr.mxu0 0.0
      %346 = vmatpush2.xpose.msra.mxu0 0.0
      %347 = vmatprep.subr.mxu0 0.0
      %348 = vmatpush2.xpose.msra.mxu0 0.0
      %349 = vmatprep.subr.mxu0 0.0
      %350 = vmatpush2.xpose.msra.mxu0 0.0
      %351 = vmatprep.subr.mxu0 0.0
      %352 = vmatpush2.xpose.msra.mxu0 0.0
      %353 = vmatprep.mubr.f32.mxu0 0.0
      %354 = vmatmul.mubr.f32.gmra.mxu0 %v194
      %v355 = vpop.f32.mrf.mxu0
      %v356 = vadd.f32 0.0, %v355
      %v357 = vpop.f32.mrf.mxu0
      %358 = vmatprep.mubr.f32.mxu0 0.0
      %359 = vmatmul.mubr.f32.gmra.mxu0 %v197
      %v360 = vpop.f32.mrf.mxu0
      %v361 = vadd.f32 0.0, %v360
      %v362 = vpop.f32.mrf.mxu0
      %363 = vmatprep.mubr.f32.mxu0 0.0
      %364 = vmatmul.mubr.f32.gmra.mxu0 %v200
      %v365 = vpop.f32.mrf.mxu0
      %v366 = vadd.f32 0.0, %v365
      %v367 = vpop.f32.mrf.mxu0
      %368 = vmatprep.mubr.f32.mxu0 0.0
      %369 = vmatmul.mubr.f32.gmra.mxu0 %v203
      %v370 = vpop.f32.mrf.mxu0
      %v371 = vadd.f32 0.0, %v370
      %v372 = vpop.f32.mrf.mxu0
      %373 = vmatprep.mubr.f32.mxu0 0.0
      %374 = vmatmul.mubr.f32.gmra.mxu0 %v206
      %v375 = vpop.f32.mrf.mxu0
      %v376 = vadd.f32 0.0, %v375
      %v377 = vpop.f32.mrf.mxu0
      %378 = vmatprep.mubr.f32.mxu0 0.0
      %379 = vmatmul.mubr.f32.gmra.mxu0 %v209
      %v380 = vpop.f32.mrf.mxu0
      %v381 = vadd.f32 0.0, %v380
      %v382 = vpop.f32.mrf.mxu0
      %383 = vmatprep.mubr.f32.mxu0 0.0
      %384 = vmatmul.mubr.f32.gmra.mxu0 %v212
      %v385 = vpop.f32.mrf.mxu0
      %v386 = vadd.f32 0.0, %v385
      %v387 = vpop.f32.mrf.mxu0
      %388 = vmatprep.mubr.f32.mxu0 0.0
      %389 = vmatmul.mubr.f32.gmra.mxu0 %v215
      %v390 = vpop.f32.mrf.mxu0
      %v391 = vadd.f32 0.0, %v390
      %v392 = vpop.f32.mrf.mxu0
      %393 = vmatprep.mubr.f32.mxu0 0.0
      %394 = vmatmul.mubr.f32.gmra.mxu0 %v218
      %v395 = vpop.f32.mrf.mxu0
      %v396 = vadd.f32 0.0, %v395
      %v397 = vpop.f32.mrf.mxu0
      %398 = vmatprep.mubr.f32.mxu0 0.0
      %399 = vmatmul.mubr.f32.gmra.mxu0 %v221
      %v400 = vpop.f32.mrf.mxu0
      %v401 = vadd.f32 0.0, %v400
      %v402 = vpop.f32.mrf.mxu0
      %403 = vmatprep.mubr.f32.mxu0 0.0
      %404 = vmatmul.mubr.f32.gmra.mxu0 %v224
      %v405 = vpop.f32.mrf.mxu0
      %v406 = vadd.f32 0.0, %v405
      %v407 = vpop.f32.mrf.mxu0
      %408 = vmatprep.mubr.f32.mxu0 0.0
      %409 = vmatmul.mubr.f32.gmra.mxu0 %v227
      %v410 = vpop.f32.mrf.mxu0
      %v411 = vadd.f32 0.0, %v410
      %v412 = vpop.f32.mrf.mxu0
      %413 = vmatprep.mubr.f32.mxu0 0.0
      %414 = vmatmul.mubr.f32.gmra.mxu0 %v230
      %v415 = vpop.f32.mrf.mxu0
      %v416 = vadd.f32 0.0, %v415
      %v417 = vpop.f32.mrf.mxu0
      %418 = vmatprep.mubr.f32.mxu0 0.0
      %419 = vmatmul.mubr.f32.gmra.mxu0 %v233
      %v420 = vpop.f32.mrf.mxu0
      %v421 = vadd.f32 0.0, %v420
      %v422 = vpop.f32.mrf.mxu0
      %423 = vmatprep.mubr.f32.mxu0 0.0
      %424 = vmatmul.mubr.f32.gmra.mxu0 %v236
      %v425 = vpop.f32.mrf.mxu0
      %v426 = vadd.f32 0.0, %v425
      %v427 = vpop.f32.mrf.mxu0
      %428 = vmatprep.mubr.f32.mxu0 0.0
      %429 = vmatmul.mubr.f32.gmra.mxu0 %v239
      %v430 = vpop.f32.mrf.mxu0
      %v431 = vadd.f32 0.0, %v430
      %v432 = vpop.f32.mrf.mxu0
      %433 = vdwg.mxu0
      %v434 = vsub.f32 0.0, %v356
      %v435 = vsub.f32 0.0, %v361
      %v436 = vsub.f32 0.0, %v366
      %v437 = vsub.f32 0.0, %v371
      %v438 = vsub.f32 0.0, %v376
      %v439 = vsub.f32 0.0, %v381
      %v440 = vsub.f32 0.0, %v386
      %v441 = vsub.f32 0.0, %v391
      %v442 = vsub.f32 0.0, %v396
      %v443 = vsub.f32 0.0, %v401
      %v444 = vsub.f32 0.0, %v406
      %v445 = vsub.f32 0.0, %v411
      %v446 = vsub.f32 0.0, %v416
      %v447 = vsub.f32 0.0, %v421
      %v448 = vsub.f32 0.0, %v426
      %v449 = vsub.f32 0.0, %v431
      %v450 = vmul.f32 %v434, 10000.0
      %v451 = vmul.f32 %v435, 10000.0
      %v452 = vmul.f32 %v436, 10000.0
      %v453 = vmul.f32 %v437, 10000.0
      %v454 = vmul.f32 %v438, 10000.0
      %v455 = vmul.f32 %v439, 10000.0
      %v456 = vmul.f32 %v440, 10000.0
      %v457 = vmul.f32 %v441, 10000.0
      %v458 = vmul.f32 %v442, 10000.0
      %v459 = vmul.f32 %v443, 10000.0
      %v460 = vmul.f32 %v444, 10000.0
      %v461 = vmul.f32 %v445, 10000.0
      %v462 = vmul.f32 %v446, 10000.0
      %v463 = vmul.f32 %v447, 10000.0
      %v464 = vmul.f32 %v448, 10000.0
      %v465 = vmul.f32 %v449, 10000.0
      %v466 = vand.u32 2147483647, %v434
      %v467 = vand.u32 2147483647, %v435
      %v468 = vand.u32 2147483647, %v436
      %v469 = vand.u32 2147483647, %v437
      %v470 = vand.u32 2147483647, %v438
      %v471 = vand.u32 2147483647, %v439
      %v472 = vand.u32 2147483647, %v440
      %v473 = vand.u32 2147483647, %v441
      %v474 = vand.u32 2147483647, %v442
      %v475 = vand.u32 2147483647, %v443
      %v476 = vand.u32 2147483647, %v444
      %v477 = vand.u32 2147483647, %v445
      %v478 = vand.u32 2147483647, %v446
      %v479 = vand.u32 2147483647, %v447
      %v480 = vand.u32 2147483647, %v448
      %v481 = vand.u32 2147483647, %v449
      %482 = vmax.xlane.f32.xlu0 %v466
      %v483 = vpop.xlane.xlu0 %482
      %484 = vmax.xlane.f32.xlu0 %v467
      %v485 = vpop.xlane.xlu0 %484
      %486 = vmax.xlane.f32.xlu0 %v468
      %v487 = vpop.xlane.xlu0 %486
      %488 = vmax.xlane.f32.xlu0 %v469
      %v489 = vpop.xlane.xlu0 %488
      %490 = vmax.xlane.f32.xlu0 %v470
      %v491 = vpop.xlane.xlu0 %490
      %492 = vmax.xlane.f32.xlu0 %v471
      %v493 = vpop.xlane.xlu0 %492
      %494 = vmax.xlane.f32.xlu0 %v472
      %v495 = vpop.xlane.xlu0 %494
      %496 = vmax.xlane.f32.xlu0 %v473
      %v497 = vpop.xlane.xlu0 %496
      %498 = vmax.xlane.f32.xlu0 %v474
      %v499 = vpop.xlane.xlu0 %498
      %500 = vmax.xlane.f32.xlu0 %v475
      %v501 = vpop.xlane.xlu0 %500
      %502 = vmax.xlane.f32.xlu0 %v476
      %v503 = vpop.xlane.xlu0 %502
      %504 = vmax.xlane.f32.xlu0 %v477
      %v505 = vpop.xlane.xlu0 %504
      %506 = vmax.xlane.f32.xlu0 %v478
      %v507 = vpop.xlane.xlu0 %506
      %508 = vmax.xlane.f32.xlu0 %v479
      %v509 = vpop.xlane.xlu0 %508
      %510 = vmax.xlane.f32.xlu0 %v480
      %v511 = vpop.xlane.xlu0 %510
      %512 = vmax.xlane.f32.xlu0 %v481
      %v513 = vpop.xlane.xlu0 %512
      %v514 = vmax.f32 %v483, %v491
      %v515 = vmax.f32 %v485, %v493
      %v516 = vmax.f32 %v487, %v495
      %v517 = vmax.f32 %v489, %v497
      %v518 = vmax.f32 %v514, %v499
      %v519 = vmax.f32 %v515, %v501
      %v520 = vmax.f32 %v516, %v503
      %v521 = vmax.f32 %v517, %v505
      %v522 = vmax.f32 %v518, %v507
      %v523 = vmax.f32 %v519, %v509
      %v524 = vmax.f32 %v520, %v511
      %v525 = vmax.f32 %v521, %v513
      %v526 = vmax.f32 %v522, %v523
      %v527 = vmax.f32 %v524, %v525
      %v528 = vmax.f32 %v526, %v527
      %v529 = vrot.slane %v528, 4
      %v530 = vmax.f32 %v528, %v529
      %v531 = vrot.slane %v530, 2
      %v532 = vmax.f32 %v530, %v531
      %v533 = vrot.slane %v532, 1
      %v534 = vmax.f32 %v532, %v533
      %v535 = vmul.f32 %v534, 2.0
      %v536 = vmax.f32 %v535, 0.0001
      %v537 = vlaneseq
      %v538 = vand.u32 %v537, 127
      %v539 = vcvt.s32.f32 %v538
      %v540 = vlaneseq
      %v541 = vshrl.u32 %v540, 7
      %v542 = vadd.s32 %v541, 8
      %v543 = vadd.s32 %v541, 16
      %v544 = vadd.s32 %v541, 24
      %v545 = vadd.s32 %v541, 32
      %v546 = vadd.s32 %v541, 40
      %v547 = vadd.s32 %v541, 48
      %v548 = vadd.s32 %v541, 56
      %v549 = vadd.s32 %v541, 64
      %v550 = vadd.s32 %v541, 72
      %v551 = vadd.s32 %v541, 80
      %v552 = vadd.s32 %v541, 88
      %v553 = vadd.s32 %v541, 96
      %v554 = vadd.s32 %v541, 104
      %v555 = vadd.s32 %v541, 112
      %v556 = vadd.s32 %v541, 120
      %v557 = vcvt.s32.f32 %v541
      %v558 = vcvt.s32.f32 %v542
      %v559 = vcvt.s32.f32 %v543
      %v560 = vcvt.s32.f32 %v544
      %v561 = vcvt.s32.f32 %v545
      %v562 = vcvt.s32.f32 %v546
      %v563 = vcvt.s32.f32 %v547
      %v564 = vcvt.s32.f32 %v548
      %v565 = vcvt.s32.f32 %v549
      %v566 = vcvt.s32.f32 %v550
      %v567 = vcvt.s32.f32 %v551
      %v568 = vcvt.s32.f32 %v552
      %v569 = vcvt.s32.f32 %v553
      %v570 = vcvt.s32.f32 %v554
      %v571 = vcvt.s32.f32 %v555
      %v572 = vcvt.s32.f32 %v556
      %vm573 = vcmp.lt.f32.partialorder %v539, 128.0
      %vm574 = vcmp.lt.f32.partialorder %v557, 128.0
      %vm575 = vcmp.lt.f32.partialorder %v558, 128.0
      %vm576 = vcmp.lt.f32.partialorder %v559, 128.0
      %vm577 = vcmp.lt.f32.partialorder %v560, 128.0
      %vm578 = vcmp.lt.f32.partialorder %v561, 128.0
      %vm579 = vcmp.lt.f32.partialorder %v562, 128.0
      %vm580 = vcmp.lt.f32.partialorder %v563, 128.0
      %vm581 = vcmp.lt.f32.partialorder %v564, 128.0
      %vm582 = vcmp.lt.f32.partialorder %v565, 128.0
      %vm583 = vcmp.lt.f32.partialorder %v566, 128.0
      %vm584 = vcmp.lt.f32.partialorder %v567, 128.0
      %vm585 = vcmp.lt.f32.partialorder %v568, 128.0
      %vm586 = vcmp.lt.f32.partialorder %v569, 128.0
      %vm587 = vcmp.lt.f32.partialorder %v570, 128.0
      %vm588 = vcmp.lt.f32.partialorder %v571, 128.0
      %vm589 = vcmp.lt.f32.partialorder %v572, 128.0
      %v590 = vsel %vm573, 1, 0
      %v591 = vcvt.s32.f32 %v590
      %v592 = vsel %vm574, 1, 0
      %v593 = vsel %vm575, 1, 0
      %v594 = vsel %vm576, 1, 0
      %v595 = vsel %vm577, 1, 0
      %v596 = vsel %vm578, 1, 0
      %v597 = vsel %vm579, 1, 0
      %v598 = vsel %vm580, 1, 0
      %v599 = vsel %vm581, 1, 0
      %v600 = vsel %vm582, 1, 0
      %v601 = vsel %vm583, 1, 0
      %v602 = vsel %vm584, 1, 0
      %v603 = vsel %vm585, 1, 0
      %v604 = vsel %vm586, 1, 0
      %v605 = vsel %vm587, 1, 0
      %v606 = vsel %vm588, 1, 0
      %v607 = vsel %vm589, 1, 0
      %v608 = vcvt.s32.f32 %v592
      %v609 = vcvt.s32.f32 %v593
      %v610 = vcvt.s32.f32 %v594
      %v611 = vcvt.s32.f32 %v595
      %v612 = vcvt.s32.f32 %v596
      %v613 = vcvt.s32.f32 %v597
      %v614 = vcvt.s32.f32 %v598
      %v615 = vcvt.s32.f32 %v599
      %v616 = vcvt.s32.f32 %v600
      %v617 = vcvt.s32.f32 %v601
      %v618 = vcvt.s32.f32 %v602
      %v619 = vcvt.s32.f32 %v603
      %v620 = vcvt.s32.f32 %v604
      %v621 = vcvt.s32.f32 %v605
      %v622 = vcvt.s32.f32 %v606
      %v623 = vcvt.s32.f32 %v607
      %v624 = vsel %vm574, 0.0, -1e+30
      %v625 = vsel %vm575, 0.0, -1e+30
      %v626 = vsel %vm576, 0.0, -1e+30
      %v627 = vsel %vm577, 0.0, -1e+30
      %v628 = vsel %vm578, 0.0, -1e+30
      %v629 = vsel %vm579, 0.0, -1e+30
      %v630 = vsel %vm580, 0.0, -1e+30
      %v631 = vsel %vm581, 0.0, -1e+30
      %v632 = vsel %vm582, 0.0, -1e+30
      %v633 = vsel %vm583, 0.0, -1e+30
      %v634 = vsel %vm584, 0.0, -1e+30
      %v635 = vsel %vm585, 0.0, -1e+30
      %v636 = vsel %vm586, 0.0, -1e+30
      %v637 = vsel %vm587, 0.0, -1e+30
      %v638 = vsel %vm588, 0.0, -1e+30
      %v639 = vsel %vm589, 0.0, -1e+30
      %v640 = vsel %vm573, 0.0, -1e+30
      %p641 = scmp.eq.s32.totalorder %s13, 2
      // Predicated region
      $region29: #{pruning_loss_forward.2} parent=27 // pred_check
        %p642 = pneg %p641
      $region30: #{pruning_loss_forward.2} parent=27 // pred_check_branch
        %644 = sbr.rel (%p642) target = $region32
      $region31: #{pruning_loss_forward.2} parent=27 // pred_region
        loop: start=0, step=1, limit=10
        $region33: #{pruning_loss_forward.2} parent=31 // loop_pre_header
          _
        $region34: #{pruning_loss_forward.2} parent=31 // loop_header
          %s646 = sphi 0, %s650
          %p647 = scmp.ge.s32.totalorder %s646, 10
          %v651 = vphi %v624, %v896
          %v652 = vphi %v625, %v897
          %v653 = vphi %v626, %v898
          %v654 = vphi %v627, %v899
          %v655 = vphi %v628, %v900
          %v656 = vphi %v629, %v901
          %v657 = vphi %v630, %v902
          %v658 = vphi %v631, %v903
          %v659 = vphi %v632, %v904
          %v660 = vphi %v633, %v905
          %v661 = vphi %v634, %v906
          %v662 = vphi %v635, %v907
          %v663 = vphi %v636, %v908
          %v664 = vphi %v637, %v909
          %v665 = vphi %v638, %v910
          %v666 = vphi %v639, %v911
          %v667 = vphi %v640, %v1039
          %v668 = vphi %v536, %v1041
        $region35: #{pruning_loss_forward.2} parent=31 // loop_header_branch
          %649 = sbr.rel (%p647) target = $region39
        $region36: #{pruning_loss_forward.2} parent=31 // loop_body
          %v669 = vrcp.pop %v668
          %v670 = vmul.f32 1.0, %v669
          %v671 = vsub.f32 0.0, %v668
          %v672 = vsub.f32 %v667, %v434
          %v673 = vsub.f32 %v667, %v435
          %v674 = vsub.f32 %v667, %v436
          %v675 = vsub.f32 %v667, %v437
          %v676 = vsub.f32 %v667, %v438
          %v677 = vsub.f32 %v667, %v439
          %v678 = vsub.f32 %v667, %v440
          %v679 = vsub.f32 %v667, %v441
          %v680 = vsub.f32 %v667, %v442
          %v681 = vsub.f32 %v667, %v443
          %v682 = vsub.f32 %v667, %v444
          %v683 = vsub.f32 %v667, %v445
          %v684 = vsub.f32 %v667, %v446
          %v685 = vsub.f32 %v667, %v447
          %v686 = vsub.f32 %v667, %v448
          %v687 = vsub.f32 %v667, %v449
          %v688 = vmul.f32 %v672, %v670
          %v689 = vmul.f32 %v673, %v670
          %v690 = vmul.f32 %v674, %v670
          %v691 = vmul.f32 %v675, %v670
          %v692 = vmul.f32 %v676, %v670
          %v693 = vmul.f32 %v677, %v670
          %v694 = vmul.f32 %v678, %v670
          %v695 = vmul.f32 %v679, %v670
          %v696 = vmul.f32 %v680, %v670
          %v697 = vmul.f32 %v681, %v670
          %v698 = vmul.f32 %v682, %v670
          %v699 = vmul.f32 %v683, %v670
          %v700 = vmul.f32 %v684, %v670
          %v701 = vmul.f32 %v685, %v670
          %v702 = vmul.f32 %v686, %v670
          %v703 = vmul.f32 %v687, %v670
          %704 = vmax.xlane.f32.xlu0 %v688
          %v705 = vpop.xlane.xlu0 %704
          %706 = vmax.xlane.f32.xlu0 %v689
          %v707 = vpop.xlane.xlu0 %706
          %708 = vmax.xlane.f32.xlu0 %v690
          %v709 = vpop.xlane.xlu0 %708
          %710 = vmax.xlane.f32.xlu0 %v691
          %v711 = vpop.xlane.xlu0 %710
          %712 = vmax.xlane.f32.xlu0 %v692
          %v713 = vpop.xlane.xlu0 %712
          %714 = vmax.xlane.f32.xlu0 %v693
          %v715 = vpop.xlane.xlu0 %714
          %716 = vmax.xlane.f32.xlu0 %v694
          %v717 = vpop.xlane.xlu0 %716
          %718 = vmax.xlane.f32.xlu0 %v695
          %v719 = vpop.xlane.xlu0 %718
          %720 = vmax.xlane.f32.xlu0 %v696
          %v721 = vpop.xlane.xlu0 %720
          %722 = vmax.xlane.f32.xlu0 %v697
          %v723 = vpop.xlane.xlu0 %722
          %724 = vmax.xlane.f32.xlu0 %v698
          %v725 = vpop.xlane.xlu0 %724
          %726 = vmax.xlane.f32.xlu0 %v699
          %v727 = vpop.xlane.xlu0 %726
          %728 = vmax.xlane.f32.xlu0 %v700
          %v729 = vpop.xlane.xlu0 %728
          %730 = vmax.xlane.f32.xlu0 %v701
          %v731 = vpop.xlane.xlu0 %730
          %732 = vmax.xlane.f32.xlu0 %v702
          %v733 = vpop.xlane.xlu0 %732
          %734 = vmax.xlane.f32.xlu0 %v703
          %v735 = vpop.xlane.xlu0 %734
          %v736 = vsub.f32 %v688, %v705
          %v737 = vsub.f32 %v689, %v707
          %v738 = vsub.f32 %v690, %v709
          %v739 = vsub.f32 %v691, %v711
          %v740 = vsub.f32 %v692, %v713
          %v741 = vsub.f32 %v693, %v715
          %v742 = vsub.f32 %v694, %v717
          %v743 = vsub.f32 %v695, %v719
          %v744 = vsub.f32 %v696, %v721
          %v745 = vsub.f32 %v697, %v723
          %v746 = vsub.f32 %v698, %v725
          %v747 = vsub.f32 %v699, %v727
          %v748 = vsub.f32 %v700, %v729
          %v749 = vsub.f32 %v701, %v731
          %v750 = vsub.f32 %v702, %v733
          %v751 = vsub.f32 %v703, %v735
          %v752 = vmul.f32 %v736, 1.442695
          %v753 = vpow.pop %v752
          %v754 = vmul.f32 %v737, 1.442695
          %v755 = vpow.pop %v754
          %v756 = vmul.f32 %v738, 1.442695
          %v757 = vpow.pop %v756
          %v758 = vmul.f32 %v739, 1.442695
          %v759 = vpow.pop %v758
          %v760 = vmul.f32 %v740, 1.442695
          %v761 = vpow.pop %v760
          %v762 = vmul.f32 %v741, 1.442695
          %v763 = vpow.pop %v762
          %v764 = vmul.f32 %v742, 1.442695
          %v765 = vpow.pop %v764
          %v766 = vmul.f32 %v743, 1.442695
          %v767 = vpow.pop %v766
          %v768 = vmul.f32 %v744, 1.442695
          %v769 = vpow.pop %v768
          %v770 = vmul.f32 %v745, 1.442695
          %v771 = vpow.pop %v770
          %v772 = vmul.f32 %v746, 1.442695
          %v773 = vpow.pop %v772
          %v774 = vmul.f32 %v747, 1.442695
          %v775 = vpow.pop %v774
          %v776 = vmul.f32 %v748, 1.442695
          %v777 = vpow.pop %v776
          %v778 = vmul.f32 %v749, 1.442695
          %v779 = vpow.pop %v778
          %v780 = vmul.f32 %v750, 1.442695
          %v781 = vpow.pop %v780
          %v782 = vmul.f32 %v751, 1.442695
          %v783 = vpow.pop %v782
          %784 = vadd.xlane.f32.xlu0 %v753
          %v785 = vpop.xlane.xlu0 %784
          %786 = vadd.xlane.f32.xlu0 %v755
          %v787 = vpop.xlane.xlu0 %786
          %788 = vadd.xlane.f32.xlu0 %v757
          %v789 = vpop.xlane.xlu0 %788
          %790 = vadd.xlane.f32.xlu0 %v759
          %v791 = vpop.xlane.xlu0 %790
          %792 = vadd.xlane.f32.xlu0 %v761
          %v793 = vpop.xlane.xlu0 %792
          %794 = vadd.xlane.f32.xlu0 %v763
          %v795 = vpop.xlane.xlu0 %794
          %796 = vadd.xlane.f32.xlu0 %v765
          %v797 = vpop.xlane.xlu0 %796
          %798 = vadd.xlane.f32.xlu0 %v767
          %v799 = vpop.xlane.xlu0 %798
          %800 = vadd.xlane.f32.xlu0 %v769
          %v801 = vpop.xlane.xlu0 %800
          %802 = vadd.xlane.f32.xlu0 %v771
          %v803 = vpop.xlane.xlu0 %802
          %804 = vadd.xlane.f32.xlu0 %v773
          %v805 = vpop.xlane.xlu0 %804
          %806 = vadd.xlane.f32.xlu0 %v775
          %v807 = vpop.xlane.xlu0 %806
          %808 = vadd.xlane.f32.xlu0 %v777
          %v809 = vpop.xlane.xlu0 %808
          %810 = vadd.xlane.f32.xlu0 %v779
          %v811 = vpop.xlane.xlu0 %810
          %812 = vadd.xlane.f32.xlu0 %v781
          %v813 = vpop.xlane.xlu0 %812
          %814 = vadd.xlane.f32.xlu0 %v783
          %v815 = vpop.xlane.xlu0 %814
          %v816 = vlog2.pop %v785
          %v817 = vmul.f32 %v816, 0.6931472
          %v818 = vlog2.pop %v787
          %v819 = vmul.f32 %v818, 0.6931472
          %v820 = vlog2.pop %v789
          %v821 = vmul.f32 %v820, 0.6931472
          %v822 = vlog2.pop %v791
          %v823 = vmul.f32 %v822, 0.6931472
          %v824 = vlog2.pop %v793
          %v825 = vmul.f32 %v824, 0.6931472
          %v826 = vlog2.pop %v795
          %v827 = vmul.f32 %v826, 0.6931472
          %v828 = vlog2.pop %v797
          %v829 = vmul.f32 %v828, 0.6931472
          %v830 = vlog2.pop %v799
          %v831 = vmul.f32 %v830, 0.6931472
          %v832 = vlog2.pop %v801
          %v833 = vmul.f32 %v832, 0.6931472
          %v834 = vlog2.pop %v803
          %v835 = vmul.f32 %v834, 0.6931472
          %v836 = vlog2.pop %v805
          %v837 = vmul.f32 %v836, 0.6931472
          %v838 = vlog2.pop %v807
          %v839 = vmul.f32 %v838, 0.6931472
          %v840 = vlog2.pop %v809
          %v841 = vmul.f32 %v840, 0.6931472
          %v842 = vlog2.pop %v811
          %v843 = vmul.f32 %v842, 0.6931472
          %v844 = vlog2.pop %v813
          %v845 = vmul.f32 %v844, 0.6931472
          %v846 = vlog2.pop %v815
          %v847 = vmul.f32 %v846, 0.6931472
          %v848 = vadd.f32 %v705, %v817
          %v849 = vadd.f32 %v707, %v819
          %v850 = vadd.f32 %v709, %v821
          %v851 = vadd.f32 %v711, %v823
          %v852 = vadd.f32 %v713, %v825
          %v853 = vadd.f32 %v715, %v827
          %v854 = vadd.f32 %v717, %v829
          %v855 = vadd.f32 %v719, %v831
          %v856 = vadd.f32 %v721, %v833
          %v857 = vadd.f32 %v723, %v835
          %v858 = vadd.f32 %v725, %v837
          %v859 = vadd.f32 %v727, %v839
          %v860 = vadd.f32 %v729, %v841
          %v861 = vadd.f32 %v731, %v843
          %v862 = vadd.f32 %v733, %v845
          %v863 = vadd.f32 %v735, %v847
          %v864 = vadd.f32 %v848, -4.8520303
          %v865 = vadd.f32 %v849, -4.8520303
          %v866 = vadd.f32 %v850, -4.8520303
          %v867 = vadd.f32 %v851, -4.8520303
          %v868 = vadd.f32 %v852, -4.8520303
          %v869 = vadd.f32 %v853, -4.8520303
          %v870 = vadd.f32 %v854, -4.8520303
          %v871 = vadd.f32 %v855, -4.8520303
          %v872 = vadd.f32 %v856, -4.8520303
          %v873 = vadd.f32 %v857, -4.8520303
          %v874 = vadd.f32 %v858, -4.8520303
          %v875 = vadd.f32 %v859, -4.8520303
          %v876 = vadd.f32 %v860, -4.8520303
          %v877 = vadd.f32 %v861, -4.8520303
          %v878 = vadd.f32 %v862, -4.8520303
          %v879 = vadd.f32 %v863, -4.8520303
          %v880 = vmul.f32 %v671, %v864
          %v881 = vmul.f32 %v671, %v865
          %v882 = vmul.f32 %v671, %v866
          %v883 = vmul.f32 %v671, %v867
          %v884 = vmul.f32 %v671, %v868
          %v885 = vmul.f32 %v671, %v869
          %v886 = vmul.f32 %v671, %v870
          %v887 = vmul.f32 %v671, %v871
          %v888 = vmul.f32 %v671, %v872
          %v889 = vmul.f32 %v671, %v873
          %v890 = vmul.f32 %v671, %v874
          %v891 = vmul.f32 %v671, %v875
          %v892 = vmul.f32 %v671, %v876
          %v893 = vmul.f32 %v671, %v877
          %v894 = vmul.f32 %v671, %v878
          %v895 = vmul.f32 %v671, %v879
          %v896 = vsel %vm574, %v880, -1e+30
          %v897 = vsel %vm575, %v881, -1e+30
          %v898 = vsel %vm576, %v882, -1e+30
          %v899 = vsel %vm577, %v883, -1e+30
          %v900 = vsel %vm578, %v884, -1e+30
          %v901 = vsel %vm579, %v885, -1e+30
          %v902 = vsel %vm580, %v886, -1e+30
          %v903 = vsel %vm581, %v887, -1e+30
          %v904 = vsel %vm582, %v888, -1e+30
          %v905 = vsel %vm583, %v889, -1e+30
          %v906 = vsel %vm584, %v890, -1e+30
          %v907 = vsel %vm585, %v891, -1e+30
          %v908 = vsel %vm586, %v892, -1e+30
          %v909 = vsel %vm587, %v893, -1e+30
          %v910 = vsel %vm588, %v894, -1e+30
          %v911 = vsel %vm589, %v895, -1e+30
          %v912 = vsub.f32 %v896, %v434
          %v913 = vsub.f32 %v897, %v435
          %v914 = vsub.f32 %v898, %v436
          %v915 = vsub.f32 %v899, %v437
          %v916 = vsub.f32 %v900, %v438
          %v917 = vsub.f32 %v901, %v439
          %v918 = vsub.f32 %v902, %v440
          %v919 = vsub.f32 %v903, %v441
          %v920 = vsub.f32 %v904, %v442
          %v921 = vsub.f32 %v905, %v443
          %v922 = vsub.f32 %v906, %v444
          %v923 = vsub.f32 %v907, %v445
          %v924 = vsub.f32 %v908, %v446
          %v925 = vsub.f32 %v909, %v447
          %v926 = vsub.f32 %v910, %v448
          %v927 = vsub.f32 %v911, %v449
          %v928 = vmul.f32 %v912, %v670
          %v929 = vmul.f32 %v913, %v670
          %v930 = vmul.f32 %v914, %v670
          %v931 = vmul.f32 %v915, %v670
          %v932 = vmul.f32 %v916, %v670
          %v933 = vmul.f32 %v917, %v670
          %v934 = vmul.f32 %v918, %v670
          %v935 = vmul.f32 %v919, %v670
          %v936 = vmul.f32 %v920, %v670
          %v937 = vmul.f32 %v921, %v670
          %v938 = vmul.f32 %v922, %v670
          %v939 = vmul.f32 %v923, %v670
          %v940 = vmul.f32 %v924, %v670
          %v941 = vmul.f32 %v925, %v670
          %v942 = vmul.f32 %v926, %v670
          %v943 = vmul.f32 %v927, %v670
          %v944 = vmax.f32 %v928, %v932
          %v945 = vmax.f32 %v929, %v933
          %v946 = vmax.f32 %v930, %v934
          %v947 = vmax.f32 %v931, %v935
          %v948 = vmax.f32 %v944, %v936
          %v949 = vmax.f32 %v945, %v937
          %v950 = vmax.f32 %v946, %v938
          %v951 = vmax.f32 %v947, %v939
          %v952 = vmax.f32 %v948, %v940
          %v953 = vmax.f32 %v949, %v941
          %v954 = vmax.f32 %v950, %v942
          %v955 = vmax.f32 %v951, %v943
          %v956 = vmax.f32 %v952, %v953
          %v957 = vmax.f32 %v954, %v955
          %v958 = vmax.f32 %v956, %v957
          %v959 = vrot.slane %v958, 4
          %v960 = vmax.f32 %v958, %v959
          %v961 = vrot.slane %v960, 2
          %v962 = vmax.f32 %v960, %v961
          %v963 = vrot.slane %v962, 1
          %v964 = vmax.f32 %v962, %v963
          %v965 = vsub.f32 %v928, %v964
          %v966 = vsub.f32 %v929, %v964
          %v967 = vsub.f32 %v930, %v964
          %v968 = vsub.f32 %v931, %v964
          %v969 = vsub.f32 %v932, %v964
          %v970 = vsub.f32 %v933, %v964
          %v971 = vsub.f32 %v934, %v964
          %v972 = vsub.f32 %v935, %v964
          %v973 = vsub.f32 %v936, %v964
          %v974 = vsub.f32 %v937, %v964
          %v975 = vsub.f32 %v938, %v964
          %v976 = vsub.f32 %v939, %v964
          %v977 = vsub.f32 %v940, %v964
          %v978 = vsub.f32 %v941, %v964
          %v979 = vsub.f32 %v942, %v964
          %v980 = vsub.f32 %v943, %v964
          %v981 = vmul.f32 %v965, 1.442695
          %v982 = vpow.pop %v981
          %v983 = vmul.f32 %v966, 1.442695
          %v984 = vpow.pop %v983
          %v985 = vmul.f32 %v967, 1.442695
          %v986 = vpow.pop %v985
          %v987 = vmul.f32 %v968, 1.442695
          %v988 = vpow.pop %v987
          %v989 = vmul.f32 %v969, 1.442695
          %v990 = vpow.pop %v989
          %v991 = vmul.f32 %v970, 1.442695
          %v992 = vpow.pop %v991
          %v993 = vmul.f32 %v971, 1.442695
          %v994 = vpow.pop %v993
          %v995 = vmul.f32 %v972, 1.442695
          %v996 = vpow.pop %v995
          %v997 = vmul.f32 %v973, 1.442695
          %v998 = vpow.pop %v997
          %v999 = vmul.f32 %v974, 1.442695
          %v1000 = vpow.pop %v999
          %v1001 = vmul.f32 %v975, 1.442695
          %v1002 = vpow.pop %v1001
          %v1003 = vmul.f32 %v976, 1.442695
          %v1004 = vpow.pop %v1003
          %v1005 = vmul.f32 %v977, 1.442695
          %v1006 = vpow.pop %v1005
          %v1007 = vmul.f32 %v978, 1.442695
          %v1008 = vpow.pop %v1007
          %v1009 = vmul.f32 %v979, 1.442695
          %v1010 = vpow.pop %v1009
          %v1011 = vmul.f32 %v980, 1.442695
          %v1012 = vpow.pop %v1011
          %v1013 = vadd.f32 %v982, %v984
          %v1014 = vadd.f32 %v1013, %v986
          %v1015 = vadd.f32 %v1014, %v988
          %v1016 = vadd.f32 %v1015, %v990
          %v1017 = vadd.f32 %v1016, %v992
          %v1018 = vadd.f32 %v1017, %v994
          %v1019 = vadd.f32 %v1018, %v996
          %v1020 = vadd.f32 %v1019, %v998
          %v1021 = vadd.f32 %v1020, %v1000
          %v1022 = vadd.f32 %v1021, %v1002
          %v1023 = vadd.f32 %v1022, %v1004
          %v1024 = vadd.f32 %v1023, %v1006
          %v1025 = vadd.f32 %v1024, %v1008
          %v1026 = vadd.f32 %v1025, %v1010
          %v1027 = vadd.f32 %v1026, %v1012
          %v1028 = vrot.slane %v1027, 4
          %v1029 = vadd.f32 %v1027, %v1028
          %v1030 = vrot.slane %v1029, 2
          %v1031 = vadd.f32 %v1029, %v1030
          %v1032 = vrot.slane %v1031, 1
          %v1033 = vadd.f32 %v1031, %v1032
          %v1034 = vlog2.pop %v1033
          %v1035 = vmul.f32 %v1034, 0.6931472
          %v1036 = vadd.f32 %v964, %v1035
          %v1037 = vadd.f32 %v1036, -4.8520303
          %v1038 = vmul.f32 %v671, %v1037
          %v1039 = vsel %vm573, %v1038, -1e+30
          %v1040 = vmul.f32 %v668, 0.25
          %v1041 = vmax.f32 %v1040, 0.0001
        $region37: #{pruning_loss_forward.2} parent=31 // loop_footer
          %s650 = sadd.s32 1, %s646
        $region38: #{pruning_loss_forward.2} parent=31 // loop_footer_branch
          %645 = sbr.rel target = $region34
        $region39: #{pruning_loss_forward.2} parent=31 // loop_exit
          _
        loop: start=0, step=1, limit=22
        $region40: #{pruning_loss_forward.2} parent=31 // loop_pre_header
          _
        $region41: #{pruning_loss_forward.2} parent=31 // loop_header
          %s1043 = sphi 0, %s1047
          %p1044 = scmp.ge.s32.totalorder %s1043, 22
          %v1048 = vphi %v651, %v1274
          %v1049 = vphi %v652, %v1275
          %v1050 = vphi %v653, %v1276
          %v1051 = vphi %v654, %v1277
          %v1052 = vphi %v655, %v1278
          %v1053 = vphi %v656, %v1279
          %v1054 = vphi %v657, %v1280
          %v1055 = vphi %v658, %v1281
          %v1056 = vphi %v659, %v1282
          %v1057 = vphi %v660, %v1283
          %v1058 = vphi %v661, %v1284
          %v1059 = vphi %v662, %v1285
          %v1060 = vphi %v663, %v1286
          %v1061 = vphi %v664, %v1287
          %v1062 = vphi %v665, %v1288
          %v1063 = vphi %v666, %v1289
          %v1064 = vphi %v667, %v1417
        $region42: #{pruning_loss_forward.2} parent=31 // loop_header_branch
          %1046 = sbr.rel (%p1044) target = $region46
        $region43: #{pruning_loss_forward.2} parent=31 // loop_body
          %v1065 = vmul.f32 %v1064, 10000.0
          %v1066 = vsub.f32 %v1065, %v450
          %v1067 = vsub.f32 %v1065, %v451
          %v1068 = vsub.f32 %v1065, %v452
          %v1069 = vsub.f32 %v1065, %v453
          %v1070 = vsub.f32 %v1065, %v454
          %v1071 = vsub.f32 %v1065, %v455
          %v1072 = vsub.f32 %v1065, %v456
          %v1073 = vsub.f32 %v1065, %v457
          %v1074 = vsub.f32 %v1065, %v458
          %v1075 = vsub.f32 %v1065, %v459
          %v1076 = vsub.f32 %v1065, %v460
          %v1077 = vsub.f32 %v1065, %v461
          %v1078 = vsub.f32 %v1065, %v462
          %v1079 = vsub.f32 %v1065, %v463
          %v1080 = vsub.f32 %v1065, %v464
          %v1081 = vsub.f32 %v1065, %v465
          %1082 = vmax.xlane.f32.xlu0 %v1066
          %v1083 = vpop.xlane.xlu0 %1082
          %1084 = vmax.xlane.f32.xlu0 %v1067
          %v1085 = vpop.xlane.xlu0 %1084
          %1086 = vmax.xlane.f32.xlu0 %v1068
          %v1087 = vpop.xlane.xlu0 %1086
          %1088 = vmax.xlane.f32.xlu0 %v1069
          %v1089 = vpop.xlane.xlu0 %1088
          %1090 = vmax.xlane.f32.xlu0 %v1070
          %v1091 = vpop.xlane.xlu0 %1090
          %1092 = vmax.xlane.f32.xlu0 %v1071
          %v1093 = vpop.xlane.xlu0 %1092
          %1094 = vmax.xlane.f32.xlu0 %v1072
          %v1095 = vpop.xlane.xlu0 %1094
          %1096 = vmax.xlane.f32.xlu0 %v1073
          %v1097 = vpop.xlane.xlu0 %1096
          %1098 = vmax.xlane.f32.xlu0 %v1074
          %v1099 = vpop.xlane.xlu0 %1098
          %1100 = vmax.xlane.f32.xlu0 %v1075
          %v1101 = vpop.xlane.xlu0 %1100
          %1102 = vmax.xlane.f32.xlu0 %v1076
          %v1103 = vpop.xlane.xlu0 %1102
          %1104 = vmax.xlane.f32.xlu0 %v1077
          %v1105 = vpop.xlane.xlu0 %1104
          %1106 = vmax.xlane.f32.xlu0 %v1078
          %v1107 = vpop.xlane.xlu0 %1106
          %1108 = vmax.xlane.f32.xlu0 %v1079
          %v1109 = vpop.xlane.xlu0 %1108
          %1110 = vmax.xlane.f32.xlu0 %v1080
          %v1111 = vpop.xlane.xlu0 %1110
          %1112 = vmax.xlane.f32.xlu0 %v1081
          %v1113 = vpop.xlane.xlu0 %1112
          %v1114 = vsub.f32 %v1066, %v1083
          %v1115 = vsub.f32 %v1067, %v1085
          %v1116 = vsub.f32 %v1068, %v1087
          %v1117 = vsub.f32 %v1069, %v1089
          %v1118 = vsub.f32 %v1070, %v1091
          %v1119 = vsub.f32 %v1071, %v1093
          %v1120 = vsub.f32 %v1072, %v1095
          %v1121 = vsub.f32 %v1073, %v1097
          %v1122 = vsub.f32 %v1074, %v1099
          %v1123 = vsub.f32 %v1075, %v1101
          %v1124 = vsub.f32 %v1076, %v1103
          %v1125 = vsub.f32 %v1077, %v1105
          %v1126 = vsub.f32 %v1078, %v1107
          %v1127 = vsub.f32 %v1079, %v1109
          %v1128 = vsub.f32 %v1080, %v1111
          %v1129 = vsub.f32 %v1081, %v1113
          %v1130 = vmul.f32 %v1114, 1.442695
          %v1131 = vpow.pop %v1130
          %v1132 = vmul.f32 %v1115, 1.442695
          %v1133 = vpow.pop %v1132
          %v1134 = vmul.f32 %v1116, 1.442695
          %v1135 = vpow.pop %v1134
          %v1136 = vmul.f32 %v1117, 1.442695
          %v1137 = vpow.pop %v1136
          %v1138 = vmul.f32 %v1118, 1.442695
          %v1139 = vpow.pop %v1138
          %v1140 = vmul.f32 %v1119, 1.442695
          %v1141 = vpow.pop %v1140
          %v1142 = vmul.f32 %v1120, 1.442695
          %v1143 = vpow.pop %v1142
          %v1144 = vmul.f32 %v1121, 1.442695
          %v1145 = vpow.pop %v1144
          %v1146 = vmul.f32 %v1122, 1.442695
          %v1147 = vpow.pop %v1146
          %v1148 = vmul.f32 %v1123, 1.442695
          %v1149 = vpow.pop %v1148
          %v1150 = vmul.f32 %v1124, 1.442695
          %v1151 = vpow.pop %v1150
          %v1152 = vmul.f32 %v1125, 1.442695
          %v1153 = vpow.pop %v1152
          %v1154 = vmul.f32 %v1126, 1.442695
          %v1155 = vpow.pop %v1154
          %v1156 = vmul.f32 %v1127, 1.442695
          %v1157 = vpow.pop %v1156
          %v1158 = vmul.f32 %v1128, 1.442695
          %v1159 = vpow.pop %v1158
          %v1160 = vmul.f32 %v1129, 1.442695
          %v1161 = vpow.pop %v1160
          %1162 = vadd.xlane.f32.xlu0 %v1131
          %v1163 = vpop.xlane.xlu0 %1162
          %1164 = vadd.xlane.f32.xlu0 %v1133
          %v1165 = vpop.xlane.xlu0 %1164
          %1166 = vadd.xlane.f32.xlu0 %v1135
          %v1167 = vpop.xlane.xlu0 %1166
          %1168 = vadd.xlane.f32.xlu0 %v1137
          %v1169 = vpop.xlane.xlu0 %1168
          %1170 = vadd.xlane.f32.xlu0 %v1139
          %v1171 = vpop.xlane.xlu0 %1170
          %1172 = vadd.xlane.f32.xlu0 %v1141
          %v1173 = vpop.xlane.xlu0 %1172
          %1174 = vadd.xlane.f32.xlu0 %v1143
          %v1175 = vpop.xlane.xlu0 %1174
          %1176 = vadd.xlane.f32.xlu0 %v1145
          %v1177 = vpop.xlane.xlu0 %1176
          %1178 = vadd.xlane.f32.xlu0 %v1147
          %v1179 = vpop.xlane.xlu0 %1178
          %1180 = vadd.xlane.f32.xlu0 %v1149
          %v1181 = vpop.xlane.xlu0 %1180
          %1182 = vadd.xlane.f32.xlu0 %v1151
          %v1183 = vpop.xlane.xlu0 %1182
          %1184 = vadd.xlane.f32.xlu0 %v1153
          %v1185 = vpop.xlane.xlu0 %1184
          %1186 = vadd.xlane.f32.xlu0 %v1155
          %v1187 = vpop.xlane.xlu0 %1186
          %1188 = vadd.xlane.f32.xlu0 %v1157
          %v1189 = vpop.xlane.xlu0 %1188
          %1190 = vadd.xlane.f32.xlu0 %v1159
          %v1191 = vpop.xlane.xlu0 %1190
          %1192 = vadd.xlane.f32.xlu0 %v1161
          %v1193 = vpop.xlane.xlu0 %1192
          %v1194 = vlog2.pop %v1163
          %v1195 = vmul.f32 %v1194, 0.6931472
          %v1196 = vlog2.pop %v1165
          %v1197 = vmul.f32 %v1196, 0.6931472
          %v1198 = vlog2.pop %v1167
          %v1199 = vmul.f32 %v1198, 0.6931472
          %v1200 = vlog2.pop %v1169
          %v1201 = vmul.f32 %v1200, 0.6931472
          %v1202 = vlog2.pop %v1171
          %v1203 = vmul.f32 %v1202, 0.6931472
          %v1204 = vlog2.pop %v1173
          %v1205 = vmul.f32 %v1204, 0.6931472
          %v1206 = vlog2.pop %v1175
          %v1207 = vmul.f32 %v1206, 0.6931472
          %v1208 = vlog2.pop %v1177
          %v1209 = vmul.f32 %v1208, 0.6931472
          %v1210 = vlog2.pop %v1179
          %v1211 = vmul.f32 %v1210, 0.6931472
          %v1212 = vlog2.pop %v1181
          %v1213 = vmul.f32 %v1212, 0.6931472
          %v1214 = vlog2.pop %v1183
          %v1215 = vmul.f32 %v1214, 0.6931472
          %v1216 = vlog2.pop %v1185
          %v1217 = vmul.f32 %v1216, 0.6931472
          %v1218 = vlog2.pop %v1187
          %v1219 = vmul.f32 %v1218, 0.6931472
          %v1220 = vlog2.pop %v1189
          %v1221 = vmul.f32 %v1220, 0.6931472
          %v1222 = vlog2.pop %v1191
          %v1223 = vmul.f32 %v1222, 0.6931472
          %v1224 = vlog2.pop %v1193
          %v1225 = vmul.f32 %v1224, 0.6931472
          %v1226 = vadd.f32 %v1083, %v1195
          %v1227 = vadd.f32 %v1085, %v1197
          %v1228 = vadd.f32 %v1087, %v1199
          %v1229 = vadd.f32 %v1089, %v1201
          %v1230 = vadd.f32 %v1091, %v1203
          %v1231 = vadd.f32 %v1093, %v1205
          %v1232 = vadd.f32 %v1095, %v1207
          %v1233 = vadd.f32 %v1097, %v1209
          %v1234 = vadd.f32 %v1099, %v1211
          %v1235 = vadd.f32 %v1101, %v1213
          %v1236 = vadd.f32 %v1103, %v1215
          %v1237 = vadd.f32 %v1105, %v1217
          %v1238 = vadd.f32 %v1107, %v1219
          %v1239 = vadd.f32 %v1109, %v1221
          %v1240 = vadd.f32 %v1111, %v1223
          %v1241 = vadd.f32 %v1113, %v1225
          %v1242 = vadd.f32 %v1226, -4.8520303
          %v1243 = vadd.f32 %v1227, -4.8520303
          %v1244 = vadd.f32 %v1228, -4.8520303
          %v1245 = vadd.f32 %v1229, -4.8520303
          %v1246 = vadd.f32 %v1230, -4.8520303
          %v1247 = vadd.f32 %v1231, -4.8520303
          %v1248 = vadd.f32 %v1232, -4.8520303
          %v1249 = vadd.f32 %v1233, -4.8520303
          %v1250 = vadd.f32 %v1234, -4.8520303
          %v1251 = vadd.f32 %v1235, -4.8520303
          %v1252 = vadd.f32 %v1236, -4.8520303
          %v1253 = vadd.f32 %v1237, -4.8520303
          %v1254 = vadd.f32 %v1238, -4.8520303
          %v1255 = vadd.f32 %v1239, -4.8520303
          %v1256 = vadd.f32 %v1240, -4.8520303
          %v1257 = vadd.f32 %v1241, -4.8520303
          %v1258 = vmul.f32 %v1242, -0.0001
          %v1259 = vmul.f32 %v1243, -0.0001
          %v1260 = vmul.f32 %v1244, -0.0001
          %v1261 = vmul.f32 %v1245, -0.0001
          %v1262 = vmul.f32 %v1246, -0.0001
          %v1263 = vmul.f32 %v1247, -0.0001
          %v1264 = vmul.f32 %v1248, -0.0001
          %v1265 = vmul.f32 %v1249, -0.0001
          %v1266 = vmul.f32 %v1250, -0.0001
          %v1267 = vmul.f32 %v1251, -0.0001
          %v1268 = vmul.f32 %v1252, -0.0001
          %v1269 = vmul.f32 %v1253, -0.0001
          %v1270 = vmul.f32 %v1254, -0.0001
          %v1271 = vmul.f32 %v1255, -0.0001
          %v1272 = vmul.f32 %v1256, -0.0001
          %v1273 = vmul.f32 %v1257, -0.0001
          %v1274 = vsel %vm574, %v1258, -1e+30
          %v1275 = vsel %vm575, %v1259, -1e+30
          %v1276 = vsel %vm576, %v1260, -1e+30
          %v1277 = vsel %vm577, %v1261, -1e+30
          %v1278 = vsel %vm578, %v1262, -1e+30
          %v1279 = vsel %vm579, %v1263, -1e+30
          %v1280 = vsel %vm580, %v1264, -1e+30
          %v1281 = vsel %vm581, %v1265, -1e+30
          %v1282 = vsel %vm582, %v1266, -1e+30
          %v1283 = vsel %vm583, %v1267, -1e+30
          %v1284 = vsel %vm584, %v1268, -1e+30
          %v1285 = vsel %vm585, %v1269, -1e+30
          %v1286 = vsel %vm586, %v1270, -1e+30
          %v1287 = vsel %vm587, %v1271, -1e+30
          %v1288 = vsel %vm588, %v1272, -1e+30
          %v1289 = vsel %vm589, %v1273, -1e+30
          %v1290 = vmul.f32 %v1274, 10000.0
          %v1291 = vmul.f32 %v1275, 10000.0
          %v1292 = vmul.f32 %v1276, 10000.0
          %v1293 = vmul.f32 %v1277, 10000.0
          %v1294 = vmul.f32 %v1278, 10000.0
          %v1295 = vmul.f32 %v1279, 10000.0
          %v1296 = vmul.f32 %v1280, 10000.0
          %v1297 = vmul.f32 %v1281, 10000.0
          %v1298 = vmul.f32 %v1282, 10000.0
          %v1299 = vmul.f32 %v1283, 10000.0
          %v1300 = vmul.f32 %v1284, 10000.0
          %v1301 = vmul.f32 %v1285, 10000.0
          %v1302 = vmul.f32 %v1286, 10000.0
          %v1303 = vmul.f32 %v1287, 10000.0
          %v1304 = vmul.f32 %v1288, 10000.0
          %v1305 = vmul.f32 %v1289, 10000.0
          %v1306 = vsub.f32 %v1290, %v450
          %v1307 = vsub.f32 %v1291, %v451
          %v1308 = vsub.f32 %v1292, %v452
          %v1309 = vsub.f32 %v1293, %v453
          %v1310 = vsub.f32 %v1294, %v454
          %v1311 = vsub.f32 %v1295, %v455
          %v1312 = vsub.f32 %v1296, %v456
          %v1313 = vsub.f32 %v1297, %v457
          %v1314 = vsub.f32 %v1298, %v458
          %v1315 = vsub.f32 %v1299, %v459
          %v1316 = vsub.f32 %v1300, %v460
          %v1317 = vsub.f32 %v1301, %v461
          %v1318 = vsub.f32 %v1302, %v462
          %v1319 = vsub.f32 %v1303, %v463
          %v1320 = vsub.f32 %v1304, %v464
          %v1321 = vsub.f32 %v1305, %v465
          %v1322 = vmax.f32 %v1306, %v1310
          %v1323 = vmax.f32 %v1307, %v1311
          %v1324 = vmax.f32 %v1308, %v1312
          %v1325 = vmax.f32 %v1309, %v1313
          %v1326 = vmax.f32 %v1322, %v1314
          %v1327 = vmax.f32 %v1323, %v1315
          %v1328 = vmax.f32 %v1324, %v1316
          %v1329 = vmax.f32 %v1325, %v1317
          %v1330 = vmax.f32 %v1326, %v1318
          %v1331 = vmax.f32 %v1327, %v1319
          %v1332 = vmax.f32 %v1328, %v1320
          %v1333 = vmax.f32 %v1329, %v1321
          %v1334 = vmax.f32 %v1330, %v1331
          %v1335 = vmax.f32 %v1332, %v1333
          %v1336 = vmax.f32 %v1334, %v1335
          %v1337 = vrot.slane %v1336, 4
          %v1338 = vmax.f32 %v1336, %v1337
          %v1339 = vrot.slane %v1338, 2
          %v1340 = vmax.f32 %v1338, %v1339
          %v1341 = vrot.slane %v1340, 1
          %v1342 = vmax.f32 %v1340, %v1341
          %v1343 = vsub.f32 %v1306, %v1342
          %v1344 = vsub.f32 %v1307, %v1342
          %v1345 = vsub.f32 %v1308, %v1342
          %v1346 = vsub.f32 %v1309, %v1342
          %v1347 = vsub.f32 %v1310, %v1342
          %v1348 = vsub.f32 %v1311, %v1342
          %v1349 = vsub.f32 %v1312, %v1342
          %v1350 = vsub.f32 %v1313, %v1342
          %v1351 = vsub.f32 %v1314, %v1342
          %v1352 = vsub.f32 %v1315, %v1342
          %v1353 = vsub.f32 %v1316, %v1342
          %v1354 = vsub.f32 %v1317, %v1342
          %v1355 = vsub.f32 %v1318, %v1342
          %v1356 = vsub.f32 %v1319, %v1342
          %v1357 = vsub.f32 %v1320, %v1342
          %v1358 = vsub.f32 %v1321, %v1342
          %v1359 = vmul.f32 %v1343, 1.442695
          %v1360 = vpow.pop %v1359
          %v1361 = vmul.f32 %v1344, 1.442695
          %v1362 = vpow.pop %v1361
          %v1363 = vmul.f32 %v1345, 1.442695
          %v1364 = vpow.pop %v1363
          %v1365 = vmul.f32 %v1346, 1.442695
          %v1366 = vpow.pop %v1365
          %v1367 = vmul.f32 %v1347, 1.442695
          %v1368 = vpow.pop %v1367
          %v1369 = vmul.f32 %v1348, 1.442695
          %v1370 = vpow.pop %v1369
          %v1371 = vmul.f32 %v1349, 1.442695
          %v1372 = vpow.pop %v1371
          %v1373 = vmul.f32 %v1350, 1.442695
          %v1374 = vpow.pop %v1373
          %v1375 = vmul.f32 %v1351, 1.442695
          %v1376 = vpow.pop %v1375
          %v1377 = vmul.f32 %v1352, 1.442695
          %v1378 = vpow.pop %v1377
          %v1379 = vmul.f32 %v1353, 1.442695
          %v1380 = vpow.pop %v1379
          %v1381 = vmul.f32 %v1354, 1.442695
          %v1382 = vpow.pop %v1381
          %v1383 = vmul.f32 %v1355, 1.442695
          %v1384 = vpow.pop %v1383
          %v1385 = vmul.f32 %v1356, 1.442695
          %v1386 = vpow.pop %v1385
          %v1387 = vmul.f32 %v1357, 1.442695
          %v1388 = vpow.pop %v1387
          %v1389 = vmul.f32 %v1358, 1.442695
          %v1390 = vpow.pop %v1389
          %v1391 = vadd.f32 %v1360, %v1362
          %v1392 = vadd.f32 %v1391, %v1364
          %v1393 = vadd.f32 %v1392, %v1366
          %v1394 = vadd.f32 %v1393, %v1368
          %v1395 = vadd.f32 %v1394, %v1370
          %v1396 = vadd.f32 %v1395, %v1372
          %v1397 = vadd.f32 %v1396, %v1374
          %v1398 = vadd.f32 %v1397, %v1376
          %v1399 = vadd.f32 %v1398, %v1378
          %v1400 = vadd.f32 %v1399, %v1380
          %v1401 = vadd.f32 %v1400, %v1382
          %v1402 = vadd.f32 %v1401, %v1384
          %v1403 = vadd.f32 %v1402, %v1386
          %v1404 = vadd.f32 %v1403, %v1388
          %v1405 = vadd.f32 %v1404, %v1390
          %v1406 = vrot.slane %v1405, 4
          %v1407 = vadd.f32 %v1405, %v1406
          %v1408 = vrot.slane %v1407, 2
          %v1409 = vadd.f32 %v1407, %v1408
          %v1410 = vrot.slane %v1409, 1
          %v1411 = vadd.f32 %v1409, %v1410
          %v1412 = vlog2.pop %v1411
          %v1413 = vmul.f32 %v1412, 0.6931472
          %v1414 = vadd.f32 %v1342, %v1413
          %v1415 = vadd.f32 %v1414, -4.8520303
          %v1416 = vmul.f32 %v1415, -0.0001
          %v1417 = vsel %vm573, %v1416, -1e+30
        $region44: #{pruning_loss_forward.2} parent=31 // loop_footer
          %s1047 = sadd.s32 1, %s1043
        $region45: #{pruning_loss_forward.2} parent=31 // loop_footer_branch
          %1042 = sbr.rel target = $region41
        $region46: #{pruning_loss_forward.2} parent=31 // loop_exit
          _
        %v1418 = vmul.f32 %v1048, %v608
        %v1419 = vmul.f32 %v1049, %v609
        %v1420 = vmul.f32 %v1050, %v610
        %v1421 = vmul.f32 %v1051, %v611
        %v1422 = vmul.f32 %v1052, %v612
        %v1423 = vmul.f32 %v1053, %v613
        %v1424 = vmul.f32 %v1054, %v614
        %v1425 = vmul.f32 %v1055, %v615
        %v1426 = vmul.f32 %v1056, %v616
        %v1427 = vmul.f32 %v1057, %v617
        %v1428 = vmul.f32 %v1058, %v618
        %v1429 = vmul.f32 %v1059, %v619
        %v1430 = vmul.f32 %v1060, %v620
        %v1431 = vmul.f32 %v1061, %v621
        %v1432 = vmul.f32 %v1062, %v622
        %v1433 = vmul.f32 %v1063, %v623
        %v1434 = vadd.f32 %v1418, %v1419
        %v1435 = vadd.f32 %v1434, %v1420
        %v1436 = vadd.f32 %v1435, %v1421
        %v1437 = vadd.f32 %v1436, %v1422
        %v1438 = vadd.f32 %v1437, %v1423
        %v1439 = vadd.f32 %v1438, %v1424
        %v1440 = vadd.f32 %v1439, %v1425
        %v1441 = vadd.f32 %v1440, %v1426
        %v1442 = vadd.f32 %v1441, %v1427
        %v1443 = vadd.f32 %v1442, %v1428
        %v1444 = vadd.f32 %v1443, %v1429
        %v1445 = vadd.f32 %v1444, %v1430
        %v1446 = vadd.f32 %v1445, %v1431
        %v1447 = vadd.f32 %v1446, %v1432
        %v1448 = vadd.f32 %v1447, %v1433
        %v1449 = vrot.slane %v1448, 4
        %v1450 = vadd.f32 %v1448, %v1449
        %v1451 = vrot.slane %v1450, 2
        %v1452 = vadd.f32 %v1450, %v1451
        %v1453 = vrot.slane %v1452, 1
        %v1454 = vadd.f32 %v1452, %v1453
        %v1455 = vmul.f32 %v1454, 0.0078125
        %v1456 = vmul.f32 %v1064, %v591
        %1457 = vadd.xlane.f32.xlu0 %v1456
        %v1458 = vpop.xlane.xlu0 %1457
        %v1459 = vmul.f32 %v1458, 0.0078125
        %v1460 = vadd.f32 %v1455, %v1459
        %vm1461 = vcmask 0
        %1462 = vst.msk [vmem:[%s159] sm:$0x1] %vm1461, %v1460
      $region32: #{pruning_loss_forward.2} parent=27 // pred_fallthru
        _
      %p1463 = scmp.ne.s32.totalorder %s13, 2
      // Predicated region
      $region47: #{pruning_loss_forward.2} parent=27 // pred_check
        %p1464 = pneg %p1463
      $region48: #{pruning_loss_forward.2} parent=27 // pred_check_branch
        %1466 = sbr.rel (%p1464) target = $region50
      $region49: #{pruning_loss_forward.2} parent=27 // pred_region
        %vm1467 = vcmp.eq.s32.totalorder %v541, %v538
        %vm1468 = vcmp.eq.s32.totalorder %v542, %v538
        %vm1469 = vcmp.eq.s32.totalorder %v543, %v538
        %vm1470 = vcmp.eq.s32.totalorder %v544, %v538
        %vm1471 = vcmp.eq.s32.totalorder %v545, %v538
        %vm1472 = vcmp.eq.s32.totalorder %v546, %v538
        %vm1473 = vcmp.eq.s32.totalorder %v547, %v538
        %vm1474 = vcmp.eq.s32.totalorder %v548, %v538
        %vm1475 = vcmp.eq.s32.totalorder %v549, %v538
        %vm1476 = vcmp.eq.s32.totalorder %v550, %v538
        %vm1477 = vcmp.eq.s32.totalorder %v551, %v538
        %vm1478 = vcmp.eq.s32.totalorder %v552, %v538
        %vm1479 = vcmp.eq.s32.totalorder %v553, %v538
        %vm1480 = vcmp.eq.s32.totalorder %v554, %v538
        %vm1481 = vcmp.eq.s32.totalorder %v555, %v538
        %vm1482 = vcmp.eq.s32.totalorder %v556, %v538
        %v1483 = vsel %vm1467, 1, 0
        %v1484 = vsel %vm1468, 1, 0
        %v1485 = vsel %vm1469, 1, 0
        %v1486 = vsel %vm1470, 1, 0
        %v1487 = vsel %vm1471, 1, 0
        %v1488 = vsel %vm1472, 1, 0
        %v1489 = vsel %vm1473, 1, 0
        %v1490 = vsel %vm1474, 1, 0
        %v1491 = vsel %vm1475, 1, 0
        %v1492 = vsel %vm1476, 1, 0
        %v1493 = vsel %vm1477, 1, 0
        %v1494 = vsel %vm1478, 1, 0
        %v1495 = vsel %vm1479, 1, 0
        %v1496 = vsel %vm1480, 1, 0
        %v1497 = vsel %vm1481, 1, 0
        %v1498 = vsel %vm1482, 1, 0
        %v1499 = vcvt.s32.f32 %v1483
        %v1500 = vcvt.s32.f32 %v1484
        %v1501 = vcvt.s32.f32 %v1485
        %v1502 = vcvt.s32.f32 %v1486
        %v1503 = vcvt.s32.f32 %v1487
        %v1504 = vcvt.s32.f32 %v1488
        %v1505 = vcvt.s32.f32 %v1489
        %v1506 = vcvt.s32.f32 %v1490
        %v1507 = vcvt.s32.f32 %v1491
        %v1508 = vcvt.s32.f32 %v1492
        %v1509 = vcvt.s32.f32 %v1493
        %v1510 = vcvt.s32.f32 %v1494
        %v1511 = vcvt.s32.f32 %v1495
        %v1512 = vcvt.s32.f32 %v1496
        %v1513 = vcvt.s32.f32 %v1497
        %v1514 = vcvt.s32.f32 %v1498
        loop: start=0, step=1, limit=10
        $region51: #{pruning_loss_forward.2} parent=49 // loop_pre_header
          _
        $region52: #{pruning_loss_forward.2} parent=49 // loop_header
          %s1516 = sphi 0, %s1520
          %p1517 = scmp.ge.s32.totalorder %s1516, 10
          %v1521 = vphi %v624, %v1748
          %v1522 = vphi %v625, %v1749
          %v1523 = vphi %v626, %v1750
          %v1524 = vphi %v627, %v1751
          %v1525 = vphi %v628, %v1752
          %v1526 = vphi %v629, %v1753
          %v1527 = vphi %v630, %v1754
          %v1528 = vphi %v631, %v1755
          %v1529 = vphi %v632, %v1756
          %v1530 = vphi %v633, %v1757
          %v1531 = vphi %v634, %v1758
          %v1532 = vphi %v635, %v1759
          %v1533 = vphi %v636, %v1760
          %v1534 = vphi %v637, %v1761
          %v1535 = vphi %v638, %v1762
          %v1536 = vphi %v639, %v1763
          %v1537 = vphi %v536, %v1765
        $region53: #{pruning_loss_forward.2} parent=49 // loop_header_branch
          %1519 = sbr.rel (%p1517) target = $region57
        $region54: #{pruning_loss_forward.2} parent=49 // loop_body
          %v1538 = vrcp.pop %v1537
          %v1539 = vmul.f32 1.0, %v1538
          %v1540 = vsub.f32 0.0, %v1537
          %v1541 = vsub.f32 %v1521, %v434
          %v1542 = vsub.f32 %v1522, %v435
          %v1543 = vsub.f32 %v1523, %v436
          %v1544 = vsub.f32 %v1524, %v437
          %v1545 = vsub.f32 %v1525, %v438
          %v1546 = vsub.f32 %v1526, %v439
          %v1547 = vsub.f32 %v1527, %v440
          %v1548 = vsub.f32 %v1528, %v441
          %v1549 = vsub.f32 %v1529, %v442
          %v1550 = vsub.f32 %v1530, %v443
          %v1551 = vsub.f32 %v1531, %v444
          %v1552 = vsub.f32 %v1532, %v445
          %v1553 = vsub.f32 %v1533, %v446
          %v1554 = vsub.f32 %v1534, %v447
          %v1555 = vsub.f32 %v1535, %v448
          %v1556 = vsub.f32 %v1536, %v449
          %v1557 = vmul.f32 %v1541, %v1539
          %v1558 = vmul.f32 %v1542, %v1539
          %v1559 = vmul.f32 %v1543, %v1539
          %v1560 = vmul.f32 %v1544, %v1539
          %v1561 = vmul.f32 %v1545, %v1539
          %v1562 = vmul.f32 %v1546, %v1539
          %v1563 = vmul.f32 %v1547, %v1539
          %v1564 = vmul.f32 %v1548, %v1539
          %v1565 = vmul.f32 %v1549, %v1539
          %v1566 = vmul.f32 %v1550, %v1539
          %v1567 = vmul.f32 %v1551, %v1539
          %v1568 = vmul.f32 %v1552, %v1539
          %v1569 = vmul.f32 %v1553, %v1539
          %v1570 = vmul.f32 %v1554, %v1539
          %v1571 = vmul.f32 %v1555, %v1539
          %v1572 = vmul.f32 %v1556, %v1539
          %v1573 = vmax.f32 %v1557, %v1561
          %v1574 = vmax.f32 %v1558, %v1562
          %v1575 = vmax.f32 %v1559, %v1563
          %v1576 = vmax.f32 %v1560, %v1564
          %v1577 = vmax.f32 %v1573, %v1565
          %v1578 = vmax.f32 %v1574, %v1566
          %v1579 = vmax.f32 %v1575, %v1567
          %v1580 = vmax.f32 %v1576, %v1568
          %v1581 = vmax.f32 %v1577, %v1569
          %v1582 = vmax.f32 %v1578, %v1570
          %v1583 = vmax.f32 %v1579, %v1571
          %v1584 = vmax.f32 %v1580, %v1572
          %v1585 = vmax.f32 %v1581, %v1582
          %v1586 = vmax.f32 %v1583, %v1584
          %v1587 = vmax.f32 %v1585, %v1586
          %v1588 = vrot.slane %v1587, 4
          %v1589 = vmax.f32 %v1587, %v1588
          %v1590 = vrot.slane %v1589, 2
          %v1591 = vmax.f32 %v1589, %v1590
          %v1592 = vrot.slane %v1591, 1
          %v1593 = vmax.f32 %v1591, %v1592
          %v1594 = vsub.f32 %v1557, %v1593
          %v1595 = vsub.f32 %v1558, %v1593
          %v1596 = vsub.f32 %v1559, %v1593
          %v1597 = vsub.f32 %v1560, %v1593
          %v1598 = vsub.f32 %v1561, %v1593
          %v1599 = vsub.f32 %v1562, %v1593
          %v1600 = vsub.f32 %v1563, %v1593
          %v1601 = vsub.f32 %v1564, %v1593
          %v1602 = vsub.f32 %v1565, %v1593
          %v1603 = vsub.f32 %v1566, %v1593
          %v1604 = vsub.f32 %v1567, %v1593
          %v1605 = vsub.f32 %v1568, %v1593
          %v1606 = vsub.f32 %v1569, %v1593
          %v1607 = vsub.f32 %v1570, %v1593
          %v1608 = vsub.f32 %v1571, %v1593
          %v1609 = vsub.f32 %v1572, %v1593
          %v1610 = vmul.f32 %v1594, 1.442695
          %v1611 = vpow.pop %v1610
          %v1612 = vmul.f32 %v1595, 1.442695
          %v1613 = vpow.pop %v1612
          %v1614 = vmul.f32 %v1596, 1.442695
          %v1615 = vpow.pop %v1614
          %v1616 = vmul.f32 %v1597, 1.442695
          %v1617 = vpow.pop %v1616
          %v1618 = vmul.f32 %v1598, 1.442695
          %v1619 = vpow.pop %v1618
          %v1620 = vmul.f32 %v1599, 1.442695
          %v1621 = vpow.pop %v1620
          %v1622 = vmul.f32 %v1600, 1.442695
          %v1623 = vpow.pop %v1622
          %v1624 = vmul.f32 %v1601, 1.442695
          %v1625 = vpow.pop %v1624
          %v1626 = vmul.f32 %v1602, 1.442695
          %v1627 = vpow.pop %v1626
          %v1628 = vmul.f32 %v1603, 1.442695
          %v1629 = vpow.pop %v1628
          %v1630 = vmul.f32 %v1604, 1.442695
          %v1631 = vpow.pop %v1630
          %v1632 = vmul.f32 %v1605, 1.442695
          %v1633 = vpow.pop %v1632
          %v1634 = vmul.f32 %v1606, 1.442695
          %v1635 = vpow.pop %v1634
          %v1636 = vmul.f32 %v1607, 1.442695
          %v1637 = vpow.pop %v1636
          %v1638 = vmul.f32 %v1608, 1.442695
          %v1639 = vpow.pop %v1638
          %v1640 = vmul.f32 %v1609, 1.442695
          %v1641 = vpow.pop %v1640
          %v1642 = vadd.f32 %v1611, %v1613
          %v1643 = vadd.f32 %v1642, %v1615
          %v1644 = vadd.f32 %v1643, %v1617
          %v1645 = vadd.f32 %v1644, %v1619
          %v1646 = vadd.f32 %v1645, %v1621
          %v1647 = vadd.f32 %v1646, %v1623
          %v1648 = vadd.f32 %v1647, %v1625
          %v1649 = vadd.f32 %v1648, %v1627
          %v1650 = vadd.f32 %v1649, %v1629
          %v1651 = vadd.f32 %v1650, %v1631
          %v1652 = vadd.f32 %v1651, %v1633
          %v1653 = vadd.f32 %v1652, %v1635
          %v1654 = vadd.f32 %v1653, %v1637
          %v1655 = vadd.f32 %v1654, %v1639
          %v1656 = vadd.f32 %v1655, %v1641
          %v1657 = vrot.slane %v1656, 4
          %v1658 = vadd.f32 %v1656, %v1657
          %v1659 = vrot.slane %v1658, 2
          %v1660 = vadd.f32 %v1658, %v1659
          %v1661 = vrot.slane %v1660, 1
          %v1662 = vadd.f32 %v1660, %v1661
          %v1663 = vlog2.pop %v1662
          %v1664 = vmul.f32 %v1663, 0.6931472
          %v1665 = vadd.f32 %v1593, %v1664
          %v1666 = vadd.f32 %v1665, -4.8520303
          %v1667 = vmul.f32 %v1540, %v1666
          %v1668 = vmul.f32 %v1499, %v1667
          %v1669 = vmul.f32 %v1500, %v1667
          %v1670 = vmul.f32 %v1501, %v1667
          %v1671 = vmul.f32 %v1502, %v1667
          %v1672 = vmul.f32 %v1503, %v1667
          %v1673 = vmul.f32 %v1504, %v1667
          %v1674 = vmul.f32 %v1505, %v1667
          %v1675 = vmul.f32 %v1506, %v1667
          %v1676 = vmul.f32 %v1507, %v1667
          %v1677 = vmul.f32 %v1508, %v1667
          %v1678 = vmul.f32 %v1509, %v1667
          %v1679 = vmul.f32 %v1510, %v1667
          %v1680 = vmul.f32 %v1511, %v1667
          %v1681 = vmul.f32 %v1512, %v1667
          %v1682 = vmul.f32 %v1513, %v1667
          %v1683 = vmul.f32 %v1514, %v1667
          %1684 = vadd.xlane.f32.xlu0 %v1668
          %v1685 = vpop.xlane.xlu0 %1684
          %1686 = vadd.xlane.f32.xlu0 %v1669
          %v1687 = vpop.xlane.xlu0 %1686
          %1688 = vadd.xlane.f32.xlu0 %v1670
          %v1689 = vpop.xlane.xlu0 %1688
          %1690 = vadd.xlane.f32.xlu0 %v1671
          %v1691 = vpop.xlane.xlu0 %1690
          %1692 = vadd.xlane.f32.xlu0 %v1672
          %v1693 = vpop.xlane.xlu0 %1692
          %1694 = vadd.xlane.f32.xlu0 %v1673
          %v1695 = vpop.xlane.xlu0 %1694
          %1696 = vadd.xlane.f32.xlu0 %v1674
          %v1697 = vpop.xlane.xlu0 %1696
          %1698 = vadd.xlane.f32.xlu0 %v1675
          %v1699 = vpop.xlane.xlu0 %1698
          %1700 = vadd.xlane.f32.xlu0 %v1676
          %v1701 = vpop.xlane.xlu0 %1700
          %1702 = vadd.xlane.f32.xlu0 %v1677
          %v1703 = vpop.xlane.xlu0 %1702
          %1704 = vadd.xlane.f32.xlu0 %v1678
          %v1705 = vpop.xlane.xlu0 %1704
          %1706 = vadd.xlane.f32.xlu0 %v1679
          %v1707 = vpop.xlane.xlu0 %1706
          %1708 = vadd.xlane.f32.xlu0 %v1680
          %v1709 = vpop.xlane.xlu0 %1708
          %1710 = vadd.xlane.f32.xlu0 %v1681
          %v1711 = vpop.xlane.xlu0 %1710
          %1712 = vadd.xlane.f32.xlu0 %v1682
          %v1713 = vpop.xlane.xlu0 %1712
          %1714 = vadd.xlane.f32.xlu0 %v1683
          %v1715 = vpop.xlane.xlu0 %1714
          %v1716 = vadd.f32 %v1521, %v1685
          %v1717 = vadd.f32 %v1522, %v1687
          %v1718 = vadd.f32 %v1523, %v1689
          %v1719 = vadd.f32 %v1524, %v1691
          %v1720 = vadd.f32 %v1525, %v1693
          %v1721 = vadd.f32 %v1526, %v1695
          %v1722 = vadd.f32 %v1527, %v1697
          %v1723 = vadd.f32 %v1528, %v1699
          %v1724 = vadd.f32 %v1529, %v1701
          %v1725 = vadd.f32 %v1530, %v1703
          %v1726 = vadd.f32 %v1531, %v1705
          %v1727 = vadd.f32 %v1532, %v1707
          %v1728 = vadd.f32 %v1533, %v1709
          %v1729 = vadd.f32 %v1534, %v1711
          %v1730 = vadd.f32 %v1535, %v1713
          %v1731 = vadd.f32 %v1536, %v1715
          %v1732 = vmul.f32 %v1716, 0.5
          %v1733 = vmul.f32 %v1717, 0.5
          %v1734 = vmul.f32 %v1718, 0.5
          %v1735 = vmul.f32 %v1719, 0.5
          %v1736 = vmul.f32 %v1720, 0.5
          %v1737 = vmul.f32 %v1721, 0.5
          %v1738 = vmul.f32 %v1722, 0.5
          %v1739 = vmul.f32 %v1723, 0.5
          %v1740 = vmul.f32 %v1724, 0.5
          %v1741 = vmul.f32 %v1725, 0.5
          %v1742 = vmul.f32 %v1726, 0.5
          %v1743 = vmul.f32 %v1727, 0.5
          %v1744 = vmul.f32 %v1728, 0.5
          %v1745 = vmul.f32 %v1729, 0.5
          %v1746 = vmul.f32 %v1730, 0.5
          %v1747 = vmul.f32 %v1731, 0.5
          %v1748 = vsel %vm574, %v1732, -1e+30
          %v1749 = vsel %vm575, %v1733, -1e+30
          %v1750 = vsel %vm576, %v1734, -1e+30
          %v1751 = vsel %vm577, %v1735, -1e+30
          %v1752 = vsel %vm578, %v1736, -1e+30
          %v1753 = vsel %vm579, %v1737, -1e+30
          %v1754 = vsel %vm580, %v1738, -1e+30
          %v1755 = vsel %vm581, %v1739, -1e+30
          %v1756 = vsel %vm582, %v1740, -1e+30
          %v1757 = vsel %vm583, %v1741, -1e+30
          %v1758 = vsel %vm584, %v1742, -1e+30
          %v1759 = vsel %vm585, %v1743, -1e+30
          %v1760 = vsel %vm586, %v1744, -1e+30
          %v1761 = vsel %vm587, %v1745, -1e+30
          %v1762 = vsel %vm588, %v1746, -1e+30
          %v1763 = vsel %vm589, %v1747, -1e+30
          %v1764 = vmul.f32 %v1537, 0.25
          %v1765 = vmax.f32 %v1764, 0.0001
        $region55: #{pruning_loss_forward.2} parent=49 // loop_footer
          %s1520 = sadd.s32 1, %s1516
        $region56: #{pruning_loss_forward.2} parent=49 // loop_footer_branch
          %1515 = sbr.rel target = $region52
        $region57: #{pruning_loss_forward.2} parent=49 // loop_exit
          _
        loop: start=0, step=1, limit=22
        $region58: #{pruning_loss_forward.2} parent=49 // loop_pre_header
          _
        $region59: #{pruning_loss_forward.2} parent=49 // loop_header
          %s1767 = sphi 0, %s1771
          %p1768 = scmp.ge.s32.totalorder %s1767, 22
          %v1772 = vphi %v1521, %v1995
          %v1773 = vphi %v1522, %v1996
          %v1774 = vphi %v1523, %v1997
          %v1775 = vphi %v1524, %v1998
          %v1776 = vphi %v1525, %v1999
          %v1777 = vphi %v1526, %v2000
          %v1778 = vphi %v1527, %v2001
          %v1779 = vphi %v1528, %v2002
          %v1780 = vphi %v1529, %v2003
          %v1781 = vphi %v1530, %v2004
          %v1782 = vphi %v1531, %v2005
          %v1783 = vphi %v1532, %v2006
          %v1784 = vphi %v1533, %v2007
          %v1785 = vphi %v1534, %v2008
          %v1786 = vphi %v1535, %v2009
          %v1787 = vphi %v1536, %v2010
        $region60: #{pruning_loss_forward.2} parent=49 // loop_header_branch
          %1770 = sbr.rel (%p1768) target = $region64
        $region61: #{pruning_loss_forward.2} parent=49 // loop_body
          %v1788 = vmul.f32 %v1772, 10000.0
          %v1789 = vmul.f32 %v1773, 10000.0
          %v1790 = vmul.f32 %v1774, 10000.0
          %v1791 = vmul.f32 %v1775, 10000.0
          %v1792 = vmul.f32 %v1776, 10000.0
          %v1793 = vmul.f32 %v1777, 10000.0
          %v1794 = vmul.f32 %v1778, 10000.0
          %v1795 = vmul.f32 %v1779, 10000.0
          %v1796 = vmul.f32 %v1780, 10000.0
          %v1797 = vmul.f32 %v1781, 10000.0
          %v1798 = vmul.f32 %v1782, 10000.0
          %v1799 = vmul.f32 %v1783, 10000.0
          %v1800 = vmul.f32 %v1784, 10000.0
          %v1801 = vmul.f32 %v1785, 10000.0
          %v1802 = vmul.f32 %v1786, 10000.0
          %v1803 = vmul.f32 %v1787, 10000.0
          %v1804 = vsub.f32 %v1788, %v450
          %v1805 = vsub.f32 %v1789, %v451
          %v1806 = vsub.f32 %v1790, %v452
          %v1807 = vsub.f32 %v1791, %v453
          %v1808 = vsub.f32 %v1792, %v454
          %v1809 = vsub.f32 %v1793, %v455
          %v1810 = vsub.f32 %v1794, %v456
          %v1811 = vsub.f32 %v1795, %v457
          %v1812 = vsub.f32 %v1796, %v458
          %v1813 = vsub.f32 %v1797, %v459
          %v1814 = vsub.f32 %v1798, %v460
          %v1815 = vsub.f32 %v1799, %v461
          %v1816 = vsub.f32 %v1800, %v462
          %v1817 = vsub.f32 %v1801, %v463
          %v1818 = vsub.f32 %v1802, %v464
          %v1819 = vsub.f32 %v1803, %v465
          %v1820 = vmax.f32 %v1804, %v1808
          %v1821 = vmax.f32 %v1805, %v1809
          %v1822 = vmax.f32 %v1806, %v1810
          %v1823 = vmax.f32 %v1807, %v1811
          %v1824 = vmax.f32 %v1820, %v1812
          %v1825 = vmax.f32 %v1821, %v1813
          %v1826 = vmax.f32 %v1822, %v1814
          %v1827 = vmax.f32 %v1823, %v1815
          %v1828 = vmax.f32 %v1824, %v1816
          %v1829 = vmax.f32 %v1825, %v1817
          %v1830 = vmax.f32 %v1826, %v1818
          %v1831 = vmax.f32 %v1827, %v1819
          %v1832 = vmax.f32 %v1828, %v1829
          %v1833 = vmax.f32 %v1830, %v1831
          %v1834 = vmax.f32 %v1832, %v1833
          %v1835 = vrot.slane %v1834, 4
          %v1836 = vmax.f32 %v1834, %v1835
          %v1837 = vrot.slane %v1836, 2
          %v1838 = vmax.f32 %v1836, %v1837
          %v1839 = vrot.slane %v1838, 1
          %v1840 = vmax.f32 %v1838, %v1839
          %v1841 = vsub.f32 %v1804, %v1840
          %v1842 = vsub.f32 %v1805, %v1840
          %v1843 = vsub.f32 %v1806, %v1840
          %v1844 = vsub.f32 %v1807, %v1840
          %v1845 = vsub.f32 %v1808, %v1840
          %v1846 = vsub.f32 %v1809, %v1840
          %v1847 = vsub.f32 %v1810, %v1840
          %v1848 = vsub.f32 %v1811, %v1840
          %v1849 = vsub.f32 %v1812, %v1840
          %v1850 = vsub.f32 %v1813, %v1840
          %v1851 = vsub.f32 %v1814, %v1840
          %v1852 = vsub.f32 %v1815, %v1840
          %v1853 = vsub.f32 %v1816, %v1840
          %v1854 = vsub.f32 %v1817, %v1840
          %v1855 = vsub.f32 %v1818, %v1840
          %v1856 = vsub.f32 %v1819, %v1840
          %v1857 = vmul.f32 %v1841, 1.442695
          %v1858 = vpow.pop %v1857
          %v1859 = vmul.f32 %v1842, 1.442695
          %v1860 = vpow.pop %v1859
          %v1861 = vmul.f32 %v1843, 1.442695
          %v1862 = vpow.pop %v1861
          %v1863 = vmul.f32 %v1844, 1.442695
          %v1864 = vpow.pop %v1863
          %v1865 = vmul.f32 %v1845, 1.442695
          %v1866 = vpow.pop %v1865
          %v1867 = vmul.f32 %v1846, 1.442695
          %v1868 = vpow.pop %v1867
          %v1869 = vmul.f32 %v1847, 1.442695
          %v1870 = vpow.pop %v1869
          %v1871 = vmul.f32 %v1848, 1.442695
          %v1872 = vpow.pop %v1871
          %v1873 = vmul.f32 %v1849, 1.442695
          %v1874 = vpow.pop %v1873
          %v1875 = vmul.f32 %v1850, 1.442695
          %v1876 = vpow.pop %v1875
          %v1877 = vmul.f32 %v1851, 1.442695
          %v1878 = vpow.pop %v1877
          %v1879 = vmul.f32 %v1852, 1.442695
          %v1880 = vpow.pop %v1879
          %v1881 = vmul.f32 %v1853, 1.442695
          %v1882 = vpow.pop %v1881
          %v1883 = vmul.f32 %v1854, 1.442695
          %v1884 = vpow.pop %v1883
          %v1885 = vmul.f32 %v1855, 1.442695
          %v1886 = vpow.pop %v1885
          %v1887 = vmul.f32 %v1856, 1.442695
          %v1888 = vpow.pop %v1887
          %v1889 = vadd.f32 %v1858, %v1860
          %v1890 = vadd.f32 %v1889, %v1862
          %v1891 = vadd.f32 %v1890, %v1864
          %v1892 = vadd.f32 %v1891, %v1866
          %v1893 = vadd.f32 %v1892, %v1868
          %v1894 = vadd.f32 %v1893, %v1870
          %v1895 = vadd.f32 %v1894, %v1872
          %v1896 = vadd.f32 %v1895, %v1874
          %v1897 = vadd.f32 %v1896, %v1876
          %v1898 = vadd.f32 %v1897, %v1878
          %v1899 = vadd.f32 %v1898, %v1880
          %v1900 = vadd.f32 %v1899, %v1882
          %v1901 = vadd.f32 %v1900, %v1884
          %v1902 = vadd.f32 %v1901, %v1886
          %v1903 = vadd.f32 %v1902, %v1888
          %v1904 = vrot.slane %v1903, 4
          %v1905 = vadd.f32 %v1903, %v1904
          %v1906 = vrot.slane %v1905, 2
          %v1907 = vadd.f32 %v1905, %v1906
          %v1908 = vrot.slane %v1907, 1
          %v1909 = vadd.f32 %v1907, %v1908
          %v1910 = vlog2.pop %v1909
          %v1911 = vmul.f32 %v1910, 0.6931472
          %v1912 = vadd.f32 %v1840, %v1911
          %v1913 = vadd.f32 %v1912, -4.8520303
          %v1914 = vmul.f32 %v1913, -0.0001
          %v1915 = vmul.f32 %v1499, %v1914
          %v1916 = vmul.f32 %v1500, %v1914
          %v1917 = vmul.f32 %v1501, %v1914
          %v1918 = vmul.f32 %v1502, %v1914
          %v1919 = vmul.f32 %v1503, %v1914
          %v1920 = vmul.f32 %v1504, %v1914
          %v1921 = vmul.f32 %v1505, %v1914
          %v1922 = vmul.f32 %v1506, %v1914
          %v1923 = vmul.f32 %v1507, %v1914
          %v1924 = vmul.f32 %v1508, %v1914
          %v1925 = vmul.f32 %v1509, %v1914
          %v1926 = vmul.f32 %v1510, %v1914
          %v1927 = vmul.f32 %v1511, %v1914
          %v1928 = vmul.f32 %v1512, %v1914
          %v1929 = vmul.f32 %v1513, %v1914
          %v1930 = vmul.f32 %v1514, %v1914
          %1931 = vadd.xlane.f32.xlu0 %v1915
          %v1932 = vpop.xlane.xlu0 %1931
          %1933 = vadd.xlane.f32.xlu0 %v1916
          %v1934 = vpop.xlane.xlu0 %1933
          %1935 = vadd.xlane.f32.xlu0 %v1917
          %v1936 = vpop.xlane.xlu0 %1935
          %1937 = vadd.xlane.f32.xlu0 %v1918
          %v1938 = vpop.xlane.xlu0 %1937
          %1939 = vadd.xlane.f32.xlu0 %v1919
          %v1940 = vpop.xlane.xlu0 %1939
          %1941 = vadd.xlane.f32.xlu0 %v1920
          %v1942 = vpop.xlane.xlu0 %1941
          %1943 = vadd.xlane.f32.xlu0 %v1921
          %v1944 = vpop.xlane.xlu0 %1943
          %1945 = vadd.xlane.f32.xlu0 %v1922
          %v1946 = vpop.xlane.xlu0 %1945
          %1947 = vadd.xlane.f32.xlu0 %v1923
          %v1948 = vpop.xlane.xlu0 %1947
          %1949 = vadd.xlane.f32.xlu0 %v1924
          %v1950 = vpop.xlane.xlu0 %1949
          %1951 = vadd.xlane.f32.xlu0 %v1925
          %v1952 = vpop.xlane.xlu0 %1951
          %1953 = vadd.xlane.f32.xlu0 %v1926
          %v1954 = vpop.xlane.xlu0 %1953
          %1955 = vadd.xlane.f32.xlu0 %v1927
          %v1956 = vpop.xlane.xlu0 %1955
          %1957 = vadd.xlane.f32.xlu0 %v1928
          %v1958 = vpop.xlane.xlu0 %1957
          %1959 = vadd.xlane.f32.xlu0 %v1929
          %v1960 = vpop.xlane.xlu0 %1959
          %1961 = vadd.xlane.f32.xlu0 %v1930
          %v1962 = vpop.xlane.xlu0 %1961
          %v1963 = vadd.f32 %v1772, %v1932
          %v1964 = vadd.f32 %v1773, %v1934
          %v1965 = vadd.f32 %v1774, %v1936
          %v1966 = vadd.f32 %v1775, %v1938
          %v1967 = vadd.f32 %v1776, %v1940
          %v1968 = vadd.f32 %v1777, %v1942
          %v1969 = vadd.f32 %v1778, %v1944
          %v1970 = vadd.f32 %v1779, %v1946
          %v1971 = vadd.f32 %v1780, %v1948
          %v1972 = vadd.f32 %v1781, %v1950
          %v1973 = vadd.f32 %v1782, %v1952
          %v1974 = vadd.f32 %v1783, %v1954
          %v1975 = vadd.f32 %v1784, %v1956
          %v1976 = vadd.f32 %v1785, %v1958
          %v1977 = vadd.f32 %v1786, %v1960
          %v1978 = vadd.f32 %v1787, %v1962
          %v1979 = vmul.f32 %v1963, 0.5
          %v1980 = vmul.f32 %v1964, 0.5
          %v1981 = vmul.f32 %v1965, 0.5
          %v1982 = vmul.f32 %v1966, 0.5
          %v1983 = vmul.f32 %v1967, 0.5
          %v1984 = vmul.f32 %v1968, 0.5
          %v1985 = vmul.f32 %v1969, 0.5
          %v1986 = vmul.f32 %v1970, 0.5
          %v1987 = vmul.f32 %v1971, 0.5
          %v1988 = vmul.f32 %v1972, 0.5
          %v1989 = vmul.f32 %v1973, 0.5
          %v1990 = vmul.f32 %v1974, 0.5
          %v1991 = vmul.f32 %v1975, 0.5
          %v1992 = vmul.f32 %v1976, 0.5
          %v1993 = vmul.f32 %v1977, 0.5
          %v1994 = vmul.f32 %v1978, 0.5
          %v1995 = vsel %vm574, %v1979, -1e+30
          %v1996 = vsel %vm575, %v1980, -1e+30
          %v1997 = vsel %vm576, %v1981, -1e+30
          %v1998 = vsel %vm577, %v1982, -1e+30
          %v1999 = vsel %vm578, %v1983, -1e+30
          %v2000 = vsel %vm579, %v1984, -1e+30
          %v2001 = vsel %vm580, %v1985, -1e+30
          %v2002 = vsel %vm581, %v1986, -1e+30
          %v2003 = vsel %vm582, %v1987, -1e+30
          %v2004 = vsel %vm583, %v1988, -1e+30
          %v2005 = vsel %vm584, %v1989, -1e+30
          %v2006 = vsel %vm585, %v1990, -1e+30
          %v2007 = vsel %vm586, %v1991, -1e+30
          %v2008 = vsel %vm587, %v1992, -1e+30
          %v2009 = vsel %vm588, %v1993, -1e+30
          %v2010 = vsel %vm589, %v1994, -1e+30
        $region62: #{pruning_loss_forward.2} parent=49 // loop_footer
          %s1771 = sadd.s32 1, %s1767
        $region63: #{pruning_loss_forward.2} parent=49 // loop_footer_branch
          %1766 = sbr.rel target = $region59
        $region64: #{pruning_loss_forward.2} parent=49 // loop_exit
          _
        %v2011 = vmul.f32 %v1772, %v608
        %v2012 = vmul.f32 %v1773, %v609
        %v2013 = vmul.f32 %v1774, %v610
        %v2014 = vmul.f32 %v1775, %v611
        %v2015 = vmul.f32 %v1776, %v612
        %v2016 = vmul.f32 %v1777, %v613
        %v2017 = vmul.f32 %v1778, %v614
        %v2018 = vmul.f32 %v1779, %v615
        %v2019 = vmul.f32 %v1780, %v616
        %v2020 = vmul.f32 %v1781, %v617
        %v2021 = vmul.f32 %v1782, %v618
        %v2022 = vmul.f32 %v1783, %v619
        %v2023 = vmul.f32 %v1784, %v620
        %v2024 = vmul.f32 %v1785, %v621
        %v2025 = vmul.f32 %v1786, %v622
        %v2026 = vmul.f32 %v1787, %v623
        %v2027 = vadd.f32 %v2011, %v2012
        %v2028 = vadd.f32 %v2027, %v2013
        %v2029 = vadd.f32 %v2028, %v2014
        %v2030 = vadd.f32 %v2029, %v2015
        %v2031 = vadd.f32 %v2030, %v2016
        %v2032 = vadd.f32 %v2031, %v2017
        %v2033 = vadd.f32 %v2032, %v2018
        %v2034 = vadd.f32 %v2033, %v2019
        %v2035 = vadd.f32 %v2034, %v2020
        %v2036 = vadd.f32 %v2035, %v2021
        %v2037 = vadd.f32 %v2036, %v2022
        %v2038 = vadd.f32 %v2037, %v2023
        %v2039 = vadd.f32 %v2038, %v2024
        %v2040 = vadd.f32 %v2039, %v2025
        %v2041 = vadd.f32 %v2040, %v2026
        %v2042 = vrot.slane %v2041, 4
        %v2043 = vadd.f32 %v2041, %v2042
        %v2044 = vrot.slane %v2043, 2
        %v2045 = vadd.f32 %v2043, %v2044
        %v2046 = vrot.slane %v2045, 1
        %v2047 = vadd.f32 %v2045, %v2046
        %v2048 = vmul.f32 %v2047, 0.015625
        %vm2049 = vcmask 0
        %2050 = vst.msk [vmem:[%s159] sm:$0x1] %vm2049, %v2048
      $region50: #{pruning_loss_forward.2} parent=27 // pred_fallthru
        _
      %p2051 = scmp.lt.s32.totalorder %s13, 2
      %s2052 = scalar_select %p2051, %s13, 2
      %s2053 = scalar_lea.vmem %s2, %s2052
      // Predicated region
      $region65: #{pruning_loss_forward.2} parent=27 // pred_check
        %p2054 = pneg %p83
      $region66: #{pruning_loss_forward.2} parent=27 // pred_check_branch
        %2056 = sbr.rel (%p2054) target = $region68
      $region67: #{pruning_loss_forward.2} parent=27 // pred_region
        _
      $region68: #{pruning_loss_forward.2} parent=27 // pred_fallthru
        _
    $region28: #{pruning_loss_forward.2} parent=5 // pred_fallthru
      _
    %p2057 = scmp.le.s32.totalorder 2, %s8
    // Predicated region
    $region69: #{pruning_loss_forward.2} parent=5 // pred_check
      %p2058 = pneg %p2057
    $region70: #{pruning_loss_forward.2} parent=5 // pred_check_branch
      %2060 = sbr.rel (%p2058) target = $region72
    $region71: #{pruning_loss_forward.2} parent=5 // pred_region
      %s2061 = ssub.s32 %s8, 2
      // Predicated region
      $region73: #{pruning_loss_forward.2} parent=71 // pred_check
        %p2062 = pneg %p89
      $region74: #{pruning_loss_forward.2} parent=71 // pred_check_branch
        %2064 = sbr.rel (%p2062) target = $region76
      $region75: #{pruning_loss_forward.2} parent=71 // pred_region
        %p2065 = scmp.lt.s32.totalorder %s14, 2
        %s2066 = scalar_select %p2065, %s14, 2
        %s2067 = scalar_lea.vmem %s2, %s2066
      $region76: #{pruning_loss_forward.2} parent=71 // pred_fallthru
        _
    $region72: #{pruning_loss_forward.2} parent=5 // pred_fallthru
      _
  $region6: #{pruning_loss_forward.2} parent=0 // loop_footer
    %s12 = sadd.s32 1, %s8
  $region7: #{pruning_loss_forward.2} parent=0 // loop_footer_branch
    %7 = sbr.rel target = $region3
  $region8: #{pruning_loss_forward.2} parent=0 // loop_exit
    _

</llo_original>
